<compile_context>
chip_gen: v7x
topology: tpu7x:2x2x1
jax: 0.10.0
libtpu: 0.0.40
codegen_flags: <defaults>
</compile_context>

<pallas_src>
import jax
import jax.numpy as jnp
from jax import lax
from jax.experimental import pallas as pl
from jax.experimental.pallas import tpu as pltpu

LANES = 128


def _round_up(x, m):
    return (x + m - 1) // m * m


def _make_basic_block_kernel(P_pad, G, Wp, H, W, C):
    """Fused conv3x3 -> relu -> conv3x3 -> (+residual) -> relu, one batch elem."""
    # Flat-row offsets of the 9 taps relative to the current output row.
    doffs = [(k // 3 - 1) * Wp + (k % 3 - 1) for k in range(9)]
    f32, bf16 = jnp.float32, jnp.bfloat16

    def kernel(x_ref, w1_ref, b1_ref, w2_ref, b2_ref, out_ref, h1_ref):
        # x_ref  : (1, P_ext, 128) bf16  guarded slab; lanes [k*C,(k+1)*C) all
        #                                hold the C input channels (9x lane
        #                                replication); lanes >= 9*C are zero.
        # w1_ref : (128, 128) bf16  folded conv1 weights, output replicated 9x.
        # b1_ref : (1, 128)   f32   conv1 bias, replicated 9x over lanes.
        # w2_ref : (128, 128) bf16  folded conv2 weights, output in lanes [0,C).
        # b2_ref : (1, 128)   f32
        # out_ref: (1, P_pad, 128) bf16  lane-dense output, channels in [0,C).
        # h1_ref : (P_ext, 128) bf16  scratch: guarded, lane-replicated h1 slab.

        # Per-lane tap selectors for the folded im2col layout (lane = k*C + c).
        lane = lax.broadcasted_iota(jnp.int32, (P_pad, LANES), 1)

        def build_col(load_tap):
            # Folded im2col: col[p, k*C + c] = slab[p + doffs[k], k*C + c].
            # Disjoint lane supports -> one select per tap, no adds, no scratch.
            # (Tap loads start at non-multiple-of-16 sublanes; the compiler's
            #  sublane realignment is cheap now that the copies shrank ~9x.)
            col = jnp.zeros((P_pad, LANES), bf16)
            for k, doff in enumerate(doffs):
                sel = (lane >= k * C) & (lane < (k + 1) * C)
                col = jnp.where(sel, load_tap(doff), col)
            return col

        # ---- conv1: one (P_pad,128)x(128,128) MXU matmul --------------------
        col1 = build_col(lambda d: x_ref[0, pl.ds(G + d, P_pad), :])
        acc1 = jnp.dot(col1, w1_ref[...], preferred_element_type=f32)
        h1 = jnp.maximum(acc1 + b1_ref[...], 0.0)

        # Interior mask generated in-kernel (no HBM mask input): zero the
        # spatial-padding ring and tail rows so conv2 sees proper zero padding.
        # Row index via f32 reciprocal + floor (exact at these magnitudes).
        flat = lax.broadcasted_iota(jnp.int32, (P_pad, LANES), 0)
        row = jnp.floor((flat.astype(f32) + 0.5) * (1.0 / Wp)).astype(jnp.int32)
        colw = flat - row * Wp
        interior = (row >= 1) & (row <= H) & (colw >= 1) & (colw <= W)
        h1 = jnp.where(interior, h1, 0.0)

        # Write h1 into the guarded slab (aligned: G % 16 == 0).  Guard rows
        # are deliberately left untouched: they only ever feed pad-ring / tail
        # output rows, which the wrapper strips, so zeroing them is dead work.
        h1_ref[pl.ds(G, P_pad), :] = h1.astype(bf16)

        # ---- conv2: same folded trick on the replicated h1 slab -------------
        col2 = build_col(lambda d: h1_ref[pl.ds(G + d, P_pad), :])
        acc2 = jnp.dot(col2, w2_ref[...], preferred_element_type=f32)

        # ---- residual + bias + relu -----------------------------------------
        # Lanes [0,C) of the replicated x slab are exactly the input channels;
        # lanes >= C only pollute columns the wrapper strips.
        res = x_ref[0, pl.ds(G, P_pad), :].astype(f32)
        out_ref[0] = jnp.maximum(acc2 + b2_ref[...] + res, 0.0).astype(out_ref.dtype)

    return kernel


@jax.jit
def _basic_block_impl(x_nchw, w1, b1, w2, b2):
    N, Cin, H, W = x_nchw.shape
    C = Cin                                   # inplanes == planes in this path
    KC = 9 * C

    Hp, Wp = H + 2, W + 2
    P = Hp * Wp                               # padded spatial positions
    P_pad = _round_up(P, 16)                  # kernel slab row count
    G = _round_up(Wp + 1, 16)                 # guard rows (>= max tap shift)
    P_ext = P_pad + 2 * G

    f32, bf16 = jnp.float32, jnp.bfloat16

    # Input: NCHW -> NHWC -> spatial pad 1 -> flatten -> replicate channels 9x
    # along lanes (folded-tap layout) -> pad lanes to 128 -> guard rows -> bf16.
    x_nhwc = jnp.transpose(x_nchw, (0, 2, 3, 1)).astype(f32)
    xp = jnp.pad(x_nhwc, ((0, 0), (1, 1), (1, 1), (0, 0)))          # (N,Hp,Wp,C)
    xf = xp.reshape(N, P, C)
    x_rep = jnp.tile(xf, (1, 1, 9))                                  # (N,P,9C)
    x_rep = jnp.pad(x_rep, ((0, 0), (G, P_ext - P - G), (0, LANES - KC)))
    x_rep = x_rep.astype(bf16)                                       # (N,P_ext,128)

    # Weights: (Cout, Cin, 3, 3) -> (9*Cin, Cout) folded-tap matrix (row = k*C+ci).
    def fold_w(w):
        return jnp.transpose(w, (2, 3, 1, 0)).reshape(KC, C).astype(f32)

    w1f = fold_w(w1)
    # conv1: replicate output columns 9x so h1 comes out lane-replicated "for free".
    w1k = jnp.pad(jnp.tile(w1f, (1, 9)),
                  ((0, LANES - KC), (0, LANES - KC))).astype(bf16)   # (128,128)
    w2k = jnp.pad(fold_w(w2),
                  ((0, LANES - KC), (0, LANES - C))).astype(bf16)    # (128,128)

    b1r = jnp.pad(jnp.tile(b1.astype(f32), 9), (0, LANES - KC)).reshape(1, LANES)
    b2r = jnp.pad(b2.astype(f32), (0, LANES - C)).reshape(1, LANES)

    kernel = _make_basic_block_kernel(P_pad, G, Wp, H, W, C)

    # VMEM budget derived from the actual block / scratch sizes (2x headroom).
    vmem_needed = (2 * P_ext * LANES * 2          # x slab, double-buffered
                   + 2 * P_pad * LANES * 2        # out slab, double-buffered
                   + 4 * LANES * LANES * 2        # w1, w2 (2 bufs each)
                   + 4 * 8 * LANES * 4            # b1, b2 (2 bufs, row-padded)
                   + P_ext * LANES * 2)           # h1 scratch
    vmem_limit = int(min(64 * 1024 * 1024, max(16 * 1024 * 1024, 2 * vmem_needed)))

    out_flat = pl.pallas_call(
        kernel,
        out_shape=jax.ShapeDtypeStruct((N, P_pad, LANES), bf16),
        grid_spec=pltpu.PrefetchScalarGridSpec(
            num_scalar_prefetch=0,
            grid=(N,),
            in_specs=[
                pl.BlockSpec((1, P_ext, LANES), lambda b: (b, 0, 0)),   # x slab
                pl.BlockSpec((LANES, LANES), lambda b: (0, 0)),         # w1
                pl.BlockSpec((1, LANES), lambda b: (0, 0)),             # b1
                pl.BlockSpec((LANES, LANES), lambda b: (0, 0)),         # w2
                pl.BlockSpec((1, LANES), lambda b: (0, 0)),             # b2
            ],
            out_specs=pl.BlockSpec((1, P_pad, LANES), lambda b: (b, 0, 0)),
            scratch_shapes=[pltpu.VMEM((P_ext, LANES), bf16)],          # h1 slab
        ),
        compiler_params=pltpu.CompilerParams(
            dimension_semantics=("parallel",),
            vmem_limit_bytes=vmem_limit,
        ),
    )(x_rep, w1k, b1r, w2k, b2r)

    # bf16 lane-dense kernel output -> real rows -> real channels -> NCHW.
    # Kept in bf16: stacked blocks would consume it directly; cast if needed.
    out = out_flat[:, :P, :C].reshape(N, Hp, Wp, C)[:, 1:H + 1, 1:W + 1, :]
    return jnp.transpose(out, (0, 3, 1, 2))


def basic_block_forward(x_nchw, w1, b1, w2, b2, *, stride=1, pad=1, dilation=1,
                        downsample=None):
    """x_nchw: (N, Cin, H, W); w*: (Cout, Cin, 3, 3) PyTorch layout; b*: (Cout,)."""
    if stride != 1 or pad != 1 or dilation != 1 or downsample is not None:
        # TODO(synk): stride>1 / dilation>1 / downsample branch not implemented.
        raise NotImplementedError(
            "Pallas BasicBlock kernel covers stride=1, pad=1, dilation=1, "
            "downsample=None only.")
    N, Cin, H, W = x_nchw.shape
    C = w1.shape[0]
    if Cin != C:
        raise NotImplementedError(
            "Residual path without downsample requires inplanes == planes.")
    if 9 * C > LANES:
        # TODO(synk): wide-channel (9*C > 128) path needs the K=9*128 im2col variant.
        raise NotImplementedError("Folded-tap kernel assumes 9 * channels <= 128.")
    return _basic_block_impl(x_nchw, w1, b1, w2, b2)


def _reference_forward(x_nchw, w1, b1, w2, b2):
    """Pure-JAX f32 reference (lax convs in NCHW), mirrors the PyTorch forward."""
    dn = lax.conv_dimension_numbers(x_nchw.shape, w1.shape, ("NCHW", "OIHW", "NCHW"))
    h1 = lax.conv_general_dilated(x_nchw, w1, (1, 1), ((1, 1), (1, 1)),
                                  dimension_numbers=dn) + b1[None, :, None, None]
    h1 = jnp.maximum(h1, 0.0)
    h2 = lax.conv_general_dilated(h1, w2, (1, 1), ((1, 1), (1, 1)),
                                  dimension_numbers=dn) + b2[None, :, None, None]
    return jnp.maximum(h2 + x_nchw, 0.0)


if __name__ == "__main__":
    # Small, deterministic config: inplanes = planes = 8, stride = 1, pad = 1,
    # dilation = 1, downsample = None.
    N, C, H, W = 2, 8, 16, 16
    key = jax.random.PRNGKey(0)
    kx, kw1, kb1, kw2, kb2 = jax.random.split(key, 5)

    x = jax.random.normal(kx, (N, C, H, W), dtype=jnp.float32)
    w1 = 0.1 * jax.random.normal(kw1, (C, C, 3, 3), dtype=jnp.float32)
    b1 = 0.1 * jax.random.normal(kb1, (C,), dtype=jnp.float32)
    w2 = 0.1 * jax.random.normal(kw2, (C, C, 3, 3), dtype=jnp.float32)
    b2 = 0.1 * jax.random.normal(kb2, (C,), dtype=jnp.float32)

    out = basic_block_forward(x, w1, b1, w2, b2)
    out = jax.block_until_ready(out)

    ref = _reference_forward(x, w1, b1, w2, b2)
    assert out.shape == (N, C, H, W)
    out_f32 = out.astype(jnp.float32)
    # bf16 matmul operands / bf16 output (f32 accumulation) -> bf16-level tolerance.
    max_err = float(jnp.max(jnp.abs(out_f32 - ref)))
    assert jnp.allclose(out_f32, ref, atol=5e-2, rtol=5e-2), f"max_err={max_err}"

    print("KERNEL_OK")
</pallas_src>

<mosaic_0001>
module attributes {stable_mosaic.version = 11 : i64} {
  func.func @kernel(%arg0: i32, %arg1: memref<1x400x128xbf16, #tpu.memory_space<vmem>>, %arg2: memref<128x128xbf16, #tpu.memory_space<vmem>>, %arg3: memref<1x128xf32, #tpu.memory_space<vmem>>, %arg4: memref<128x128xbf16, #tpu.memory_space<vmem>>, %arg5: memref<1x128xf32, #tpu.memory_space<vmem>>, %arg6: memref<1x336x128xbf16, #tpu.memory_space<vmem>>, %arg7: memref<400x128xbf16, #tpu.memory_space<vmem>>) attributes {dimension_semantics = [#tpu.dimension_semantics<parallel>], iteration_bounds = array<i64: 2>, scalar_prefetch = 0 : i64, scratch_operands = 1 : i64, tpu.core_type = #tpu.core_type<tc>, window_params = [{transform_indices = @transform_0, window_bounds = array<i64: 1, 400, 128>}, {pipeline_mode = #tpu.pipeline_mode<synchronous>, transform_indices = @transform_1, window_bounds = array<i64: 128, 128>}, {pipeline_mode = #tpu.pipeline_mode<synchronous>, transform_indices = @transform_2, window_bounds = array<i64: 1, 128>}, {pipeline_mode = #tpu.pipeline_mode<synchronous>, transform_indices = @transform_3, window_bounds = array<i64: 128, 128>}, {pipeline_mode = #tpu.pipeline_mode<synchronous>, transform_indices = @transform_4, window_bounds = array<i64: 1, 128>}, {transform_indices = @transform_5, window_bounds = array<i64: 1, 336, 128>}]} {
    %0 = tpu.iota {dimensions = array<i32: 1>} : vector<336x128xi32>
    %cst = arith.constant 0.000000e+00 : bf16
    %1 = vector.broadcast %cst : bf16 to vector<336x128xbf16>
    %c0_i32 = arith.constant 0 : i32
    %2 = vector.broadcast %c0_i32 : i32 to vector<336x128xi32>
    %3 = arith.cmpi sge, %0, %2 : vector<336x128xi32>
    %c8_i32 = arith.constant 8 : i32
    %4 = vector.broadcast %c8_i32 : i32 to vector<336x128xi32>
    %5 = arith.cmpi slt, %0, %4 : vector<336x128xi32>
    %6 = arith.andi %3, %5 : vector<336x128xi1>
    %c0 = arith.constant 0 : index
    %c13 = arith.constant 13 : index
    %c0_0 = arith.constant 0 : index
    %7 = vector.load %arg1[%c0, %c13, %c0_0] : memref<1x400x128xbf16, #tpu.memory_space<vmem>>, vector<1x336x128xbf16>
    %8 = vector.shape_cast %7 : vector<1x336x128xbf16> to vector<336x128xbf16>
    %9 = arith.select %6, %8, %1 : vector<336x128xi1>, vector<336x128xbf16>
    %c8_i32_1 = arith.constant 8 : i32
    %10 = vector.broadcast %c8_i32_1 : i32 to vector<336x128xi32>
    %11 = arith.cmpi sge, %0, %10 : vector<336x128xi32>
    %c16_i32 = arith.constant 16 : i32
    %12 = vector.broadcast %c16_i32 : i32 to vector<336x128xi32>
    %13 = arith.cmpi slt, %0, %12 : vector<336x128xi32>
    %14 = arith.andi %11, %13 : vector<336x128xi1>
    %c0_2 = arith.constant 0 : index
    %c14 = arith.constant 14 : index
    %c0_3 = arith.constant 0 : index
    %15 = vector.load %arg1[%c0_2, %c14, %c0_3] : memref<1x400x128xbf16, #tpu.memory_space<vmem>>, vector<1x336x128xbf16>
    %16 = vector.shape_cast %15 : vector<1x336x128xbf16> to vector<336x128xbf16>
    %17 = arith.select %14, %16, %9 : vector<336x128xi1>, vector<336x128xbf16>
    %c16_i32_4 = arith.constant 16 : i32
    %18 = vector.broadcast %c16_i32_4 : i32 to vector<336x128xi32>
    %19 = arith.cmpi sge, %0, %18 : vector<336x128xi32>
    %c24_i32 = arith.constant 24 : i32
    %20 = vector.broadcast %c24_i32 : i32 to vector<336x128xi32>
    %21 = arith.cmpi slt, %0, %20 : vector<336x128xi32>
    %22 = arith.andi %19, %21 : vector<336x128xi1>
    %c0_5 = arith.constant 0 : index
    %c15 = arith.constant 15 : index
    %c0_6 = arith.constant 0 : index
    %23 = vector.load %arg1[%c0_5, %c15, %c0_6] : memref<1x400x128xbf16, #tpu.memory_space<vmem>>, vector<1x336x128xbf16>
    %24 = vector.shape_cast %23 : vector<1x336x128xbf16> to vector<336x128xbf16>
    %25 = arith.select %22, %24, %17 : vector<336x128xi1>, vector<336x128xbf16>
    %c24_i32_7 = arith.constant 24 : i32
    %26 = vector.broadcast %c24_i32_7 : i32 to vector<336x128xi32>
    %27 = arith.cmpi sge, %0, %26 : vector<336x128xi32>
    %c32_i32 = arith.constant 32 : i32
    %28 = vector.broadcast %c32_i32 : i32 to vector<336x128xi32>
    %29 = arith.cmpi slt, %0, %28 : vector<336x128xi32>
    %30 = arith.andi %27, %29 : vector<336x128xi1>
    %c0_8 = arith.constant 0 : index
    %c31 = arith.constant 31 : index
    %c0_9 = arith.constant 0 : index
    %31 = vector.load %arg1[%c0_8, %c31, %c0_9] : memref<1x400x128xbf16, #tpu.memory_space<vmem>>, vector<1x336x128xbf16>
    %32 = vector.shape_cast %31 : vector<1x336x128xbf16> to vector<336x128xbf16>
    %33 = arith.select %30, %32, %25 : vector<336x128xi1>, vector<336x128xbf16>
    %c32_i32_10 = arith.constant 32 : i32
    %34 = vector.broadcast %c32_i32_10 : i32 to vector<336x128xi32>
    %35 = arith.cmpi sge, %0, %34 : vector<336x128xi32>
    %c40_i32 = arith.constant 40 : i32
    %36 = vector.broadcast %c40_i32 : i32 to vector<336x128xi32>
    %37 = arith.cmpi slt, %0, %36 : vector<336x128xi32>
    %38 = arith.andi %35, %37 : vector<336x128xi1>
    %c0_11 = arith.constant 0 : index
    %c32 = arith.constant 32 : index
    %c0_12 = arith.constant 0 : index
    %39 = vector.load %arg1[%c0_11, %c32, %c0_12] : memref<1x400x128xbf16, #tpu.memory_space<vmem>>, vector<1x336x128xbf16>
    %40 = vector.shape_cast %39 : vector<1x336x128xbf16> to vector<336x128xbf16>
    %41 = arith.select %38, %40, %33 : vector<336x128xi1>, vector<336x128xbf16>
    %c40_i32_13 = arith.constant 40 : i32
    %42 = vector.broadcast %c40_i32_13 : i32 to vector<336x128xi32>
    %43 = arith.cmpi sge, %0, %42 : vector<336x128xi32>
    %c48_i32 = arith.constant 48 : i32
    %44 = vector.broadcast %c48_i32 : i32 to vector<336x128xi32>
    %45 = arith.cmpi slt, %0, %44 : vector<336x128xi32>
    %46 = arith.andi %43, %45 : vector<336x128xi1>
    %c0_14 = arith.constant 0 : index
    %c33 = arith.constant 33 : index
    %c0_15 = arith.constant 0 : index
    %47 = vector.load %arg1[%c0_14, %c33, %c0_15] : memref<1x400x128xbf16, #tpu.memory_space<vmem>>, vector<1x336x128xbf16>
    %48 = vector.shape_cast %47 : vector<1x336x128xbf16> to vector<336x128xbf16>
    %49 = arith.select %46, %48, %41 : vector<336x128xi1>, vector<336x128xbf16>
    %c48_i32_16 = arith.constant 48 : i32
    %50 = vector.broadcast %c48_i32_16 : i32 to vector<336x128xi32>
    %51 = arith.cmpi sge, %0, %50 : vector<336x128xi32>
    %c56_i32 = arith.constant 56 : i32
    %52 = vector.broadcast %c56_i32 : i32 to vector<336x128xi32>
    %53 = arith.cmpi slt, %0, %52 : vector<336x128xi32>
    %54 = arith.andi %51, %53 : vector<336x128xi1>
    %c0_17 = arith.constant 0 : index
    %c49 = arith.constant 49 : index
    %c0_18 = arith.constant 0 : index
    %55 = vector.load %arg1[%c0_17, %c49, %c0_18] : memref<1x400x128xbf16, #tpu.memory_space<vmem>>, vector<1x336x128xbf16>
    %56 = vector.shape_cast %55 : vector<1x336x128xbf16> to vector<336x128xbf16>
    %57 = arith.select %54, %56, %49 : vector<336x128xi1>, vector<336x128xbf16>
    %c56_i32_19 = arith.constant 56 : i32
    %58 = vector.broadcast %c56_i32_19 : i32 to vector<336x128xi32>
    %59 = arith.cmpi sge, %0, %58 : vector<336x128xi32>
    %c64_i32 = arith.constant 64 : i32
    %60 = vector.broadcast %c64_i32 : i32 to vector<336x128xi32>
    %61 = arith.cmpi slt, %0, %60 : vector<336x128xi32>
    %62 = arith.andi %59, %61 : vector<336x128xi1>
    %c0_20 = arith.constant 0 : index
    %c50 = arith.constant 50 : index
    %c0_21 = arith.constant 0 : index
    %63 = vector.load %arg1[%c0_20, %c50, %c0_21] : memref<1x400x128xbf16, #tpu.memory_space<vmem>>, vector<1x336x128xbf16>
    %64 = vector.shape_cast %63 : vector<1x336x128xbf16> to vector<336x128xbf16>
    %65 = arith.select %62, %64, %57 : vector<336x128xi1>, vector<336x128xbf16>
    %c64_i32_22 = arith.constant 64 : i32
    %66 = vector.broadcast %c64_i32_22 : i32 to vector<336x128xi32>
    %67 = arith.cmpi sge, %0, %66 : vector<336x128xi32>
    %c72_i32 = arith.constant 72 : i32
    %68 = vector.broadcast %c72_i32 : i32 to vector<336x128xi32>
    %69 = arith.cmpi slt, %0, %68 : vector<336x128xi32>
    %70 = arith.andi %67, %69 : vector<336x128xi1>
    %c0_23 = arith.constant 0 : index
    %c51 = arith.constant 51 : index
    %c0_24 = arith.constant 0 : index
    %71 = vector.load %arg1[%c0_23, %c51, %c0_24] : memref<1x400x128xbf16, #tpu.memory_space<vmem>>, vector<1x336x128xbf16>
    %72 = vector.shape_cast %71 : vector<1x336x128xbf16> to vector<336x128xbf16>
    %73 = arith.select %70, %72, %65 : vector<336x128xi1>, vector<336x128xbf16>
    %c0_25 = arith.constant 0 : index
    %c0_26 = arith.constant 0 : index
    %74 = vector.load %arg2[%c0_25, %c0_26] : memref<128x128xbf16, #tpu.memory_space<vmem>>, vector<128x128xbf16>
    %cst_27 = arith.constant dense<0.000000e+00> : vector<336x128xf32>
    %75 = tpu.matmul %73, %74, %cst_27 {dimension_numbers = #tpu.dot_dimension_numbers<[1], [0], [0], [1], [0, 0, 1, 1], [], []>} : vector<336x128xbf16>, vector<128x128xbf16>, vector<336x128xf32> -> vector<336x128xf32>
    %c0_28 = arith.constant 0 : index
    %c0_29 = arith.constant 0 : index
    %76 = vector.load %arg3[%c0_28, %c0_29] : memref<1x128xf32, #tpu.memory_space<vmem>>, vector<1x128xf32>
    %77 = vector.broadcast %76 : vector<1x128xf32> to vector<336x128xf32>
    %78 = arith.addf %75, %77 : vector<336x128xf32>
    %cst_30 = arith.constant 0.000000e+00 : f32
    %79 = vector.broadcast %cst_30 : f32 to vector<336x128xf32>
    %80 = arith.maximumf %78, %79 : vector<336x128xf32>
    %81 = tpu.iota {dimensions = array<i32: 0>} : vector<336x128xi32>
    %82 = arith.sitofp %81 : vector<336x128xi32> to vector<336x128xf32>
    %cst_31 = arith.constant 5.000000e-01 : f32
    %83 = vector.broadcast %cst_31 : f32 to vector<336x128xf32>
    %84 = arith.addf %82, %83 : vector<336x128xf32>
    %cst_32 = arith.constant 0.055555556 : f32
    %85 = vector.broadcast %cst_32 : f32 to vector<336x128xf32>
    %86 = arith.mulf %84, %85 : vector<336x128xf32>
    %87 = math.floor %86 : vector<336x128xf32>
    %88 = arith.fptosi %87 : vector<336x128xf32> to vector<336x128xi32>
    %c18_i32 = arith.constant 18 : i32
    %89 = vector.broadcast %c18_i32 : i32 to vector<336x128xi32>
    %90 = arith.muli %88, %89 : vector<336x128xi32>
    %91 = arith.subi %81, %90 : vector<336x128xi32>
    %c1_i32 = arith.constant 1 : i32
    %92 = vector.broadcast %c1_i32 : i32 to vector<336x128xi32>
    %93 = arith.cmpi sge, %88, %92 : vector<336x128xi32>
    %c16_i32_33 = arith.constant 16 : i32
    %94 = vector.broadcast %c16_i32_33 : i32 to vector<336x128xi32>
    %95 = arith.cmpi sle, %88, %94 : vector<336x128xi32>
    %96 = arith.andi %93, %95 : vector<336x128xi1>
    %c1_i32_34 = arith.constant 1 : i32
    %97 = vector.broadcast %c1_i32_34 : i32 to vector<336x128xi32>
    %98 = arith.cmpi sge, %91, %97 : vector<336x128xi32>
    %99 = arith.andi %96, %98 : vector<336x128xi1>
    %c16_i32_35 = arith.constant 16 : i32
    %100 = vector.broadcast %c16_i32_35 : i32 to vector<336x128xi32>
    %101 = arith.cmpi sle, %91, %100 : vector<336x128xi32>
    %102 = arith.andi %99, %101 : vector<336x128xi1>
    %cst_36 = arith.constant 0.000000e+00 : f32
    %103 = vector.broadcast %cst_36 : f32 to vector<336x128xf32>
    %104 = arith.select %102, %80, %103 : vector<336x128xi1>, vector<336x128xf32>
    %105 = arith.truncf %104 : vector<336x128xf32> to vector<336x128xbf16>
    %c32_37 = arith.constant 32 : index
    %c0_38 = arith.constant 0 : index
    %106 = vector.load %arg7[%c32_37, %c0_38] : memref<400x128xbf16, #tpu.memory_space<vmem>>, vector<336x128xbf16>
    tpu.vector_store %arg7[%c32_37, %c0_38], %105 {strides = array<i32>} : memref<400x128xbf16, #tpu.memory_space<vmem>>, vector<336x128xbf16>,
    %cst_39 = arith.constant 0.000000e+00 : bf16
    %107 = vector.broadcast %cst_39 : bf16 to vector<336x128xbf16>
    %c0_i32_40 = arith.constant 0 : i32
    %108 = vector.broadcast %c0_i32_40 : i32 to vector<336x128xi32>
    %109 = arith.cmpi sge, %0, %108 : vector<336x128xi32>
    %c8_i32_41 = arith.constant 8 : i32
    %110 = vector.broadcast %c8_i32_41 : i32 to vector<336x128xi32>
    %111 = arith.cmpi slt, %0, %110 : vector<336x128xi32>
    %112 = arith.andi %109, %111 : vector<336x128xi1>
    %c13_42 = arith.constant 13 : index
    %c0_43 = arith.constant 0 : index
    %113 = vector.load %arg7[%c13_42, %c0_43] : memref<400x128xbf16, #tpu.memory_space<vmem>>, vector<336x128xbf16>
    %114 = arith.select %112, %113, %107 : vector<336x128xi1>, vector<336x128xbf16>
    %c8_i32_44 = arith.constant 8 : i32
    %115 = vector.broadcast %c8_i32_44 : i32 to vector<336x128xi32>
    %116 = arith.cmpi sge, %0, %115 : vector<336x128xi32>
    %c16_i32_45 = arith.constant 16 : i32
    %117 = vector.broadcast %c16_i32_45 : i32 to vector<336x128xi32>
    %118 = arith.cmpi slt, %0, %117 : vector<336x128xi32>
    %119 = arith.andi %116, %118 : vector<336x128xi1>
    %c14_46 = arith.constant 14 : index
    %c0_47 = arith.constant 0 : index
    %120 = vector.load %arg7[%c14_46, %c0_47] : memref<400x128xbf16, #tpu.memory_space<vmem>>, vector<336x128xbf16>
    %121 = arith.select %119, %120, %114 : vector<336x128xi1>, vector<336x128xbf16>
    %c16_i32_48 = arith.constant 16 : i32
    %122 = vector.broadcast %c16_i32_48 : i32 to vector<336x128xi32>
    %123 = arith.cmpi sge, %0, %122 : vector<336x128xi32>
    %c24_i32_49 = arith.constant 24 : i32
    %124 = vector.broadcast %c24_i32_49 : i32 to vector<336x128xi32>
    %125 = arith.cmpi slt, %0, %124 : vector<336x128xi32>
    %126 = arith.andi %123, %125 : vector<336x128xi1>
    %c15_50 = arith.constant 15 : index
    %c0_51 = arith.constant 0 : index
    %127 = vector.load %arg7[%c15_50, %c0_51] : memref<400x128xbf16, #tpu.memory_space<vmem>>, vector<336x128xbf16>
    %128 = arith.select %126, %127, %121 : vector<336x128xi1>, vector<336x128xbf16>
    %c24_i32_52 = arith.constant 24 : i32
    %129 = vector.broadcast %c24_i32_52 : i32 to vector<336x128xi32>
    %130 = arith.cmpi sge, %0, %129 : vector<336x128xi32>
    %c32_i32_53 = arith.constant 32 : i32
    %131 = vector.broadcast %c32_i32_53 : i32 to vector<336x128xi32>
    %132 = arith.cmpi slt, %0, %131 : vector<336x128xi32>
    %133 = arith.andi %130, %132 : vector<336x128xi1>
    %c31_54 = arith.constant 31 : index
    %c0_55 = arith.constant 0 : index
    %134 = vector.load %arg7[%c31_54, %c0_55] : memref<400x128xbf16, #tpu.memory_space<vmem>>, vector<336x128xbf16>
    %135 = arith.select %133, %134, %128 : vector<336x128xi1>, vector<336x128xbf16>
    %c32_i32_56 = arith.constant 32 : i32
    %136 = vector.broadcast %c32_i32_56 : i32 to vector<336x128xi32>
    %137 = arith.cmpi sge, %0, %136 : vector<336x128xi32>
    %c40_i32_57 = arith.constant 40 : i32
    %138 = vector.broadcast %c40_i32_57 : i32 to vector<336x128xi32>
    %139 = arith.cmpi slt, %0, %138 : vector<336x128xi32>
    %140 = arith.andi %137, %139 : vector<336x128xi1>
    %c32_58 = arith.constant 32 : index
    %c0_59 = arith.constant 0 : index
    %141 = vector.load %arg7[%c32_58, %c0_59] : memref<400x128xbf16, #tpu.memory_space<vmem>>, vector<336x128xbf16>
    %142 = arith.select %140, %141, %135 : vector<336x128xi1>, vector<336x128xbf16>
    %c40_i32_60 = arith.constant 40 : i32
    %143 = vector.broadcast %c40_i32_60 : i32 to vector<336x128xi32>
    %144 = arith.cmpi sge, %0, %143 : vector<336x128xi32>
    %c48_i32_61 = arith.constant 48 : i32
    %145 = vector.broadcast %c48_i32_61 : i32 to vector<336x128xi32>
    %146 = arith.cmpi slt, %0, %145 : vector<336x128xi32>
    %147 = arith.andi %144, %146 : vector<336x128xi1>
    %c33_62 = arith.constant 33 : index
    %c0_63 = arith.constant 0 : index
    %148 = vector.load %arg7[%c33_62, %c0_63] : memref<400x128xbf16, #tpu.memory_space<vmem>>, vector<336x128xbf16>
    %149 = arith.select %147, %148, %142 : vector<336x128xi1>, vector<336x128xbf16>
    %c48_i32_64 = arith.constant 48 : i32
    %150 = vector.broadcast %c48_i32_64 : i32 to vector<336x128xi32>
    %151 = arith.cmpi sge, %0, %150 : vector<336x128xi32>
    %c56_i32_65 = arith.constant 56 : i32
    %152 = vector.broadcast %c56_i32_65 : i32 to vector<336x128xi32>
    %153 = arith.cmpi slt, %0, %152 : vector<336x128xi32>
    %154 = arith.andi %151, %153 : vector<336x128xi1>
    %c49_66 = arith.constant 49 : index
    %c0_67 = arith.constant 0 : index
    %155 = vector.load %arg7[%c49_66, %c0_67] : memref<400x128xbf16, #tpu.memory_space<vmem>>, vector<336x128xbf16>
    %156 = arith.select %154, %155, %149 : vector<336x128xi1>, vector<336x128xbf16>
    %c56_i32_68 = arith.constant 56 : i32
    %157 = vector.broadcast %c56_i32_68 : i32 to vector<336x128xi32>
    %158 = arith.cmpi sge, %0, %157 : vector<336x128xi32>
    %c64_i32_69 = arith.constant 64 : i32
    %159 = vector.broadcast %c64_i32_69 : i32 to vector<336x128xi32>
    %160 = arith.cmpi slt, %0, %159 : vector<336x128xi32>
    %161 = arith.andi %158, %160 : vector<336x128xi1>
    %c50_70 = arith.constant 50 : index
    %c0_71 = arith.constant 0 : index
    %162 = vector.load %arg7[%c50_70, %c0_71] : memref<400x128xbf16, #tpu.memory_space<vmem>>, vector<336x128xbf16>
    %163 = arith.select %161, %162, %156 : vector<336x128xi1>, vector<336x128xbf16>
    %c64_i32_72 = arith.constant 64 : i32
    %164 = vector.broadcast %c64_i32_72 : i32 to vector<336x128xi32>
    %165 = arith.cmpi sge, %0, %164 : vector<336x128xi32>
    %c72_i32_73 = arith.constant 72 : i32
    %166 = vector.broadcast %c72_i32_73 : i32 to vector<336x128xi32>
    %167 = arith.cmpi slt, %0, %166 : vector<336x128xi32>
    %168 = arith.andi %165, %167 : vector<336x128xi1>
    %c51_74 = arith.constant 51 : index
    %c0_75 = arith.constant 0 : index
    %169 = vector.load %arg7[%c51_74, %c0_75] : memref<400x128xbf16, #tpu.memory_space<vmem>>, vector<336x128xbf16>
    %170 = arith.select %168, %169, %163 : vector<336x128xi1>, vector<336x128xbf16>
    %c0_76 = arith.constant 0 : index
    %c0_77 = arith.constant 0 : index
    %171 = vector.load %arg4[%c0_76, %c0_77] : memref<128x128xbf16, #tpu.memory_space<vmem>>, vector<128x128xbf16>
    %cst_78 = arith.constant dense<0.000000e+00> : vector<336x128xf32>
    %172 = tpu.matmul %170, %171, %cst_78 {dimension_numbers = #tpu.dot_dimension_numbers<[1], [0], [0], [1], [0, 0, 1, 1], [], []>} : vector<336x128xbf16>, vector<128x128xbf16>, vector<336x128xf32> -> vector<336x128xf32>
    %c0_79 = arith.constant 0 : index
    %c32_80 = arith.constant 32 : index
    %c0_81 = arith.constant 0 : index
    %173 = vector.load %arg1[%c0_79, %c32_80, %c0_81] : memref<1x400x128xbf16, #tpu.memory_space<vmem>>, vector<1x336x128xbf16>
    %174 = vector.shape_cast %173 : vector<1x336x128xbf16> to vector<336x128xbf16>
    %175 = arith.extf %174 : vector<336x128xbf16> to vector<336x128xf32>
    %c0_82 = arith.constant 0 : index
    %c0_83 = arith.constant 0 : index
    %176 = vector.load %arg5[%c0_82, %c0_83] : memref<1x128xf32, #tpu.memory_space<vmem>>, vector<1x128xf32>
    %177 = vector.broadcast %176 : vector<1x128xf32> to vector<336x128xf32>
    %178 = arith.addf %172, %177 : vector<336x128xf32>
    %179 = arith.addf %178, %175 : vector<336x128xf32>
    %cst_84 = arith.constant 0.000000e+00 : f32
    %180 = vector.broadcast %cst_84 : f32 to vector<336x128xf32>
    %181 = arith.maximumf %179, %180 : vector<336x128xf32>
    %182 = arith.truncf %181 : vector<336x128xf32> to vector<336x128xbf16>
    %c0_85 = arith.constant 0 : index
    %c0_86 = arith.constant 0 : index
    %c0_87 = arith.constant 0 : index
    %183 = vector.load %arg6[%c0_85, %c0_86, %c0_87] : memref<1x336x128xbf16, #tpu.memory_space<vmem>>, vector<1x336x128xbf16>
    %184 = vector.shape_cast %183 : vector<1x336x128xbf16> to vector<336x128xbf16>
    %185 = vector.shape_cast %182 : vector<336x128xbf16> to vector<1x336x128xbf16>
    tpu.vector_store %arg6[%c0_85, %c0_86, %c0_87], %185 {strides = array<i32>} : memref<1x336x128xbf16, #tpu.memory_space<vmem>>, vector<1x336x128xbf16>,
    return
  }
  func.func @transform_0(%arg0: i32) -> (i32, i32, i32) {
    %c0_i32 = arith.constant 0 : i32
    %c0_i32_0 = arith.constant 0 : i32
    %c0_i32_1 = arith.constant 0 : i32
    return %arg0, %c0_i32, %c0_i32_0 : i32, i32, i32
  }
  func.func @transform_1(%arg0: i32) -> (i32, i32) {
    %c0_i32 = arith.constant 0 : i32
    %c0_i32_0 = arith.constant 0 : i32
    %c0_i32_1 = arith.constant 0 : i32
    return %c0_i32, %c0_i32_0 : i32, i32
  }
  func.func @transform_2(%arg0: i32) -> (i32, i32) {
    %c0_i32 = arith.constant 0 : i32
    %c0_i32_0 = arith.constant 0 : i32
    %c0_i32_1 = arith.constant 0 : i32
    return %c0_i32, %c0_i32_0 : i32, i32
  }
  func.func @transform_3(%arg0: i32) -> (i32, i32) {
    %c0_i32 = arith.constant 0 : i32
    %c0_i32_0 = arith.constant 0 : i32
    %c0_i32_1 = arith.constant 0 : i32
    return %c0_i32, %c0_i32_0 : i32, i32
  }
  func.func @transform_4(%arg0: i32) -> (i32, i32) {
    %c0_i32 = arith.constant 0 : i32
    %c0_i32_0 = arith.constant 0 : i32
    %c0_i32_1 = arith.constant 0 : i32
    return %c0_i32, %c0_i32_0 : i32, i32
  }
  func.func @transform_5(%arg0: i32) -> (i32, i32, i32) {
    %c0_i32 = arith.constant 0 : i32
    %c0_i32_0 = arith.constant 0 : i32
    %c0_i32_1 = arith.constant 0 : i32
    return %arg0, %c0_i32, %c0_i32_0 : i32, i32, i32
  }
}

</mosaic_0001>

<llo_original>
// kernel: tile.24
$region0: #{tile.24}
  #allocation0 [shape = 's32[1]{0}', space=sflag, size = 0x4, scoped, tag = 'scoped memory for tile.24']
  %s0 = inlined_call_operand.vmem [shape: f32[8], index: 0, kind: input, shape index: {}]
  %s1 = inlined_call_operand.vmem [shape: f32[9,8], index: 1, kind: output, shape index: {}]
  // Predicated region
  $region2: #{tile.24} parent=0 // pred_check
    _
  $region3: #{tile.24} parent=0 // pred_check_branch
    %3 = sbr.rel (0) target = $region5
  $region4: #{tile.24} parent=0 // pred_region
    _
  $region5: #{tile.24} parent=0 // pred_fallthru
    _
  %v4 = vld [vmem:[%s0] ss:$0 sm:$0xff]
  %5 = vst [vmem:[%s1] sm:$0xff] %v4
  %s6 = scalar_lea.vmem %s1, 8
  %7 = vst [vmem:[%s6] sm:$0xff] %v4

// kernel: tile.25
$region0: #{tile.25}
  %s0 = inlined_call_operand.vmem [shape: f32[9,8], index: 0, kind: input, shape index: {}]
  %s1 = inlined_call_operand.vmem [shape: f32[72], index: 1, kind: output, shape index: {}]
  $region1: #{tile.25} parent=0
    #allocation0 [shape = 'u8[4096]{0}', space=vmem, size = 0x1000, scoped, tag = 'scoped mem for output reshape']
    %v2 = vld [vmem:[%s0] sm:$0x1]
    %vm3 = vcmask 64512
    %4 = vst.msk [vmem:[#allocation0] sm:$0x1] %vm3, %v2
    %s5 = scalar_lea.vmem %s0, 8
    %v6 = vld [vmem:[%s5] sm:$0x1]
    %7 = vrot.lane.b32.xlu0 %v6, 64
    %v8 = vpop.permute.xlu0 %7
    %vm9 = vcmask 589312
    %10 = vst.msk [vmem:[#allocation0] sm:$0x1] %vm9, %v8
    %s11 = scalar_lea.vmem %s0, 7
    %v12 = vld [vmem:[%s11] sm:$0x1]
    %13 = vrot.lane.b32.xlu0 %v12, 56
    %v14 = vpop.permute.xlu0 %13
    %vm15 = vcmask 523712
    %16 = vst.msk [vmem:[#allocation0] sm:$0x1] %vm15, %v14
    %s17 = scalar_lea.vmem %s0, 6
    %v18 = vld [vmem:[%s17] sm:$0x1]
    %19 = vrot.lane.b32.xlu0 %v18, 48
    %v20 = vpop.permute.xlu0 %19
    %vm21 = vcmask 458112
    %22 = vst.msk [vmem:[#allocation0] sm:$0x1] %vm21, %v20
    %s23 = scalar_lea.vmem %s0, 5
    %v24 = vld [vmem:[%s23] sm:$0x1]
    %25 = vrot.lane.b32.xlu0 %v24, 40
    %v26 = vpop.permute.xlu0 %25
    %vm27 = vcmask 392512
    %28 = vst.msk [vmem:[#allocation0] sm:$0x1] %vm27, %v26
    %s29 = scalar_lea.vmem %s0, 4
    %v30 = vld [vmem:[%s29] sm:$0x1]
    %31 = vrot.lane.b32.xlu0 %v30, 32
    %v32 = vpop.permute.xlu0 %31
    %vm33 = vcmask 326912
    %34 = vst.msk [vmem:[#allocation0] sm:$0x1] %vm33, %v32
    %s35 = scalar_lea.vmem %s0, 3
    %v36 = vld [vmem:[%s35] sm:$0x1]
    %37 = vrot.lane.b32.xlu0 %v36, 24
    %v38 = vpop.permute.xlu0 %37
    %vm39 = vcmask 261312
    %40 = vst.msk [vmem:[#allocation0] sm:$0x1] %vm39, %v38
    %s41 = scalar_lea.vmem %s0, 2
    %v42 = vld [vmem:[%s41] sm:$0x1]
    %43 = vrot.lane.b32.xlu0 %v42, 16
    %v44 = vpop.permute.xlu0 %43
    %vm45 = vcmask 195712
    %46 = vst.msk [vmem:[#allocation0] sm:$0x1] %vm45, %v44
    %s47 = scalar_lea.vmem %s0, 1
    %v48 = vld [vmem:[%s47] sm:$0x1]
    %49 = vrot.lane.b32.xlu0 %v48, 8
    %v50 = vpop.permute.xlu0 %49
    %vm51 = vcmask 130112
    %52 = vst.msk [vmem:[#allocation0] sm:$0x1] %vm51, %v50
    %s54 = sshllo.u32 0, 1
    %v56 = vld [vmem:[#allocation0] sm:%s54]
    %s57 = sshllo.u32 0, 1
    %58 = vst [vmem:[%s1] sm:%s57] %v56

// kernel: _basic_block_impl.1
$region0: #{_basic_block_impl.1}
  #allocation0 [shape = 'u32[]', space=smem, size = 0x4, offset = 0x4, fixed_abs, tag = 'smem constant byte address 0x4 - core index']
  #allocation1 [shape = 'u32[144,128]{1,0:T(1,128)}', space=vmem, size = 0x12000, scoped, tag = 'internal scratch']
  #allocation2 [shape = 'bf16[400,128]{1,0:T(16,128)(2,1)}', space=vmem, size = 0x19000, scoped, tag = 'scratch operand']
  %s0 = inlined_call_operand.vmem [shape: bf16[2,400,128], index: 0, kind: input, shape index: {}]
  %s1 = inlined_call_operand.vmem [shape: bf16[128,128], index: 1, kind: input, shape index: {}]
  %s2 = inlined_call_operand.vmem [shape: f32[1,128], index: 2, kind: input, shape index: {}]
  %s3 = inlined_call_operand.vmem [shape: bf16[128,128], index: 3, kind: input, shape index: {}]
  %s4 = inlined_call_operand.vmem [shape: f32[1,128], index: 4, kind: input, shape index: {}]
  %s5 = inlined_call_operand.vmem [shape: bf16[2,336,128], index: 5, kind: output, shape index: {}]
  %s6 = sld [smem:[#allocation0]]
  $region53: #{_basic_block_impl.1} parent=0
    _
  %s8 = ssub.s32 1, %s6
  %s9 = scalar_select 0, %s8, %s6
  loop: start=0, step=1, limit=4
  $region2: #{_basic_block_impl.1} parent=0 // loop_pre_header
    _
  $region3: #{_basic_block_impl.1} parent=0 // loop_header
    %s11 = sphi 0, %s15
    %p12 = scmp.ge.s32.totalorder %s11, 4
    %s21 = sphi 0, %s23
    %s24 = sphi 0, %s21
    %s25 = sphi 0, %s24
    %s41 = sphi 0, %s25
    %s45 = sphi 0, %s45
    %s47 = sphi 0, %s45
    %s48 = sphi 0, %s47
    %s62 = sphi 0, %s48
    %s66 = sphi 0, %s66
    %s68 = sphi 0, %s66
    %s69 = sphi 0, %s68
    %s83 = sphi 0, %s69
    %s87 = sphi 0, %s87
    %s89 = sphi 0, %s87
    %s90 = sphi 0, %s89
    %s104 = sphi 0, %s90
    %s108 = sphi 0, %s108
    %s110 = sphi 0, %s108
    %s111 = sphi 0, %s110
    %s125 = sphi 0, %s111
    %s131 = sphi 0, %s133
    %s134 = sphi 0, %s131
    %s135 = sphi 0, %s134
    %s151 = sphi 0, %s135
  $region4: #{_basic_block_impl.1} parent=0 // loop_header_branch
    %14 = sbr.rel (%p12) target = $region8
  $region5: #{_basic_block_impl.1} parent=0 // loop_body
    %s16 = ssub.s32 %s11, 1
    %s17 = ssub.s32 %s11, 2
    %s18 = sadd.s32 %s11, 1
    %s19 = ssub.s32 %s11, %s18
    %p20 = scmp.eq.s32.totalorder %s19, 0
    %s22 = sadd.s32 %s21, 1
    %s23 = scalar_select %p20, %s21, %s22
    %p26 = pneg %p20
    %p27 = scmp.eq.s32.totalorder %s11, 1
    %p28 = por %p26, %p27
    %p29 = scmp.ne.s32.totalorder %s21, %s24
    %p30 = scmp.eq.s32.totalorder %s11, 0
    %p31 = por %p29, %p30
    %p32 = scmp.ne.s32.totalorder %s21, %s24
    %p33 = scmp.eq.s32.totalorder %s16, 1
    %p34 = por %p32, %p33
    %p35 = scmp.ne.s32.totalorder %s24, %s25
    %p36 = scmp.eq.s32.totalorder %s16, 0
    %p37 = por %p35, %p36
    %p38 = scmp.ne.s32.totalorder %s24, %s25
    %p39 = scmp.eq.s32.totalorder %s17, 1
    %p40 = por %p38, %p39
    %p42 = scmp.ne.s32.totalorder %s25, %s41
    %p43 = scmp.eq.s32.totalorder %s17, 0
    %p44 = por %p42, %p43
    %s46 = sadd.s32 %s45, 1
    %p49 = scmp.eq.s32.totalorder %s11, 1
    %p50 = scmp.ne.s32.totalorder %s45, %s47
    %p51 = scmp.eq.s32.totalorder %s11, 0
    %p52 = por %p50, %p51
    %p53 = scmp.ne.s32.totalorder %s45, %s47
    %p54 = scmp.eq.s32.totalorder %s16, 1
    %p55 = por %p53, %p54
    %p56 = scmp.ne.s32.totalorder %s47, %s48
    %p57 = scmp.eq.s32.totalorder %s16, 0
    %p58 = por %p56, %p57
    %p59 = scmp.ne.s32.totalorder %s47, %s48
    %p60 = scmp.eq.s32.totalorder %s17, 1
    %p61 = por %p59, %p60
    %p63 = scmp.ne.s32.totalorder %s48, %s62
    %p64 = scmp.eq.s32.totalorder %s17, 0
    %p65 = por %p63, %p64
    %s67 = sadd.s32 %s66, 1
    %p70 = scmp.eq.s32.totalorder %s11, 1
    %p71 = scmp.ne.s32.totalorder %s66, %s68
    %p72 = scmp.eq.s32.totalorder %s11, 0
    %p73 = por %p71, %p72
    %p74 = scmp.ne.s32.totalorder %s66, %s68
    %p75 = scmp.eq.s32.totalorder %s16, 1
    %p76 = por %p74, %p75
    %p77 = scmp.ne.s32.totalorder %s68, %s69
    %p78 = scmp.eq.s32.totalorder %s16, 0
    %p79 = por %p77, %p78
    %p80 = scmp.ne.s32.totalorder %s68, %s69
    %p81 = scmp.eq.s32.totalorder %s17, 1
    %p82 = por %p80, %p81
    %p84 = scmp.ne.s32.totalorder %s69, %s83
    %p85 = scmp.eq.s32.totalorder %s17, 0
    %p86 = por %p84, %p85
    %s88 = sadd.s32 %s87, 1
    %p91 = scmp.eq.s32.totalorder %s11, 1
    %p92 = scmp.ne.s32.totalorder %s87, %s89
    %p93 = scmp.eq.s32.totalorder %s11, 0
    %p94 = por %p92, %p93
    %p95 = scmp.ne.s32.totalorder %s87, %s89
    %p96 = scmp.eq.s32.totalorder %s16, 1
    %p97 = por %p95, %p96
    %p98 = scmp.ne.s32.totalorder %s89, %s90
    %p99 = scmp.eq.s32.totalorder %s16, 0
    %p100 = por %p98, %p99
    %p101 = scmp.ne.s32.totalorder %s89, %s90
    %p102 = scmp.eq.s32.totalorder %s17, 1
    %p103 = por %p101, %p102
    %p105 = scmp.ne.s32.totalorder %s90, %s104
    %p106 = scmp.eq.s32.totalorder %s17, 0
    %p107 = por %p105, %p106
    %s109 = sadd.s32 %s108, 1
    %p112 = scmp.eq.s32.totalorder %s11, 1
    %p113 = scmp.ne.s32.totalorder %s108, %s110
    %p114 = scmp.eq.s32.totalorder %s11, 0
    %p115 = por %p113, %p114
    %p116 = scmp.ne.s32.totalorder %s108, %s110
    %p117 = scmp.eq.s32.totalorder %s16, 1
    %p118 = por %p116, %p117
    %p119 = scmp.ne.s32.totalorder %s110, %s111
    %p120 = scmp.eq.s32.totalorder %s16, 0
    %p121 = por %p119, %p120
    %p122 = scmp.ne.s32.totalorder %s110, %s111
    %p123 = scmp.eq.s32.totalorder %s17, 1
    %p124 = por %p122, %p123
    %p126 = scmp.ne.s32.totalorder %s111, %s125
    %p127 = scmp.eq.s32.totalorder %s17, 0
    %p128 = por %p126, %p127
    %s129 = ssub.s32 %s11, %s18
    %p130 = scmp.eq.s32.totalorder %s129, 0
    %s132 = sadd.s32 %s131, 1
    %s133 = scalar_select %p130, %s131, %s132
    %p136 = pneg %p130
    %p137 = scmp.eq.s32.totalorder %s11, 1
    %p138 = por %p136, %p137
    %p139 = scmp.ne.s32.totalorder %s131, %s134
    %p140 = scmp.eq.s32.totalorder %s11, 0
    %p141 = por %p139, %p140
    %p142 = scmp.ne.s32.totalorder %s131, %s134
    %p143 = scmp.eq.s32.totalorder %s16, 1
    %p144 = por %p142, %p143
    %p145 = scmp.ne.s32.totalorder %s134, %s135
    %p146 = scmp.eq.s32.totalorder %s16, 0
    %p147 = por %p145, %p146
    %p148 = scmp.ne.s32.totalorder %s134, %s135
    %p149 = scmp.eq.s32.totalorder %s17, 1
    %p150 = por %p148, %p149
    %p152 = scmp.ne.s32.totalorder %s135, %s151
    %p153 = scmp.eq.s32.totalorder %s17, 0
    %p154 = por %p152, %p153
    %p155 = scmp.le.s32.totalorder 1, %s11
    %p156 = scmp.lt.s32.totalorder %s11, 3
    %p157 = pnand %p155, %p156
    %p158 = pneg %p157
    // Predicated region
    $region9: #{_basic_block_impl.1} parent=5 // pred_check
      _
    $region10: #{_basic_block_impl.1} parent=5 // pred_check_branch
      %160 = sbr.rel (%p157) target = $region12
    $region11: #{_basic_block_impl.1} parent=5 // pred_region
      %s161 = ssub.s32 %s11, 1
      // Predicated region
      $region13: #{_basic_block_impl.1} parent=11 // pred_check
        %p162 = pneg %p58
      $region14: #{_basic_block_impl.1} parent=11 // pred_check_branch
        %164 = sbr.rel (%p162) target = $region16
      $region15: #{_basic_block_impl.1} parent=11 // pred_region
        _
      $region16: #{_basic_block_impl.1} parent=11 // pred_fallthru
        _
      // Predicated region
      $region17: #{_basic_block_impl.1} parent=11 // pred_check
        %p165 = pneg %p79
      $region18: #{_basic_block_impl.1} parent=11 // pred_check_branch
        %167 = sbr.rel (%p165) target = $region20
      $region19: #{_basic_block_impl.1} parent=11 // pred_region
        _
      $region20: #{_basic_block_impl.1} parent=11 // pred_fallthru
        _
      // Predicated region
      $region21: #{_basic_block_impl.1} parent=11 // pred_check
        %p168 = pneg %p100
      $region22: #{_basic_block_impl.1} parent=11 // pred_check_branch
        %170 = sbr.rel (%p168) target = $region24
      $region23: #{_basic_block_impl.1} parent=11 // pred_region
        _
      $region24: #{_basic_block_impl.1} parent=11 // pred_fallthru
        _
      // Predicated region
      $region25: #{_basic_block_impl.1} parent=11 // pred_check
        %p171 = pneg %p121
      $region26: #{_basic_block_impl.1} parent=11 // pred_check_branch
        %173 = sbr.rel (%p171) target = $region28
      $region27: #{_basic_block_impl.1} parent=11 // pred_region
        _
      $region28: #{_basic_block_impl.1} parent=11 // pred_fallthru
        _
    $region12: #{_basic_block_impl.1} parent=5 // pred_fallthru
      _
    %p174 = scmp.lt.s32.totalorder %s11, 2
    // Predicated region
    $region29: #{_basic_block_impl.1} parent=5 // pred_check
      %p175 = pneg %p174
    $region30: #{_basic_block_impl.1} parent=5 // pred_check_branch
      %177 = sbr.rel (%p175) target = $region32
    $region31: #{_basic_block_impl.1} parent=5 // pred_region
      // Predicated region
      $region33: #{_basic_block_impl.1} parent=31 // pred_check
        %p178 = pneg %p31
      $region34: #{_basic_block_impl.1} parent=31 // pred_check_branch
        %180 = sbr.rel (%p178) target = $region36
      $region35: #{_basic_block_impl.1} parent=31 // pred_region
        %p181 = scmp.lt.s32.totalorder %s11, 1
        %s182 = scalar_select %p181, %s11, 1
        %s183 = smul.addr %s182, 50
        %s184 = smul.addr %s183, 4
        %s185 = scalar_lea.vmem %s0, %s184
      $region36: #{_basic_block_impl.1} parent=31 // pred_fallthru
        _
    $region32: #{_basic_block_impl.1} parent=5 // pred_fallthru
      _
    %p186 = scmp.le.s32.totalorder 1, %s11
    %p187 = scmp.lt.s32.totalorder %s11, 3
    %p188 = pnand %p186, %p187
    %p189 = pneg %p188
    // Predicated region
    $region37: #{_basic_block_impl.1} parent=5 // pred_check
      _
    $region38: #{_basic_block_impl.1} parent=5 // pred_check_branch
      %191 = sbr.rel (%p188) target = $region40
    $region39: #{_basic_block_impl.1} parent=5 // pred_region
      %s192 = ssub.s32 %s11, 1
      %p193 = scmp.lt.s32.totalorder %s16, 1
      %s194 = scalar_select %p193, %s16, 1
      %s195 = smul.addr %s194, 50
      %s196 = smul.addr %s195, 4
      %s197 = scalar_lea.vmem %s0, %s196
      %p198 = pneg %p37
      %p199 = pneg %p34
      %p200 = pneg %p58
      %p201 = pneg %p55
      %p202 = pneg %p79
      %p203 = pneg %p76
      %p204 = pneg %p100
      %p205 = pneg %p97
      %p206 = pneg %p121
      %p207 = pneg %p118
      %p208 = pneg %p147
      %p209 = pneg %p144
      %p210 = scmp.lt.s32.totalorder %s16, 1
      %s211 = scalar_select %p210, %s16, 1
      %s212 = smul.addr %s211, 42
      %s213 = smul.addr %s212, 4
      %s214 = scalar_lea.vmem %s5, %s213
      %p215 = scmp.lt.s32.totalorder %s16, 1
      %s216 = scalar_select %p215, %s16, 1
      %s217 = smul.addr %s216, 50
      %s218 = smul.addr %s217, 4
      %s219 = scalar_lea.vmem %s0, %s218
      %p220 = scmp.lt.s32.totalorder %s16, 1
      %s221 = scalar_select %p220, %s16, 1
      %s222 = smul.addr %s221, 42
      %s223 = smul.addr %s222, 4
      %s224 = scalar_lea.vmem %s5, %s223
      %v228 = vlaneseq
      %v229 = vand.u32 %v228, 127
      %vm230 = vcmp.ge.s32.totalorder %v229, 0
      %vm231 = vcmp.lt.s32.totalorder %v229, 8
      %vm232 = vmand %vm230, %vm231
      %v233 = vld [vmem:[%s219 + $0x4] sm:$0xc]
      %v234 = vld [vmem:[%s219 + $0x8] sm:$0xf]
      %v235 = vld [vmem:[%s219 + $0xc] sm:$0xf]
      %v236 = vld [vmem:[%s219 + $0x10] sm:$0xf]
      %v237 = vld [vmem:[%s219 + $0x14] sm:$0xf]
      %v238 = vld [vmem:[%s219 + $0x18] sm:$0xf]
      %v239 = vld [vmem:[%s219 + $0x1c] sm:$0xf]
      %v240 = vld [vmem:[%s219 + $0x20] sm:$0xf]
      %v241 = vld [vmem:[%s219 + $0x24] sm:$0xf]
      %v242 = vld [vmem:[%s219 + $0x28] sm:$0xf]
      %v243 = vld [vmem:[%s219 + $0x2c] sm:$0xf]
      %v244 = vld [vmem:[%s219 + $0x30] sm:$0xf]
      %v245 = vld [vmem:[%s219 + $0x34] sm:$0xf]
      %v246 = vld [vmem:[%s219 + $0x38] sm:$0xf]
      %v247 = vld [vmem:[%s219 + $0x3c] sm:$0xf]
      %v248 = vld [vmem:[%s219 + $0x40] sm:$0xf]
      %v249 = vld [vmem:[%s219 + $0x44] sm:$0xf]
      %v250 = vld [vmem:[%s219 + $0x48] sm:$0xf]
      %v251 = vld [vmem:[%s219 + $0x4c] sm:$0xf]
      %v252 = vld [vmem:[%s219 + $0x50] sm:$0xf]
      %v253 = vld [vmem:[%s219 + $0x54] sm:$0xf]
      %v254 = vld [vmem:[%s219 + $0x58] sm:$0xf]
      %v255 = vld [vmem:[%s219 + $0x5c] sm:$0xf]
      %v256 = vld [vmem:[%s219 + $0x60] sm:$0xf]
      %v257 = vld [vmem:[%s219 + $0x64] sm:$0xf]
      %v258 = vld [vmem:[%s219 + $0x68] sm:$0xf]
      %v259 = vld [vmem:[%s219 + $0x6c] sm:$0xf]
      %v260 = vld [vmem:[%s219 + $0x70] sm:$0xf]
      %v261 = vld [vmem:[%s219 + $0x74] sm:$0xf]
      %v262 = vld [vmem:[%s219 + $0x78] sm:$0xf]
      %v263 = vld [vmem:[%s219 + $0x7c] sm:$0xf]
      %v264 = vld [vmem:[%s219 + $0x80] sm:$0xf]
      %v265 = vld [vmem:[%s219 + $0x84] sm:$0xf]
      %v266 = vld [vmem:[%s219 + $0x88] sm:$0xf]
      %v267 = vld [vmem:[%s219 + $0x8c] sm:$0xf]
      %v268 = vld [vmem:[%s219 + $0x90] sm:$0xf]
      %v269 = vld [vmem:[%s219 + $0x94] sm:$0xf]
      %v270 = vld [vmem:[%s219 + $0x98] sm:$0xf]
      %v271 = vld [vmem:[%s219 + $0x9c] sm:$0xf]
      %v272 = vld [vmem:[%s219 + $0xa0] sm:$0xf]
      %v273 = vld [vmem:[%s219 + $0xa4] sm:$0xf]
      %v274 = vld [vmem:[%s219 + $0xa8] sm:$0xf]
      %v275 = vld [vmem:[%s219 + $0xac] sm:$0x7]
      %vm276 = vmpackc.low %vm232, %vm232
      %v277 = vsel %vm276, %v233, 0
      %v278 = vsel %vm276, %v234, 0
      %v279 = vsel %vm276, %v235, 0
      %v280 = vsel %vm276, %v236, 0
      %v281 = vsel %vm276, %v237, 0
      %v282 = vsel %vm276, %v238, 0
      %v283 = vsel %vm276, %v239, 0
      %v284 = vsel %vm276, %v240, 0
      %v285 = vsel %vm276, %v241, 0
      %v286 = vsel %vm276, %v242, 0
      %v287 = vsel %vm276, %v243, 0
      %v288 = vsel %vm276, %v244, 0
      %v289 = vsel %vm276, %v245, 0
      %v290 = vsel %vm276, %v246, 0
      %v291 = vsel %vm276, %v247, 0
      %v292 = vsel %vm276, %v248, 0
      %v293 = vsel %vm276, %v249, 0
      %v294 = vsel %vm276, %v250, 0
      %v295 = vsel %vm276, %v251, 0
      %v296 = vsel %vm276, %v252, 0
      %v297 = vsel %vm276, %v253, 0
      %v298 = vsel %vm276, %v254, 0
      %v299 = vsel %vm276, %v255, 0
      %v300 = vsel %vm276, %v256, 0
      %v301 = vsel %vm276, %v257, 0
      %v302 = vsel %vm276, %v258, 0
      %v303 = vsel %vm276, %v259, 0
      %v304 = vsel %vm276, %v260, 0
      %v305 = vsel %vm276, %v261, 0
      %v306 = vsel %vm276, %v262, 0
      %v307 = vsel %vm276, %v263, 0
      %v308 = vsel %vm276, %v264, 0
      %v309 = vsel %vm276, %v265, 0
      %v310 = vsel %vm276, %v266, 0
      %v311 = vsel %vm276, %v267, 0
      %v312 = vsel %vm276, %v268, 0
      %v313 = vsel %vm276, %v269, 0
      %v314 = vsel %vm276, %v270, 0
      %v315 = vsel %vm276, %v271, 0
      %v316 = vsel %vm276, %v272, 0
      %v317 = vsel %vm276, %v273, 0
      %v318 = vsel %vm276, %v274, 0
      %v319 = vsel %vm276, %v275, 0
      %vm320 = vcmp.ge.s32.totalorder %v229, 8
      %vm321 = vcmp.lt.s32.totalorder %v229, 16
      %vm322 = vmand %vm320, %vm321
      %v323 = vld [vmem:[%s219 + $0x4] sm:$0x8]
      %vm324 = vmpackc.low %vm322, %vm322
      %vm325 = vsmask.f32 256
      %vm326 = vsmask.f32 4368
      %vm327 = vmor %vm325, %vm326
      %v329 = vshrl.u32 %v277, 16
      %v331 = vrot.slane %v329, 7
      %v332 = vshll.u32 %v277, 16
      %v334 = vor.u32 %v331, %v332
      %v335 = vrot.slane %v331, 4
      %v337 = vshrl.u32 %v278, 16
      %v339 = vrot.slane %v337, 7
      %v340 = vshll.u32 %v278, 16
      %v342 = vor.u32 %v339, %v340
      %v343 = vsel %vm327, %v335, %v342
      %v344 = vrot.slane %v339, 4
      %v346 = vshrl.u32 %v279, 16
      %v348 = vrot.slane %v346, 7
      %v349 = vshll.u32 %v279, 16
      %v351 = vor.u32 %v348, %v349
      %v352 = vsel %vm327, %v344, %v351
      %v353 = vrot.slane %v348, 4
      %v355 = vshrl.u32 %v280, 16
      %v357 = vrot.slane %v355, 7
      %v358 = vshll.u32 %v280, 16
      %v360 = vor.u32 %v357, %v358
      %v361 = vsel %vm327, %v353, %v360
      %v362 = vrot.slane %v357, 4
      %v364 = vshrl.u32 %v281, 16
      %v366 = vrot.slane %v364, 7
      %v367 = vshll.u32 %v281, 16
      %v369 = vor.u32 %v366, %v367
      %v370 = vsel %vm327, %v362, %v369
      %v371 = vrot.slane %v366, 4
      %v373 = vshrl.u32 %v282, 16
      %v375 = vrot.slane %v373, 7
      %v376 = vshll.u32 %v282, 16
      %v378 = vor.u32 %v375, %v376
      %v379 = vsel %vm327, %v371, %v378
      %v380 = vrot.slane %v375, 4
      %v382 = vshrl.u32 %v283, 16
      %v384 = vrot.slane %v382, 7
      %v385 = vshll.u32 %v283, 16
      %v387 = vor.u32 %v384, %v385
      %v388 = vsel %vm327, %v380, %v387
      %v389 = vrot.slane %v384, 4
      %v391 = vshrl.u32 %v284, 16
      %v393 = vrot.slane %v391, 7
      %v394 = vshll.u32 %v284, 16
      %v396 = vor.u32 %v393, %v394
      %v397 = vsel %vm327, %v389, %v396
      %v398 = vrot.slane %v393, 4
      %v400 = vshrl.u32 %v285, 16
      %v402 = vrot.slane %v400, 7
      %v403 = vshll.u32 %v285, 16
      %v405 = vor.u32 %v402, %v403
      %v406 = vsel %vm327, %v398, %v405
      %v407 = vrot.slane %v402, 4
      %v409 = vshrl.u32 %v286, 16
      %v411 = vrot.slane %v409, 7
      %v412 = vshll.u32 %v286, 16
      %v414 = vor.u32 %v411, %v412
      %v415 = vsel %vm327, %v407, %v414
      %v416 = vrot.slane %v411, 4
      %v418 = vshrl.u32 %v287, 16
      %v420 = vrot.slane %v418, 7
      %v421 = vshll.u32 %v287, 16
      %v423 = vor.u32 %v420, %v421
      %v424 = vsel %vm327, %v416, %v423
      %v425 = vrot.slane %v420, 4
      %v427 = vshrl.u32 %v288, 16
      %v429 = vrot.slane %v427, 7
      %v430 = vshll.u32 %v288, 16
      %v432 = vor.u32 %v429, %v430
      %v433 = vsel %vm327, %v425, %v432
      %v434 = vrot.slane %v429, 4
      %v436 = vshrl.u32 %v289, 16
      %v438 = vrot.slane %v436, 7
      %v439 = vshll.u32 %v289, 16
      %v441 = vor.u32 %v438, %v439
      %v442 = vsel %vm327, %v434, %v441
      %v443 = vrot.slane %v438, 4
      %v445 = vshrl.u32 %v290, 16
      %v447 = vrot.slane %v445, 7
      %v448 = vshll.u32 %v290, 16
      %v450 = vor.u32 %v447, %v448
      %v451 = vsel %vm327, %v443, %v450
      %v452 = vrot.slane %v447, 4
      %v454 = vshrl.u32 %v291, 16
      %v456 = vrot.slane %v454, 7
      %v457 = vshll.u32 %v291, 16
      %v459 = vor.u32 %v456, %v457
      %v460 = vsel %vm327, %v452, %v459
      %v461 = vrot.slane %v456, 4
      %v463 = vshrl.u32 %v292, 16
      %v465 = vrot.slane %v463, 7
      %v466 = vshll.u32 %v292, 16
      %v468 = vor.u32 %v465, %v466
      %v469 = vsel %vm327, %v461, %v468
      %v470 = vrot.slane %v465, 4
      %v472 = vshrl.u32 %v293, 16
      %v474 = vrot.slane %v472, 7
      %v475 = vshll.u32 %v293, 16
      %v477 = vor.u32 %v474, %v475
      %v478 = vsel %vm327, %v470, %v477
      %v479 = vrot.slane %v474, 4
      %v481 = vshrl.u32 %v294, 16
      %v483 = vrot.slane %v481, 7
      %v484 = vshll.u32 %v294, 16
      %v486 = vor.u32 %v483, %v484
      %v487 = vsel %vm327, %v479, %v486
      %v488 = vrot.slane %v483, 4
      %v490 = vshrl.u32 %v295, 16
      %v492 = vrot.slane %v490, 7
      %v493 = vshll.u32 %v295, 16
      %v495 = vor.u32 %v492, %v493
      %v496 = vsel %vm327, %v488, %v495
      %v497 = vrot.slane %v492, 4
      %v499 = vshrl.u32 %v296, 16
      %v501 = vrot.slane %v499, 7
      %v502 = vshll.u32 %v296, 16
      %v504 = vor.u32 %v501, %v502
      %v505 = vsel %vm327, %v497, %v504
      %v506 = vrot.slane %v501, 4
      %v508 = vshrl.u32 %v297, 16
      %v510 = vrot.slane %v508, 7
      %v511 = vshll.u32 %v297, 16
      %v513 = vor.u32 %v510, %v511
      %v514 = vsel %vm327, %v506, %v513
      %v515 = vrot.slane %v510, 4
      %v517 = vshrl.u32 %v298, 16
      %v519 = vrot.slane %v517, 7
      %v520 = vshll.u32 %v298, 16
      %v522 = vor.u32 %v519, %v520
      %v523 = vsel %vm327, %v515, %v522
      %v524 = vrot.slane %v519, 4
      %v526 = vshrl.u32 %v299, 16
      %v528 = vrot.slane %v526, 7
      %v529 = vshll.u32 %v299, 16
      %v531 = vor.u32 %v528, %v529
      %v532 = vsel %vm327, %v524, %v531
      %v533 = vrot.slane %v528, 4
      %v535 = vshrl.u32 %v300, 16
      %v537 = vrot.slane %v535, 7
      %v538 = vshll.u32 %v300, 16
      %v540 = vor.u32 %v537, %v538
      %v541 = vsel %vm327, %v533, %v540
      %v542 = vrot.slane %v537, 4
      %v544 = vshrl.u32 %v301, 16
      %v546 = vrot.slane %v544, 7
      %v547 = vshll.u32 %v301, 16
      %v549 = vor.u32 %v546, %v547
      %v550 = vsel %vm327, %v542, %v549
      %v551 = vrot.slane %v546, 4
      %v553 = vshrl.u32 %v302, 16
      %v555 = vrot.slane %v553, 7
      %v556 = vshll.u32 %v302, 16
      %v558 = vor.u32 %v555, %v556
      %v559 = vsel %vm327, %v551, %v558
      %v560 = vrot.slane %v555, 4
      %v562 = vshrl.u32 %v303, 16
      %v564 = vrot.slane %v562, 7
      %v565 = vshll.u32 %v303, 16
      %v567 = vor.u32 %v564, %v565
      %v568 = vsel %vm327, %v560, %v567
      %v569 = vrot.slane %v564, 4
      %v571 = vshrl.u32 %v304, 16
      %v573 = vrot.slane %v571, 7
      %v574 = vshll.u32 %v304, 16
      %v576 = vor.u32 %v573, %v574
      %v577 = vsel %vm327, %v569, %v576
      %v578 = vrot.slane %v573, 4
      %v580 = vshrl.u32 %v305, 16
      %v582 = vrot.slane %v580, 7
      %v583 = vshll.u32 %v305, 16
      %v585 = vor.u32 %v582, %v583
      %v586 = vsel %vm327, %v578, %v585
      %v587 = vrot.slane %v582, 4
      %v589 = vshrl.u32 %v306, 16
      %v591 = vrot.slane %v589, 7
      %v592 = vshll.u32 %v306, 16
      %v594 = vor.u32 %v591, %v592
      %v595 = vsel %vm327, %v587, %v594
      %v596 = vrot.slane %v591, 4
      %v598 = vshrl.u32 %v307, 16
      %v600 = vrot.slane %v598, 7
      %v601 = vshll.u32 %v307, 16
      %v603 = vor.u32 %v600, %v601
      %v604 = vsel %vm327, %v596, %v603
      %v605 = vrot.slane %v600, 4
      %v607 = vshrl.u32 %v308, 16
      %v609 = vrot.slane %v607, 7
      %v610 = vshll.u32 %v308, 16
      %v612 = vor.u32 %v609, %v610
      %v613 = vsel %vm327, %v605, %v612
      %v614 = vrot.slane %v609, 4
      %v616 = vshrl.u32 %v309, 16
      %v618 = vrot.slane %v616, 7
      %v619 = vshll.u32 %v309, 16
      %v621 = vor.u32 %v618, %v619
      %v622 = vsel %vm327, %v614, %v621
      %v623 = vrot.slane %v618, 4
      %v625 = vshrl.u32 %v310, 16
      %v627 = vrot.slane %v625, 7
      %v628 = vshll.u32 %v310, 16
      %v630 = vor.u32 %v627, %v628
      %v631 = vsel %vm327, %v623, %v630
      %v632 = vrot.slane %v627, 4
      %v634 = vshrl.u32 %v311, 16
      %v636 = vrot.slane %v634, 7
      %v637 = vshll.u32 %v311, 16
      %v639 = vor.u32 %v636, %v637
      %v640 = vsel %vm327, %v632, %v639
      %v641 = vrot.slane %v636, 4
      %v643 = vshrl.u32 %v312, 16
      %v645 = vrot.slane %v643, 7
      %v646 = vshll.u32 %v312, 16
      %v648 = vor.u32 %v645, %v646
      %v649 = vsel %vm327, %v641, %v648
      %v650 = vrot.slane %v645, 4
      %v652 = vshrl.u32 %v313, 16
      %v654 = vrot.slane %v652, 7
      %v655 = vshll.u32 %v313, 16
      %v657 = vor.u32 %v654, %v655
      %v658 = vsel %vm327, %v650, %v657
      %v659 = vrot.slane %v654, 4
      %v661 = vshrl.u32 %v314, 16
      %v663 = vrot.slane %v661, 7
      %v664 = vshll.u32 %v314, 16
      %v666 = vor.u32 %v663, %v664
      %v667 = vsel %vm327, %v659, %v666
      %v668 = vrot.slane %v663, 4
      %v670 = vshrl.u32 %v315, 16
      %v672 = vrot.slane %v670, 7
      %v673 = vshll.u32 %v315, 16
      %v675 = vor.u32 %v672, %v673
      %v676 = vsel %vm327, %v668, %v675
      %v677 = vrot.slane %v672, 4
      %v679 = vshrl.u32 %v316, 16
      %v681 = vrot.slane %v679, 7
      %v682 = vshll.u32 %v316, 16
      %v684 = vor.u32 %v681, %v682
      %v685 = vsel %vm327, %v677, %v684
      %v686 = vrot.slane %v681, 4
      %v688 = vshrl.u32 %v317, 16
      %v690 = vrot.slane %v688, 7
      %v691 = vshll.u32 %v317, 16
      %v693 = vor.u32 %v690, %v691
      %v694 = vsel %vm327, %v686, %v693
      %v695 = vrot.slane %v690, 4
      %v697 = vshrl.u32 %v318, 16
      %v699 = vrot.slane %v697, 7
      %v700 = vshll.u32 %v318, 16
      %v702 = vor.u32 %v699, %v700
      %v703 = vsel %vm327, %v695, %v702
      %v704 = vrot.slane %v699, 4
      %v706 = vshrl.u32 %v319, 16
      %v708 = vrot.slane %v706, 7
      %v709 = vshll.u32 %v319, 16
      %v711 = vor.u32 %v708, %v709
      %v712 = vsel %vm327, %v704, %v711
      %v756 = vsel %vm324, %v323, %v334
      %v757 = vsel %vm324, %v234, %v343
      %v758 = vsel %vm324, %v235, %v352
      %v759 = vsel %vm324, %v236, %v361
      %v760 = vsel %vm324, %v237, %v370
      %v761 = vsel %vm324, %v238, %v379
      %v762 = vsel %vm324, %v239, %v388
      %v763 = vsel %vm324, %v240, %v397
      %v764 = vsel %vm324, %v241, %v406
      %v765 = vsel %vm324, %v242, %v415
      %v766 = vsel %vm324, %v243, %v424
      %v767 = vsel %vm324, %v244, %v433
      %v768 = vsel %vm324, %v245, %v442
      %v769 = vsel %vm324, %v246, %v451
      %v770 = vsel %vm324, %v247, %v460
      %v771 = vsel %vm324, %v248, %v469
      %v772 = vsel %vm324, %v249, %v478
      %v773 = vsel %vm324, %v250, %v487
      %v774 = vsel %vm324, %v251, %v496
      %v775 = vsel %vm324, %v252, %v505
      %v776 = vsel %vm324, %v253, %v514
      %v777 = vsel %vm324, %v254, %v523
      %v778 = vsel %vm324, %v255, %v532
      %v779 = vsel %vm324, %v256, %v541
      %v780 = vsel %vm324, %v257, %v550
      %v781 = vsel %vm324, %v258, %v559
      %v782 = vsel %vm324, %v259, %v568
      %v783 = vsel %vm324, %v260, %v577
      %v784 = vsel %vm324, %v261, %v586
      %v785 = vsel %vm324, %v262, %v595
      %v786 = vsel %vm324, %v263, %v604
      %v787 = vsel %vm324, %v264, %v613
      %v788 = vsel %vm324, %v265, %v622
      %v789 = vsel %vm324, %v266, %v631
      %v790 = vsel %vm324, %v267, %v640
      %v791 = vsel %vm324, %v268, %v649
      %v792 = vsel %vm324, %v269, %v658
      %v793 = vsel %vm324, %v270, %v667
      %v794 = vsel %vm324, %v271, %v676
      %v795 = vsel %vm324, %v272, %v685
      %v796 = vsel %vm324, %v273, %v694
      %v797 = vsel %vm324, %v274, %v703
      %v798 = vsel %vm324, %v275, %v712
      %vm799 = vcmp.ge.s32.totalorder %v229, 16
      %vm800 = vcmp.lt.s32.totalorder %v229, 24
      %vm801 = vmand %vm799, %vm800
      %v802 = vld [vmem:[%s219 + $0xac] sm:$0xf]
      %vm803 = vmpackc.low %vm801, %vm801
      %v805 = vshll.u32 %v756, 16
      %v807 = vshrl.u32 %v756, 16
      %v809 = vrot.slane %v807, 7
      %v810 = vrot.slane %v809, 4
      %v812 = vshrl.u32 %v757, 16
      %v814 = vrot.slane %v812, 7
      %v815 = vshll.u32 %v757, 16
      %v817 = vor.u32 %v814, %v815
      %v818 = vsel %vm327, %v810, %v817
      %v819 = vrot.slane %v814, 4
      %v821 = vshrl.u32 %v758, 16
      %v823 = vrot.slane %v821, 7
      %v824 = vshll.u32 %v758, 16
      %v826 = vor.u32 %v823, %v824
      %v827 = vsel %vm327, %v819, %v826
      %v828 = vrot.slane %v823, 4
      %v830 = vshrl.u32 %v759, 16
      %v832 = vrot.slane %v830, 7
      %v833 = vshll.u32 %v759, 16
      %v835 = vor.u32 %v832, %v833
      %v836 = vsel %vm327, %v828, %v835
      %v837 = vrot.slane %v832, 4
      %v839 = vshrl.u32 %v760, 16
      %v841 = vrot.slane %v839, 7
      %v842 = vshll.u32 %v760, 16
      %v844 = vor.u32 %v841, %v842
      %v845 = vsel %vm327, %v837, %v844
      %v846 = vrot.slane %v841, 4
      %v848 = vshrl.u32 %v761, 16
      %v850 = vrot.slane %v848, 7
      %v851 = vshll.u32 %v761, 16
      %v853 = vor.u32 %v850, %v851
      %v854 = vsel %vm327, %v846, %v853
      %v855 = vrot.slane %v850, 4
      %v857 = vshrl.u32 %v762, 16
      %v859 = vrot.slane %v857, 7
      %v860 = vshll.u32 %v762, 16
      %v862 = vor.u32 %v859, %v860
      %v863 = vsel %vm327, %v855, %v862
      %v864 = vrot.slane %v859, 4
      %v866 = vshrl.u32 %v763, 16
      %v868 = vrot.slane %v866, 7
      %v869 = vshll.u32 %v763, 16
      %v871 = vor.u32 %v868, %v869
      %v872 = vsel %vm327, %v864, %v871
      %v873 = vrot.slane %v868, 4
      %v875 = vshrl.u32 %v764, 16
      %v877 = vrot.slane %v875, 7
      %v878 = vshll.u32 %v764, 16
      %v880 = vor.u32 %v877, %v878
      %v881 = vsel %vm327, %v873, %v880
      %v882 = vrot.slane %v877, 4
      %v884 = vshrl.u32 %v765, 16
      %v886 = vrot.slane %v884, 7
      %v887 = vshll.u32 %v765, 16
      %v889 = vor.u32 %v886, %v887
      %v890 = vsel %vm327, %v882, %v889
      %v891 = vrot.slane %v886, 4
      %v893 = vshrl.u32 %v766, 16
      %v895 = vrot.slane %v893, 7
      %v896 = vshll.u32 %v766, 16
      %v898 = vor.u32 %v895, %v896
      %v899 = vsel %vm327, %v891, %v898
      %v900 = vrot.slane %v895, 4
      %v902 = vshrl.u32 %v767, 16
      %v904 = vrot.slane %v902, 7
      %v905 = vshll.u32 %v767, 16
      %v907 = vor.u32 %v904, %v905
      %v908 = vsel %vm327, %v900, %v907
      %v909 = vrot.slane %v904, 4
      %v911 = vshrl.u32 %v768, 16
      %v913 = vrot.slane %v911, 7
      %v914 = vshll.u32 %v768, 16
      %v916 = vor.u32 %v913, %v914
      %v917 = vsel %vm327, %v909, %v916
      %v918 = vrot.slane %v913, 4
      %v920 = vshrl.u32 %v769, 16
      %v922 = vrot.slane %v920, 7
      %v923 = vshll.u32 %v769, 16
      %v925 = vor.u32 %v922, %v923
      %v926 = vsel %vm327, %v918, %v925
      %v927 = vrot.slane %v922, 4
      %v929 = vshrl.u32 %v770, 16
      %v931 = vrot.slane %v929, 7
      %v932 = vshll.u32 %v770, 16
      %v934 = vor.u32 %v931, %v932
      %v935 = vsel %vm327, %v927, %v934
      %v936 = vrot.slane %v931, 4
      %v938 = vshrl.u32 %v771, 16
      %v940 = vrot.slane %v938, 7
      %v941 = vshll.u32 %v771, 16
      %v943 = vor.u32 %v940, %v941
      %v944 = vsel %vm327, %v936, %v943
      %v945 = vrot.slane %v940, 4
      %v947 = vshrl.u32 %v772, 16
      %v949 = vrot.slane %v947, 7
      %v950 = vshll.u32 %v772, 16
      %v952 = vor.u32 %v949, %v950
      %v953 = vsel %vm327, %v945, %v952
      %v954 = vrot.slane %v949, 4
      %v956 = vshrl.u32 %v773, 16
      %v958 = vrot.slane %v956, 7
      %v959 = vshll.u32 %v773, 16
      %v961 = vor.u32 %v958, %v959
      %v962 = vsel %vm327, %v954, %v961
      %v963 = vrot.slane %v958, 4
      %v965 = vshrl.u32 %v774, 16
      %v967 = vrot.slane %v965, 7
      %v968 = vshll.u32 %v774, 16
      %v970 = vor.u32 %v967, %v968
      %v971 = vsel %vm327, %v963, %v970
      %v972 = vrot.slane %v967, 4
      %v974 = vshrl.u32 %v775, 16
      %v976 = vrot.slane %v974, 7
      %v977 = vshll.u32 %v775, 16
      %v979 = vor.u32 %v976, %v977
      %v980 = vsel %vm327, %v972, %v979
      %v981 = vrot.slane %v976, 4
      %v983 = vshrl.u32 %v776, 16
      %v985 = vrot.slane %v983, 7
      %v986 = vshll.u32 %v776, 16
      %v988 = vor.u32 %v985, %v986
      %v989 = vsel %vm327, %v981, %v988
      %v990 = vrot.slane %v985, 4
      %v992 = vshrl.u32 %v777, 16
      %v994 = vrot.slane %v992, 7
      %v995 = vshll.u32 %v777, 16
      %v997 = vor.u32 %v994, %v995
      %v998 = vsel %vm327, %v990, %v997
      %v999 = vrot.slane %v994, 4
      %v1001 = vshrl.u32 %v778, 16
      %v1003 = vrot.slane %v1001, 7
      %v1004 = vshll.u32 %v778, 16
      %v1006 = vor.u32 %v1003, %v1004
      %v1007 = vsel %vm327, %v999, %v1006
      %v1008 = vrot.slane %v1003, 4
      %v1010 = vshrl.u32 %v779, 16
      %v1012 = vrot.slane %v1010, 7
      %v1013 = vshll.u32 %v779, 16
      %v1015 = vor.u32 %v1012, %v1013
      %v1016 = vsel %vm327, %v1008, %v1015
      %v1017 = vrot.slane %v1012, 4
      %v1019 = vshrl.u32 %v780, 16
      %v1021 = vrot.slane %v1019, 7
      %v1022 = vshll.u32 %v780, 16
      %v1024 = vor.u32 %v1021, %v1022
      %v1025 = vsel %vm327, %v1017, %v1024
      %v1026 = vrot.slane %v1021, 4
      %v1028 = vshrl.u32 %v781, 16
      %v1030 = vrot.slane %v1028, 7
      %v1031 = vshll.u32 %v781, 16
      %v1033 = vor.u32 %v1030, %v1031
      %v1034 = vsel %vm327, %v1026, %v1033
      %v1035 = vrot.slane %v1030, 4
      %v1037 = vshrl.u32 %v782, 16
      %v1039 = vrot.slane %v1037, 7
      %v1040 = vshll.u32 %v782, 16
      %v1042 = vor.u32 %v1039, %v1040
      %v1043 = vsel %vm327, %v1035, %v1042
      %v1044 = vrot.slane %v1039, 4
      %v1046 = vshrl.u32 %v783, 16
      %v1048 = vrot.slane %v1046, 7
      %v1049 = vshll.u32 %v783, 16
      %v1051 = vor.u32 %v1048, %v1049
      %v1052 = vsel %vm327, %v1044, %v1051
      %v1053 = vrot.slane %v1048, 4
      %v1055 = vshrl.u32 %v784, 16
      %v1057 = vrot.slane %v1055, 7
      %v1058 = vshll.u32 %v784, 16
      %v1060 = vor.u32 %v1057, %v1058
      %v1061 = vsel %vm327, %v1053, %v1060
      %v1062 = vrot.slane %v1057, 4
      %v1064 = vshrl.u32 %v785, 16
      %v1066 = vrot.slane %v1064, 7
      %v1067 = vshll.u32 %v785, 16
      %v1069 = vor.u32 %v1066, %v1067
      %v1070 = vsel %vm327, %v1062, %v1069
      %v1071 = vrot.slane %v1066, 4
      %v1073 = vshrl.u32 %v786, 16
      %v1075 = vrot.slane %v1073, 7
      %v1076 = vshll.u32 %v786, 16
      %v1078 = vor.u32 %v1075, %v1076
      %v1079 = vsel %vm327, %v1071, %v1078
      %v1080 = vrot.slane %v1075, 4
      %v1082 = vshrl.u32 %v787, 16
      %v1084 = vrot.slane %v1082, 7
      %v1085 = vshll.u32 %v787, 16
      %v1087 = vor.u32 %v1084, %v1085
      %v1088 = vsel %vm327, %v1080, %v1087
      %v1089 = vrot.slane %v1084, 4
      %v1091 = vshrl.u32 %v788, 16
      %v1093 = vrot.slane %v1091, 7
      %v1094 = vshll.u32 %v788, 16
      %v1096 = vor.u32 %v1093, %v1094
      %v1097 = vsel %vm327, %v1089, %v1096
      %v1098 = vrot.slane %v1093, 4
      %v1100 = vshrl.u32 %v789, 16
      %v1102 = vrot.slane %v1100, 7
      %v1103 = vshll.u32 %v789, 16
      %v1105 = vor.u32 %v1102, %v1103
      %v1106 = vsel %vm327, %v1098, %v1105
      %v1107 = vrot.slane %v1102, 4
      %v1109 = vshrl.u32 %v790, 16
      %v1111 = vrot.slane %v1109, 7
      %v1112 = vshll.u32 %v790, 16
      %v1114 = vor.u32 %v1111, %v1112
      %v1115 = vsel %vm327, %v1107, %v1114
      %v1116 = vrot.slane %v1111, 4
      %v1118 = vshrl.u32 %v791, 16
      %v1120 = vrot.slane %v1118, 7
      %v1121 = vshll.u32 %v791, 16
      %v1123 = vor.u32 %v1120, %v1121
      %v1124 = vsel %vm327, %v1116, %v1123
      %v1125 = vrot.slane %v1120, 4
      %v1127 = vshrl.u32 %v792, 16
      %v1129 = vrot.slane %v1127, 7
      %v1130 = vshll.u32 %v792, 16
      %v1132 = vor.u32 %v1129, %v1130
      %v1133 = vsel %vm327, %v1125, %v1132
      %v1134 = vrot.slane %v1129, 4
      %v1136 = vshrl.u32 %v793, 16
      %v1138 = vrot.slane %v1136, 7
      %v1139 = vshll.u32 %v793, 16
      %v1141 = vor.u32 %v1138, %v1139
      %v1142 = vsel %vm327, %v1134, %v1141
      %v1143 = vrot.slane %v1138, 4
      %v1145 = vshrl.u32 %v794, 16
      %v1147 = vrot.slane %v1145, 7
      %v1148 = vshll.u32 %v794, 16
      %v1150 = vor.u32 %v1147, %v1148
      %v1151 = vsel %vm327, %v1143, %v1150
      %v1152 = vrot.slane %v1147, 4
      %v1154 = vshrl.u32 %v795, 16
      %v1156 = vrot.slane %v1154, 7
      %v1157 = vshll.u32 %v795, 16
      %v1159 = vor.u32 %v1156, %v1157
      %v1160 = vsel %vm327, %v1152, %v1159
      %v1161 = vrot.slane %v1156, 4
      %v1163 = vshrl.u32 %v796, 16
      %v1165 = vrot.slane %v1163, 7
      %v1166 = vshll.u32 %v796, 16
      %v1168 = vor.u32 %v1165, %v1166
      %v1169 = vsel %vm327, %v1161, %v1168
      %v1170 = vrot.slane %v1165, 4
      %v1172 = vshrl.u32 %v797, 16
      %v1174 = vrot.slane %v1172, 7
      %v1175 = vshll.u32 %v797, 16
      %v1177 = vor.u32 %v1174, %v1175
      %v1178 = vsel %vm327, %v1170, %v1177
      %v1179 = vrot.slane %v1174, 4
      %v1181 = vshrl.u32 %v798, 16
      %v1183 = vrot.slane %v1181, 7
      %v1184 = vshll.u32 %v798, 16
      %v1186 = vor.u32 %v1183, %v1184
      %v1187 = vsel %vm327, %v1179, %v1186
      %v1231 = vsel %vm803, %v323, %v805
      %v1232 = vsel %vm803, %v234, %v818
      %v1233 = vsel %vm803, %v235, %v827
      %v1234 = vsel %vm803, %v236, %v836
      %v1235 = vsel %vm803, %v237, %v845
      %v1236 = vsel %vm803, %v238, %v854
      %v1237 = vsel %vm803, %v239, %v863
      %v1238 = vsel %vm803, %v240, %v872
      %v1239 = vsel %vm803, %v241, %v881
      %v1240 = vsel %vm803, %v242, %v890
      %v1241 = vsel %vm803, %v243, %v899
      %v1242 = vsel %vm803, %v244, %v908
      %v1243 = vsel %vm803, %v245, %v917
      %v1244 = vsel %vm803, %v246, %v926
      %v1245 = vsel %vm803, %v247, %v935
      %v1246 = vsel %vm803, %v248, %v944
      %v1247 = vsel %vm803, %v249, %v953
      %v1248 = vsel %vm803, %v250, %v962
      %v1249 = vsel %vm803, %v251, %v971
      %v1250 = vsel %vm803, %v252, %v980
      %v1251 = vsel %vm803, %v253, %v989
      %v1252 = vsel %vm803, %v254, %v998
      %v1253 = vsel %vm803, %v255, %v1007
      %v1254 = vsel %vm803, %v256, %v1016
      %v1255 = vsel %vm803, %v257, %v1025
      %v1256 = vsel %vm803, %v258, %v1034
      %v1257 = vsel %vm803, %v259, %v1043
      %v1258 = vsel %vm803, %v260, %v1052
      %v1259 = vsel %vm803, %v261, %v1061
      %v1260 = vsel %vm803, %v262, %v1070
      %v1261 = vsel %vm803, %v263, %v1079
      %v1262 = vsel %vm803, %v264, %v1088
      %v1263 = vsel %vm803, %v265, %v1097
      %v1264 = vsel %vm803, %v266, %v1106
      %v1265 = vsel %vm803, %v267, %v1115
      %v1266 = vsel %vm803, %v268, %v1124
      %v1267 = vsel %vm803, %v269, %v1133
      %v1268 = vsel %vm803, %v270, %v1142
      %v1269 = vsel %vm803, %v271, %v1151
      %v1270 = vsel %vm803, %v272, %v1160
      %v1271 = vsel %vm803, %v273, %v1169
      %v1272 = vsel %vm803, %v274, %v1178
      %v1273 = vsel %vm803, %v802, %v1187
      %vm1274 = vcmp.ge.s32.totalorder %v229, 24
      %vm1275 = vcmp.lt.s32.totalorder %v229, 32
      %vm1276 = vmand %vm1274, %vm1275
      %v1277 = vld [vmem:[%s219 + $0xc] sm:$0x8]
      %v1278 = vld [vmem:[%s219 + $0xb0] sm:$0xf]
      %v1279 = vld [vmem:[%s219 + $0xb4] sm:$0xf]
      %vm1280 = vmpackc.low %vm1276, %vm1276
      %v1281 = vsel %vm1280, %v1277, %v1231
      %v1282 = vsel %vm1280, %v236, %v1232
      %v1283 = vsel %vm1280, %v237, %v1233
      %v1284 = vsel %vm1280, %v238, %v1234
      %v1285 = vsel %vm1280, %v239, %v1235
      %v1286 = vsel %vm1280, %v240, %v1236
      %v1287 = vsel %vm1280, %v241, %v1237
      %v1288 = vsel %vm1280, %v242, %v1238
      %v1289 = vsel %vm1280, %v243, %v1239
      %v1290 = vsel %vm1280, %v244, %v1240
      %v1291 = vsel %vm1280, %v245, %v1241
      %v1292 = vsel %vm1280, %v246, %v1242
      %v1293 = vsel %vm1280, %v247, %v1243
      %v1294 = vsel %vm1280, %v248, %v1244
      %v1295 = vsel %vm1280, %v249, %v1245
      %v1296 = vsel %vm1280, %v250, %v1246
      %v1297 = vsel %vm1280, %v251, %v1247
      %v1298 = vsel %vm1280, %v252, %v1248
      %v1299 = vsel %vm1280, %v253, %v1249
      %v1300 = vsel %vm1280, %v254, %v1250
      %v1301 = vsel %vm1280, %v255, %v1251
      %v1302 = vsel %vm1280, %v256, %v1252
      %v1303 = vsel %vm1280, %v257, %v1253
      %v1304 = vsel %vm1280, %v258, %v1254
      %v1305 = vsel %vm1280, %v259, %v1255
      %v1306 = vsel %vm1280, %v260, %v1256
      %v1307 = vsel %vm1280, %v261, %v1257
      %v1308 = vsel %vm1280, %v262, %v1258
      %v1309 = vsel %vm1280, %v263, %v1259
      %v1310 = vsel %vm1280, %v264, %v1260
      %v1311 = vsel %vm1280, %v265, %v1261
      %v1312 = vsel %vm1280, %v266, %v1262
      %v1313 = vsel %vm1280, %v267, %v1263
      %v1314 = vsel %vm1280, %v268, %v1264
      %v1315 = vsel %vm1280, %v269, %v1265
      %v1316 = vsel %vm1280, %v270, %v1266
      %v1317 = vsel %vm1280, %v271, %v1267
      %v1318 = vsel %vm1280, %v272, %v1268
      %v1319 = vsel %vm1280, %v273, %v1269
      %v1320 = vsel %vm1280, %v274, %v1270
      %v1321 = vsel %vm1280, %v802, %v1271
      %v1322 = vsel %vm1280, %v1278, %v1272
      %v1323 = vsel %vm1280, %v1279, %v1273
      %vm1324 = vcmp.ge.s32.totalorder %v229, 32
      %vm1325 = vcmp.lt.s32.totalorder %v229, 40
      %vm1326 = vmand %vm1324, %vm1325
      %vm1327 = vmpackc.low %vm1326, %vm1326
      %v1329 = vshrl.u32 %v1281, 16
      %v1331 = vrot.slane %v1329, 7
      %v1332 = vrot.slane %v1331, 4
      %v1334 = vshrl.u32 %v1282, 16
      %v1336 = vrot.slane %v1334, 7
      %v1337 = vshll.u32 %v1282, 16
      %v1339 = vor.u32 %v1336, %v1337
      %v1340 = vsel %vm327, %v1332, %v1339
      %v1341 = vrot.slane %v1336, 4
      %v1343 = vshrl.u32 %v1283, 16
      %v1345 = vrot.slane %v1343, 7
      %v1346 = vshll.u32 %v1283, 16
      %v1348 = vor.u32 %v1345, %v1346
      %v1349 = vsel %vm327, %v1341, %v1348
      %v1350 = vrot.slane %v1345, 4
      %v1352 = vshrl.u32 %v1284, 16
      %v1354 = vrot.slane %v1352, 7
      %v1355 = vshll.u32 %v1284, 16
      %v1357 = vor.u32 %v1354, %v1355
      %v1358 = vsel %vm327, %v1350, %v1357
      %v1359 = vrot.slane %v1354, 4
      %v1361 = vshrl.u32 %v1285, 16
      %v1363 = vrot.slane %v1361, 7
      %v1364 = vshll.u32 %v1285, 16
      %v1366 = vor.u32 %v1363, %v1364
      %v1367 = vsel %vm327, %v1359, %v1366
      %v1368 = vrot.slane %v1363, 4
      %v1370 = vshrl.u32 %v1286, 16
      %v1372 = vrot.slane %v1370, 7
      %v1373 = vshll.u32 %v1286, 16
      %v1375 = vor.u32 %v1372, %v1373
      %v1376 = vsel %vm327, %v1368, %v1375
      %v1377 = vrot.slane %v1372, 4
      %v1379 = vshrl.u32 %v1287, 16
      %v1381 = vrot.slane %v1379, 7
      %v1382 = vshll.u32 %v1287, 16
      %v1384 = vor.u32 %v1381, %v1382
      %v1385 = vsel %vm327, %v1377, %v1384
      %v1386 = vrot.slane %v1381, 4
      %v1388 = vshrl.u32 %v1288, 16
      %v1390 = vrot.slane %v1388, 7
      %v1391 = vshll.u32 %v1288, 16
      %v1393 = vor.u32 %v1390, %v1391
      %v1394 = vsel %vm327, %v1386, %v1393
      %v1395 = vrot.slane %v1390, 4
      %v1397 = vshrl.u32 %v1289, 16
      %v1399 = vrot.slane %v1397, 7
      %v1400 = vshll.u32 %v1289, 16
      %v1402 = vor.u32 %v1399, %v1400
      %v1403 = vsel %vm327, %v1395, %v1402
      %v1404 = vrot.slane %v1399, 4
      %v1406 = vshrl.u32 %v1290, 16
      %v1408 = vrot.slane %v1406, 7
      %v1409 = vshll.u32 %v1290, 16
      %v1411 = vor.u32 %v1408, %v1409
      %v1412 = vsel %vm327, %v1404, %v1411
      %v1413 = vrot.slane %v1408, 4
      %v1415 = vshrl.u32 %v1291, 16
      %v1417 = vrot.slane %v1415, 7
      %v1418 = vshll.u32 %v1291, 16
      %v1420 = vor.u32 %v1417, %v1418
      %v1421 = vsel %vm327, %v1413, %v1420
      %v1422 = vrot.slane %v1417, 4
      %v1424 = vshrl.u32 %v1292, 16
      %v1426 = vrot.slane %v1424, 7
      %v1427 = vshll.u32 %v1292, 16
      %v1429 = vor.u32 %v1426, %v1427
      %v1430 = vsel %vm327, %v1422, %v1429
      %v1431 = vrot.slane %v1426, 4
      %v1433 = vshrl.u32 %v1293, 16
      %v1435 = vrot.slane %v1433, 7
      %v1436 = vshll.u32 %v1293, 16
      %v1438 = vor.u32 %v1435, %v1436
      %v1439 = vsel %vm327, %v1431, %v1438
      %v1440 = vrot.slane %v1435, 4
      %v1442 = vshrl.u32 %v1294, 16
      %v1444 = vrot.slane %v1442, 7
      %v1445 = vshll.u32 %v1294, 16
      %v1447 = vor.u32 %v1444, %v1445
      %v1448 = vsel %vm327, %v1440, %v1447
      %v1449 = vrot.slane %v1444, 4
      %v1451 = vshrl.u32 %v1295, 16
      %v1453 = vrot.slane %v1451, 7
      %v1454 = vshll.u32 %v1295, 16
      %v1456 = vor.u32 %v1453, %v1454
      %v1457 = vsel %vm327, %v1449, %v1456
      %v1458 = vrot.slane %v1453, 4
      %v1460 = vshrl.u32 %v1296, 16
      %v1462 = vrot.slane %v1460, 7
      %v1463 = vshll.u32 %v1296, 16
      %v1465 = vor.u32 %v1462, %v1463
      %v1466 = vsel %vm327, %v1458, %v1465
      %v1467 = vrot.slane %v1462, 4
      %v1469 = vshrl.u32 %v1297, 16
      %v1471 = vrot.slane %v1469, 7
      %v1472 = vshll.u32 %v1297, 16
      %v1474 = vor.u32 %v1471, %v1472
      %v1475 = vsel %vm327, %v1467, %v1474
      %v1476 = vrot.slane %v1471, 4
      %v1478 = vshrl.u32 %v1298, 16
      %v1480 = vrot.slane %v1478, 7
      %v1481 = vshll.u32 %v1298, 16
      %v1483 = vor.u32 %v1480, %v1481
      %v1484 = vsel %vm327, %v1476, %v1483
      %v1485 = vrot.slane %v1480, 4
      %v1487 = vshrl.u32 %v1299, 16
      %v1489 = vrot.slane %v1487, 7
      %v1490 = vshll.u32 %v1299, 16
      %v1492 = vor.u32 %v1489, %v1490
      %v1493 = vsel %vm327, %v1485, %v1492
      %v1494 = vrot.slane %v1489, 4
      %v1496 = vshrl.u32 %v1300, 16
      %v1498 = vrot.slane %v1496, 7
      %v1499 = vshll.u32 %v1300, 16
      %v1501 = vor.u32 %v1498, %v1499
      %v1502 = vsel %vm327, %v1494, %v1501
      %v1503 = vrot.slane %v1498, 4
      %v1505 = vshrl.u32 %v1301, 16
      %v1507 = vrot.slane %v1505, 7
      %v1508 = vshll.u32 %v1301, 16
      %v1510 = vor.u32 %v1507, %v1508
      %v1511 = vsel %vm327, %v1503, %v1510
      %v1512 = vrot.slane %v1507, 4
      %v1514 = vshrl.u32 %v1302, 16
      %v1516 = vrot.slane %v1514, 7
      %v1517 = vshll.u32 %v1302, 16
      %v1519 = vor.u32 %v1516, %v1517
      %v1520 = vsel %vm327, %v1512, %v1519
      %v1521 = vrot.slane %v1516, 4
      %v1523 = vshrl.u32 %v1303, 16
      %v1525 = vrot.slane %v1523, 7
      %v1526 = vshll.u32 %v1303, 16
      %v1528 = vor.u32 %v1525, %v1526
      %v1529 = vsel %vm327, %v1521, %v1528
      %v1530 = vrot.slane %v1525, 4
      %v1532 = vshrl.u32 %v1304, 16
      %v1534 = vrot.slane %v1532, 7
      %v1535 = vshll.u32 %v1304, 16
      %v1537 = vor.u32 %v1534, %v1535
      %v1538 = vsel %vm327, %v1530, %v1537
      %v1539 = vrot.slane %v1534, 4
      %v1541 = vshrl.u32 %v1305, 16
      %v1543 = vrot.slane %v1541, 7
      %v1544 = vshll.u32 %v1305, 16
      %v1546 = vor.u32 %v1543, %v1544
      %v1547 = vsel %vm327, %v1539, %v1546
      %v1548 = vrot.slane %v1543, 4
      %v1550 = vshrl.u32 %v1306, 16
      %v1552 = vrot.slane %v1550, 7
      %v1553 = vshll.u32 %v1306, 16
      %v1555 = vor.u32 %v1552, %v1553
      %v1556 = vsel %vm327, %v1548, %v1555
      %v1557 = vrot.slane %v1552, 4
      %v1559 = vshrl.u32 %v1307, 16
      %v1561 = vrot.slane %v1559, 7
      %v1562 = vshll.u32 %v1307, 16
      %v1564 = vor.u32 %v1561, %v1562
      %v1565 = vsel %vm327, %v1557, %v1564
      %v1566 = vrot.slane %v1561, 4
      %v1568 = vshrl.u32 %v1308, 16
      %v1570 = vrot.slane %v1568, 7
      %v1571 = vshll.u32 %v1308, 16
      %v1573 = vor.u32 %v1570, %v1571
      %v1574 = vsel %vm327, %v1566, %v1573
      %v1575 = vrot.slane %v1570, 4
      %v1577 = vshrl.u32 %v1309, 16
      %v1579 = vrot.slane %v1577, 7
      %v1580 = vshll.u32 %v1309, 16
      %v1582 = vor.u32 %v1579, %v1580
      %v1583 = vsel %vm327, %v1575, %v1582
      %v1584 = vrot.slane %v1579, 4
      %v1586 = vshrl.u32 %v1310, 16
      %v1588 = vrot.slane %v1586, 7
      %v1589 = vshll.u32 %v1310, 16
      %v1591 = vor.u32 %v1588, %v1589
      %v1592 = vsel %vm327, %v1584, %v1591
      %v1593 = vrot.slane %v1588, 4
      %v1595 = vshrl.u32 %v1311, 16
      %v1597 = vrot.slane %v1595, 7
      %v1598 = vshll.u32 %v1311, 16
      %v1600 = vor.u32 %v1597, %v1598
      %v1601 = vsel %vm327, %v1593, %v1600
      %v1602 = vrot.slane %v1597, 4
      %v1604 = vshrl.u32 %v1312, 16
      %v1606 = vrot.slane %v1604, 7
      %v1607 = vshll.u32 %v1312, 16
      %v1609 = vor.u32 %v1606, %v1607
      %v1610 = vsel %vm327, %v1602, %v1609
      %v1611 = vrot.slane %v1606, 4
      %v1613 = vshrl.u32 %v1313, 16
      %v1615 = vrot.slane %v1613, 7
      %v1616 = vshll.u32 %v1313, 16
      %v1618 = vor.u32 %v1615, %v1616
      %v1619 = vsel %vm327, %v1611, %v1618
      %v1620 = vrot.slane %v1615, 4
      %v1622 = vshrl.u32 %v1314, 16
      %v1624 = vrot.slane %v1622, 7
      %v1625 = vshll.u32 %v1314, 16
      %v1627 = vor.u32 %v1624, %v1625
      %v1628 = vsel %vm327, %v1620, %v1627
      %v1629 = vrot.slane %v1624, 4
      %v1631 = vshrl.u32 %v1315, 16
      %v1633 = vrot.slane %v1631, 7
      %v1634 = vshll.u32 %v1315, 16
      %v1636 = vor.u32 %v1633, %v1634
      %v1637 = vsel %vm327, %v1629, %v1636
      %v1638 = vrot.slane %v1633, 4
      %v1640 = vshrl.u32 %v1316, 16
      %v1642 = vrot.slane %v1640, 7
      %v1643 = vshll.u32 %v1316, 16
      %v1645 = vor.u32 %v1642, %v1643
      %v1646 = vsel %vm327, %v1638, %v1645
      %v1647 = vrot.slane %v1642, 4
      %v1649 = vshrl.u32 %v1317, 16
      %v1651 = vrot.slane %v1649, 7
      %v1652 = vshll.u32 %v1317, 16
      %v1654 = vor.u32 %v1651, %v1652
      %v1655 = vsel %vm327, %v1647, %v1654
      %v1656 = vrot.slane %v1651, 4
      %v1658 = vshrl.u32 %v1318, 16
      %v1660 = vrot.slane %v1658, 7
      %v1661 = vshll.u32 %v1318, 16
      %v1663 = vor.u32 %v1660, %v1661
      %v1664 = vsel %vm327, %v1656, %v1663
      %v1665 = vrot.slane %v1660, 4
      %v1667 = vshrl.u32 %v1319, 16
      %v1669 = vrot.slane %v1667, 7
      %v1670 = vshll.u32 %v1319, 16
      %v1672 = vor.u32 %v1669, %v1670
      %v1673 = vsel %vm327, %v1665, %v1672
      %v1674 = vrot.slane %v1669, 4
      %v1676 = vshrl.u32 %v1320, 16
      %v1678 = vrot.slane %v1676, 7
      %v1679 = vshll.u32 %v1320, 16
      %v1681 = vor.u32 %v1678, %v1679
      %v1682 = vsel %vm327, %v1674, %v1681
      %v1683 = vrot.slane %v1678, 4
      %v1685 = vshrl.u32 %v1321, 16
      %v1687 = vrot.slane %v1685, 7
      %v1688 = vshll.u32 %v1321, 16
      %v1690 = vor.u32 %v1687, %v1688
      %v1691 = vsel %vm327, %v1683, %v1690
      %v1692 = vrot.slane %v1687, 4
      %v1694 = vshrl.u32 %v1322, 16
      %v1696 = vrot.slane %v1694, 7
      %v1697 = vshll.u32 %v1322, 16
      %v1699 = vor.u32 %v1696, %v1697
      %v1700 = vsel %vm327, %v1692, %v1699
      %v1701 = vrot.slane %v1696, 4
      %v1703 = vshrl.u32 %v1323, 16
      %v1705 = vrot.slane %v1703, 7
      %v1706 = vshll.u32 %v1323, 16
      %v1708 = vor.u32 %v1705, %v1706
      %v1709 = vsel %vm327, %v1701, %v1708
      %v1752 = vsel %vm1327, %v236, %v1340
      %v1753 = vsel %vm1327, %v237, %v1349
      %v1754 = vsel %vm1327, %v238, %v1358
      %v1755 = vsel %vm1327, %v239, %v1367
      %v1756 = vsel %vm1327, %v240, %v1376
      %v1757 = vsel %vm1327, %v241, %v1385
      %v1758 = vsel %vm1327, %v242, %v1394
      %v1759 = vsel %vm1327, %v243, %v1403
      %v1760 = vsel %vm1327, %v244, %v1412
      %v1761 = vsel %vm1327, %v245, %v1421
      %v1762 = vsel %vm1327, %v246, %v1430
      %v1763 = vsel %vm1327, %v247, %v1439
      %v1764 = vsel %vm1327, %v248, %v1448
      %v1765 = vsel %vm1327, %v249, %v1457
      %v1766 = vsel %vm1327, %v250, %v1466
      %v1767 = vsel %vm1327, %v251, %v1475
      %v1768 = vsel %vm1327, %v252, %v1484
      %v1769 = vsel %vm1327, %v253, %v1493
      %v1770 = vsel %vm1327, %v254, %v1502
      %v1771 = vsel %vm1327, %v255, %v1511
      %v1772 = vsel %vm1327, %v256, %v1520
      %v1773 = vsel %vm1327, %v257, %v1529
      %v1774 = vsel %vm1327, %v258, %v1538
      %v1775 = vsel %vm1327, %v259, %v1547
      %v1776 = vsel %vm1327, %v260, %v1556
      %v1777 = vsel %vm1327, %v261, %v1565
      %v1778 = vsel %vm1327, %v262, %v1574
      %v1779 = vsel %vm1327, %v263, %v1583
      %v1780 = vsel %vm1327, %v264, %v1592
      %v1781 = vsel %vm1327, %v265, %v1601
      %v1782 = vsel %vm1327, %v266, %v1610
      %v1783 = vsel %vm1327, %v267, %v1619
      %v1784 = vsel %vm1327, %v268, %v1628
      %v1785 = vsel %vm1327, %v269, %v1637
      %v1786 = vsel %vm1327, %v270, %v1646
      %v1787 = vsel %vm1327, %v271, %v1655
      %v1788 = vsel %vm1327, %v272, %v1664
      %v1789 = vsel %vm1327, %v273, %v1673
      %v1790 = vsel %vm1327, %v274, %v1682
      %v1791 = vsel %vm1327, %v802, %v1691
      %v1792 = vsel %vm1327, %v1278, %v1700
      %v1793 = vsel %vm1327, %v1279, %v1709
      %vm1794 = vcmp.ge.s32.totalorder %v229, 40
      %vm1795 = vcmp.lt.s32.totalorder %v229, 48
      %vm1796 = vmand %vm1794, %vm1795
      %v1797 = vld [vmem:[%s219 + $0xb8] sm:$0x1]
      %vm1798 = vmpackc.low %vm1796, %vm1796
      %v1800 = vshrl.u32 %v1752, 16
      %v1802 = vrot.slane %v1800, 7
      %v1803 = vshll.u32 %v1752, 16
      %v1805 = vor.u32 %v1802, %v1803
      %v1806 = vrot.slane %v1802, 4
      %v1808 = vshrl.u32 %v1753, 16
      %v1810 = vrot.slane %v1808, 7
      %v1811 = vshll.u32 %v1753, 16
      %v1813 = vor.u32 %v1810, %v1811
      %v1814 = vsel %vm327, %v1806, %v1813
      %v1815 = vrot.slane %v1810, 4
      %v1817 = vshrl.u32 %v1754, 16
      %v1819 = vrot.slane %v1817, 7
      %v1820 = vshll.u32 %v1754, 16
      %v1822 = vor.u32 %v1819, %v1820
      %v1823 = vsel %vm327, %v1815, %v1822
      %v1824 = vrot.slane %v1819, 4
      %v1826 = vshrl.u32 %v1755, 16
      %v1828 = vrot.slane %v1826, 7
      %v1829 = vshll.u32 %v1755, 16
      %v1831 = vor.u32 %v1828, %v1829
      %v1832 = vsel %vm327, %v1824, %v1831
      %v1833 = vrot.slane %v1828, 4
      %v1835 = vshrl.u32 %v1756, 16
      %v1837 = vrot.slane %v1835, 7
      %v1838 = vshll.u32 %v1756, 16
      %v1840 = vor.u32 %v1837, %v1838
      %v1841 = vsel %vm327, %v1833, %v1840
      %v1842 = vrot.slane %v1837, 4
      %v1844 = vshrl.u32 %v1757, 16
      %v1846 = vrot.slane %v1844, 7
      %v1847 = vshll.u32 %v1757, 16
      %v1849 = vor.u32 %v1846, %v1847
      %v1850 = vsel %vm327, %v1842, %v1849
      %v1851 = vrot.slane %v1846, 4
      %v1853 = vshrl.u32 %v1758, 16
      %v1855 = vrot.slane %v1853, 7
      %v1856 = vshll.u32 %v1758, 16
      %v1858 = vor.u32 %v1855, %v1856
      %v1859 = vsel %vm327, %v1851, %v1858
      %v1860 = vrot.slane %v1855, 4
      %v1862 = vshrl.u32 %v1759, 16
      %v1864 = vrot.slane %v1862, 7
      %v1865 = vshll.u32 %v1759, 16
      %v1867 = vor.u32 %v1864, %v1865
      %v1868 = vsel %vm327, %v1860, %v1867
      %v1869 = vrot.slane %v1864, 4
      %v1871 = vshrl.u32 %v1760, 16
      %v1873 = vrot.slane %v1871, 7
      %v1874 = vshll.u32 %v1760, 16
      %v1876 = vor.u32 %v1873, %v1874
      %v1877 = vsel %vm327, %v1869, %v1876
      %v1878 = vrot.slane %v1873, 4
      %v1880 = vshrl.u32 %v1761, 16
      %v1882 = vrot.slane %v1880, 7
      %v1883 = vshll.u32 %v1761, 16
      %v1885 = vor.u32 %v1882, %v1883
      %v1886 = vsel %vm327, %v1878, %v1885
      %v1887 = vrot.slane %v1882, 4
      %v1889 = vshrl.u32 %v1762, 16
      %v1891 = vrot.slane %v1889, 7
      %v1892 = vshll.u32 %v1762, 16
      %v1894 = vor.u32 %v1891, %v1892
      %v1895 = vsel %vm327, %v1887, %v1894
      %v1896 = vrot.slane %v1891, 4
      %v1898 = vshrl.u32 %v1763, 16
      %v1900 = vrot.slane %v1898, 7
      %v1901 = vshll.u32 %v1763, 16
      %v1903 = vor.u32 %v1900, %v1901
      %v1904 = vsel %vm327, %v1896, %v1903
      %v1905 = vrot.slane %v1900, 4
      %v1907 = vshrl.u32 %v1764, 16
      %v1909 = vrot.slane %v1907, 7
      %v1910 = vshll.u32 %v1764, 16
      %v1912 = vor.u32 %v1909, %v1910
      %v1913 = vsel %vm327, %v1905, %v1912
      %v1914 = vrot.slane %v1909, 4
      %v1916 = vshrl.u32 %v1765, 16
      %v1918 = vrot.slane %v1916, 7
      %v1919 = vshll.u32 %v1765, 16
      %v1921 = vor.u32 %v1918, %v1919
      %v1922 = vsel %vm327, %v1914, %v1921
      %v1923 = vrot.slane %v1918, 4
      %v1925 = vshrl.u32 %v1766, 16
      %v1927 = vrot.slane %v1925, 7
      %v1928 = vshll.u32 %v1766, 16
      %v1930 = vor.u32 %v1927, %v1928
      %v1931 = vsel %vm327, %v1923, %v1930
      %v1932 = vrot.slane %v1927, 4
      %v1934 = vshrl.u32 %v1767, 16
      %v1936 = vrot.slane %v1934, 7
      %v1937 = vshll.u32 %v1767, 16
      %v1939 = vor.u32 %v1936, %v1937
      %v1940 = vsel %vm327, %v1932, %v1939
      %v1941 = vrot.slane %v1936, 4
      %v1943 = vshrl.u32 %v1768, 16
      %v1945 = vrot.slane %v1943, 7
      %v1946 = vshll.u32 %v1768, 16
      %v1948 = vor.u32 %v1945, %v1946
      %v1949 = vsel %vm327, %v1941, %v1948
      %v1950 = vrot.slane %v1945, 4
      %v1952 = vshrl.u32 %v1769, 16
      %v1954 = vrot.slane %v1952, 7
      %v1955 = vshll.u32 %v1769, 16
      %v1957 = vor.u32 %v1954, %v1955
      %v1958 = vsel %vm327, %v1950, %v1957
      %v1959 = vrot.slane %v1954, 4
      %v1961 = vshrl.u32 %v1770, 16
      %v1963 = vrot.slane %v1961, 7
      %v1964 = vshll.u32 %v1770, 16
      %v1966 = vor.u32 %v1963, %v1964
      %v1967 = vsel %vm327, %v1959, %v1966
      %v1968 = vrot.slane %v1963, 4
      %v1970 = vshrl.u32 %v1771, 16
      %v1972 = vrot.slane %v1970, 7
      %v1973 = vshll.u32 %v1771, 16
      %v1975 = vor.u32 %v1972, %v1973
      %v1976 = vsel %vm327, %v1968, %v1975
      %v1977 = vrot.slane %v1972, 4
      %v1979 = vshrl.u32 %v1772, 16
      %v1981 = vrot.slane %v1979, 7
      %v1982 = vshll.u32 %v1772, 16
      %v1984 = vor.u32 %v1981, %v1982
      %v1985 = vsel %vm327, %v1977, %v1984
      %v1986 = vrot.slane %v1981, 4
      %v1988 = vshrl.u32 %v1773, 16
      %v1990 = vrot.slane %v1988, 7
      %v1991 = vshll.u32 %v1773, 16
      %v1993 = vor.u32 %v1990, %v1991
      %v1994 = vsel %vm327, %v1986, %v1993
      %v1995 = vrot.slane %v1990, 4
      %v1997 = vshrl.u32 %v1774, 16
      %v1999 = vrot.slane %v1997, 7
      %v2000 = vshll.u32 %v1774, 16
      %v2002 = vor.u32 %v1999, %v2000
      %v2003 = vsel %vm327, %v1995, %v2002
      %v2004 = vrot.slane %v1999, 4
      %v2006 = vshrl.u32 %v1775, 16
      %v2008 = vrot.slane %v2006, 7
      %v2009 = vshll.u32 %v1775, 16
      %v2011 = vor.u32 %v2008, %v2009
      %v2012 = vsel %vm327, %v2004, %v2011
      %v2013 = vrot.slane %v2008, 4
      %v2015 = vshrl.u32 %v1776, 16
      %v2017 = vrot.slane %v2015, 7
      %v2018 = vshll.u32 %v1776, 16
      %v2020 = vor.u32 %v2017, %v2018
      %v2021 = vsel %vm327, %v2013, %v2020
      %v2022 = vrot.slane %v2017, 4
      %v2024 = vshrl.u32 %v1777, 16
      %v2026 = vrot.slane %v2024, 7
      %v2027 = vshll.u32 %v1777, 16
      %v2029 = vor.u32 %v2026, %v2027
      %v2030 = vsel %vm327, %v2022, %v2029
      %v2031 = vrot.slane %v2026, 4
      %v2033 = vshrl.u32 %v1778, 16
      %v2035 = vrot.slane %v2033, 7
      %v2036 = vshll.u32 %v1778, 16
      %v2038 = vor.u32 %v2035, %v2036
      %v2039 = vsel %vm327, %v2031, %v2038
      %v2040 = vrot.slane %v2035, 4
      %v2042 = vshrl.u32 %v1779, 16
      %v2044 = vrot.slane %v2042, 7
      %v2045 = vshll.u32 %v1779, 16
      %v2047 = vor.u32 %v2044, %v2045
      %v2048 = vsel %vm327, %v2040, %v2047
      %v2049 = vrot.slane %v2044, 4
      %v2051 = vshrl.u32 %v1780, 16
      %v2053 = vrot.slane %v2051, 7
      %v2054 = vshll.u32 %v1780, 16
      %v2056 = vor.u32 %v2053, %v2054
      %v2057 = vsel %vm327, %v2049, %v2056
      %v2058 = vrot.slane %v2053, 4
      %v2060 = vshrl.u32 %v1781, 16
      %v2062 = vrot.slane %v2060, 7
      %v2063 = vshll.u32 %v1781, 16
      %v2065 = vor.u32 %v2062, %v2063
      %v2066 = vsel %vm327, %v2058, %v2065
      %v2067 = vrot.slane %v2062, 4
      %v2069 = vshrl.u32 %v1782, 16
      %v2071 = vrot.slane %v2069, 7
      %v2072 = vshll.u32 %v1782, 16
      %v2074 = vor.u32 %v2071, %v2072
      %v2075 = vsel %vm327, %v2067, %v2074
      %v2076 = vrot.slane %v2071, 4
      %v2078 = vshrl.u32 %v1783, 16
      %v2080 = vrot.slane %v2078, 7
      %v2081 = vshll.u32 %v1783, 16
      %v2083 = vor.u32 %v2080, %v2081
      %v2084 = vsel %vm327, %v2076, %v2083
      %v2085 = vrot.slane %v2080, 4
      %v2087 = vshrl.u32 %v1784, 16
      %v2089 = vrot.slane %v2087, 7
      %v2090 = vshll.u32 %v1784, 16
      %v2092 = vor.u32 %v2089, %v2090
      %v2093 = vsel %vm327, %v2085, %v2092
      %v2094 = vrot.slane %v2089, 4
      %v2096 = vshrl.u32 %v1785, 16
      %v2098 = vrot.slane %v2096, 7
      %v2099 = vshll.u32 %v1785, 16
      %v2101 = vor.u32 %v2098, %v2099
      %v2102 = vsel %vm327, %v2094, %v2101
      %v2103 = vrot.slane %v2098, 4
      %v2105 = vshrl.u32 %v1786, 16
      %v2107 = vrot.slane %v2105, 7
      %v2108 = vshll.u32 %v1786, 16
      %v2110 = vor.u32 %v2107, %v2108
      %v2111 = vsel %vm327, %v2103, %v2110
      %v2112 = vrot.slane %v2107, 4
      %v2114 = vshrl.u32 %v1787, 16
      %v2116 = vrot.slane %v2114, 7
      %v2117 = vshll.u32 %v1787, 16
      %v2119 = vor.u32 %v2116, %v2117
      %v2120 = vsel %vm327, %v2112, %v2119
      %v2121 = vrot.slane %v2116, 4
      %v2123 = vshrl.u32 %v1788, 16
      %v2125 = vrot.slane %v2123, 7
      %v2126 = vshll.u32 %v1788, 16
      %v2128 = vor.u32 %v2125, %v2126
      %v2129 = vsel %vm327, %v2121, %v2128
      %v2130 = vrot.slane %v2125, 4
      %v2132 = vshrl.u32 %v1789, 16
      %v2134 = vrot.slane %v2132, 7
      %v2135 = vshll.u32 %v1789, 16
      %v2137 = vor.u32 %v2134, %v2135
      %v2138 = vsel %vm327, %v2130, %v2137
      %v2139 = vrot.slane %v2134, 4
      %v2141 = vshrl.u32 %v1790, 16
      %v2143 = vrot.slane %v2141, 7
      %v2144 = vshll.u32 %v1790, 16
      %v2146 = vor.u32 %v2143, %v2144
      %v2147 = vsel %vm327, %v2139, %v2146
      %v2148 = vrot.slane %v2143, 4
      %v2150 = vshrl.u32 %v1791, 16
      %v2152 = vrot.slane %v2150, 7
      %v2153 = vshll.u32 %v1791, 16
      %v2155 = vor.u32 %v2152, %v2153
      %v2156 = vsel %vm327, %v2148, %v2155
      %v2157 = vrot.slane %v2152, 4
      %v2159 = vshrl.u32 %v1792, 16
      %v2161 = vrot.slane %v2159, 7
      %v2162 = vshll.u32 %v1792, 16
      %v2164 = vor.u32 %v2161, %v2162
      %v2165 = vsel %vm327, %v2157, %v2164
      %v2166 = vrot.slane %v2161, 4
      %v2168 = vshrl.u32 %v1793, 16
      %v2170 = vrot.slane %v2168, 7
      %v2171 = vshll.u32 %v1793, 16
      %v2173 = vor.u32 %v2170, %v2171
      %v2174 = vsel %vm327, %v2166, %v2173
      %v2175 = vrot.slane %v2170, 4
      %v2219 = vsel %vm1798, %v236, %v1805
      %v2220 = vsel %vm1798, %v237, %v1814
      %v2221 = vsel %vm1798, %v238, %v1823
      %v2222 = vsel %vm1798, %v239, %v1832
      %v2223 = vsel %vm1798, %v240, %v1841
      %v2224 = vsel %vm1798, %v241, %v1850
      %v2225 = vsel %vm1798, %v242, %v1859
      %v2226 = vsel %vm1798, %v243, %v1868
      %v2227 = vsel %vm1798, %v244, %v1877
      %v2228 = vsel %vm1798, %v245, %v1886
      %v2229 = vsel %vm1798, %v246, %v1895
      %v2230 = vsel %vm1798, %v247, %v1904
      %v2231 = vsel %vm1798, %v248, %v1913
      %v2232 = vsel %vm1798, %v249, %v1922
      %v2233 = vsel %vm1798, %v250, %v1931
      %v2234 = vsel %vm1798, %v251, %v1940
      %v2235 = vsel %vm1798, %v252, %v1949
      %v2236 = vsel %vm1798, %v253, %v1958
      %v2237 = vsel %vm1798, %v254, %v1967
      %v2238 = vsel %vm1798, %v255, %v1976
      %v2239 = vsel %vm1798, %v256, %v1985
      %v2240 = vsel %vm1798, %v257, %v1994
      %v2241 = vsel %vm1798, %v258, %v2003
      %v2242 = vsel %vm1798, %v259, %v2012
      %v2243 = vsel %vm1798, %v260, %v2021
      %v2244 = vsel %vm1798, %v261, %v2030
      %v2245 = vsel %vm1798, %v262, %v2039
      %v2246 = vsel %vm1798, %v263, %v2048
      %v2247 = vsel %vm1798, %v264, %v2057
      %v2248 = vsel %vm1798, %v265, %v2066
      %v2249 = vsel %vm1798, %v266, %v2075
      %v2250 = vsel %vm1798, %v267, %v2084
      %v2251 = vsel %vm1798, %v268, %v2093
      %v2252 = vsel %vm1798, %v269, %v2102
      %v2253 = vsel %vm1798, %v270, %v2111
      %v2254 = vsel %vm1798, %v271, %v2120
      %v2255 = vsel %vm1798, %v272, %v2129
      %v2256 = vsel %vm1798, %v273, %v2138
      %v2257 = vsel %vm1798, %v274, %v2147
      %v2258 = vsel %vm1798, %v802, %v2156
      %v2259 = vsel %vm1798, %v1278, %v2165
      %v2260 = vsel %vm1798, %v1279, %v2174
      %v2261 = vsel %vm1798, %v1797, %v2175
      %vm2262 = vcmp.ge.s32.totalorder %v229, 48
      %vm2263 = vcmp.lt.s32.totalorder %v229, 56
      %vm2264 = vmand %vm2262, %vm2263
      %v2265 = vld [vmem:[%s219 + $0xb8] sm:$0xf]
      %v2266 = vld [vmem:[%s219 + $0xbc] sm:$0xf]
      %v2267 = vld [vmem:[%s219 + $0xc0] sm:$0x1]
      %vm2268 = vmpackc.low %vm2264, %vm2264
      %v2269 = vsel %vm2268, %v238, %v2219
      %v2270 = vsel %vm2268, %v239, %v2220
      %v2271 = vsel %vm2268, %v240, %v2221
      %v2272 = vsel %vm2268, %v241, %v2222
      %v2273 = vsel %vm2268, %v242, %v2223
      %v2274 = vsel %vm2268, %v243, %v2224
      %v2275 = vsel %vm2268, %v244, %v2225
      %v2276 = vsel %vm2268, %v245, %v2226
      %v2277 = vsel %vm2268, %v246, %v2227
      %v2278 = vsel %vm2268, %v247, %v2228
      %v2279 = vsel %vm2268, %v248, %v2229
      %v2280 = vsel %vm2268, %v249, %v2230
      %v2281 = vsel %vm2268, %v250, %v2231
      %v2282 = vsel %vm2268, %v251, %v2232
      %v2283 = vsel %vm2268, %v252, %v2233
      %v2284 = vsel %vm2268, %v253, %v2234
      %v2285 = vsel %vm2268, %v254, %v2235
      %v2286 = vsel %vm2268, %v255, %v2236
      %v2287 = vsel %vm2268, %v256, %v2237
      %v2288 = vsel %vm2268, %v257, %v2238
      %v2289 = vsel %vm2268, %v258, %v2239
      %v2290 = vsel %vm2268, %v259, %v2240
      %v2291 = vsel %vm2268, %v260, %v2241
      %v2292 = vsel %vm2268, %v261, %v2242
      %v2293 = vsel %vm2268, %v262, %v2243
      %v2294 = vsel %vm2268, %v263, %v2244
      %v2295 = vsel %vm2268, %v264, %v2245
      %v2296 = vsel %vm2268, %v265, %v2246
      %v2297 = vsel %vm2268, %v266, %v2247
      %v2298 = vsel %vm2268, %v267, %v2248
      %v2299 = vsel %vm2268, %v268, %v2249
      %v2300 = vsel %vm2268, %v269, %v2250
      %v2301 = vsel %vm2268, %v270, %v2251
      %v2302 = vsel %vm2268, %v271, %v2252
      %v2303 = vsel %vm2268, %v272, %v2253
      %v2304 = vsel %vm2268, %v273, %v2254
      %v2305 = vsel %vm2268, %v274, %v2255
      %v2306 = vsel %vm2268, %v802, %v2256
      %v2307 = vsel %vm2268, %v1278, %v2257
      %v2308 = vsel %vm2268, %v1279, %v2258
      %v2309 = vsel %vm2268, %v2265, %v2259
      %v2310 = vsel %vm2268, %v2266, %v2260
      %v2311 = vsel %vm2268, %v2267, %v2261
      %vm2312 = vcmp.ge.s32.totalorder %v229, 56
      %vm2313 = vcmp.lt.s32.totalorder %v229, 64
      %vm2314 = vmand %vm2312, %vm2313
      %v2315 = vld [vmem:[%s219 + $0x18] sm:$0xe]
      %vm2316 = vmpackc.low %vm2314, %vm2314
      %v2318 = vshrl.u32 %v2269, 16
      %v2320 = vrot.slane %v2318, 7
      %v2321 = vshll.u32 %v2269, 16
      %v2323 = vor.u32 %v2320, %v2321
      %v2324 = vrot.slane %v2320, 4
      %v2326 = vshrl.u32 %v2270, 16
      %v2328 = vrot.slane %v2326, 7
      %v2329 = vshll.u32 %v2270, 16
      %v2331 = vor.u32 %v2328, %v2329
      %v2332 = vsel %vm327, %v2324, %v2331
      %v2333 = vrot.slane %v2328, 4
      %v2335 = vshrl.u32 %v2271, 16
      %v2337 = vrot.slane %v2335, 7
      %v2338 = vshll.u32 %v2271, 16
      %v2340 = vor.u32 %v2337, %v2338
      %v2341 = vsel %vm327, %v2333, %v2340
      %v2342 = vrot.slane %v2337, 4
      %v2344 = vshrl.u32 %v2272, 16
      %v2346 = vrot.slane %v2344, 7
      %v2347 = vshll.u32 %v2272, 16
      %v2349 = vor.u32 %v2346, %v2347
      %v2350 = vsel %vm327, %v2342, %v2349
      %v2351 = vrot.slane %v2346, 4
      %v2353 = vshrl.u32 %v2273, 16
      %v2355 = vrot.slane %v2353, 7
      %v2356 = vshll.u32 %v2273, 16
      %v2358 = vor.u32 %v2355, %v2356
      %v2359 = vsel %vm327, %v2351, %v2358
      %v2360 = vrot.slane %v2355, 4
      %v2362 = vshrl.u32 %v2274, 16
      %v2364 = vrot.slane %v2362, 7
      %v2365 = vshll.u32 %v2274, 16
      %v2367 = vor.u32 %v2364, %v2365
      %v2368 = vsel %vm327, %v2360, %v2367
      %v2369 = vrot.slane %v2364, 4
      %v2371 = vshrl.u32 %v2275, 16
      %v2373 = vrot.slane %v2371, 7
      %v2374 = vshll.u32 %v2275, 16
      %v2376 = vor.u32 %v2373, %v2374
      %v2377 = vsel %vm327, %v2369, %v2376
      %v2378 = vrot.slane %v2373, 4
      %v2380 = vshrl.u32 %v2276, 16
      %v2382 = vrot.slane %v2380, 7
      %v2383 = vshll.u32 %v2276, 16
      %v2385 = vor.u32 %v2382, %v2383
      %v2386 = vsel %vm327, %v2378, %v2385
      %v2387 = vrot.slane %v2382, 4
      %v2389 = vshrl.u32 %v2277, 16
      %v2391 = vrot.slane %v2389, 7
      %v2392 = vshll.u32 %v2277, 16
      %v2394 = vor.u32 %v2391, %v2392
      %v2395 = vsel %vm327, %v2387, %v2394
      %v2396 = vrot.slane %v2391, 4
      %v2398 = vshrl.u32 %v2278, 16
      %v2400 = vrot.slane %v2398, 7
      %v2401 = vshll.u32 %v2278, 16
      %v2403 = vor.u32 %v2400, %v2401
      %v2404 = vsel %vm327, %v2396, %v2403
      %v2405 = vrot.slane %v2400, 4
      %v2407 = vshrl.u32 %v2279, 16
      %v2409 = vrot.slane %v2407, 7
      %v2410 = vshll.u32 %v2279, 16
      %v2412 = vor.u32 %v2409, %v2410
      %v2413 = vsel %vm327, %v2405, %v2412
      %v2414 = vrot.slane %v2409, 4
      %v2416 = vshrl.u32 %v2280, 16
      %v2418 = vrot.slane %v2416, 7
      %v2419 = vshll.u32 %v2280, 16
      %v2421 = vor.u32 %v2418, %v2419
      %v2422 = vsel %vm327, %v2414, %v2421
      %v2423 = vrot.slane %v2418, 4
      %v2425 = vshrl.u32 %v2281, 16
      %v2427 = vrot.slane %v2425, 7
      %v2428 = vshll.u32 %v2281, 16
      %v2430 = vor.u32 %v2427, %v2428
      %v2431 = vsel %vm327, %v2423, %v2430
      %v2432 = vrot.slane %v2427, 4
      %v2434 = vshrl.u32 %v2282, 16
      %v2436 = vrot.slane %v2434, 7
      %v2437 = vshll.u32 %v2282, 16
      %v2439 = vor.u32 %v2436, %v2437
      %v2440 = vsel %vm327, %v2432, %v2439
      %v2441 = vrot.slane %v2436, 4
      %v2443 = vshrl.u32 %v2283, 16
      %v2445 = vrot.slane %v2443, 7
      %v2446 = vshll.u32 %v2283, 16
      %v2448 = vor.u32 %v2445, %v2446
      %v2449 = vsel %vm327, %v2441, %v2448
      %v2450 = vrot.slane %v2445, 4
      %v2452 = vshrl.u32 %v2284, 16
      %v2454 = vrot.slane %v2452, 7
      %v2455 = vshll.u32 %v2284, 16
      %v2457 = vor.u32 %v2454, %v2455
      %v2458 = vsel %vm327, %v2450, %v2457
      %v2459 = vrot.slane %v2454, 4
      %v2461 = vshrl.u32 %v2285, 16
      %v2463 = vrot.slane %v2461, 7
      %v2464 = vshll.u32 %v2285, 16
      %v2466 = vor.u32 %v2463, %v2464
      %v2467 = vsel %vm327, %v2459, %v2466
      %v2468 = vrot.slane %v2463, 4
      %v2470 = vshrl.u32 %v2286, 16
      %v2472 = vrot.slane %v2470, 7
      %v2473 = vshll.u32 %v2286, 16
      %v2475 = vor.u32 %v2472, %v2473
      %v2476 = vsel %vm327, %v2468, %v2475
      %v2477 = vrot.slane %v2472, 4
      %v2479 = vshrl.u32 %v2287, 16
      %v2481 = vrot.slane %v2479, 7
      %v2482 = vshll.u32 %v2287, 16
      %v2484 = vor.u32 %v2481, %v2482
      %v2485 = vsel %vm327, %v2477, %v2484
      %v2486 = vrot.slane %v2481, 4
      %v2488 = vshrl.u32 %v2288, 16
      %v2490 = vrot.slane %v2488, 7
      %v2491 = vshll.u32 %v2288, 16
      %v2493 = vor.u32 %v2490, %v2491
      %v2494 = vsel %vm327, %v2486, %v2493
      %v2495 = vrot.slane %v2490, 4
      %v2497 = vshrl.u32 %v2289, 16
      %v2499 = vrot.slane %v2497, 7
      %v2500 = vshll.u32 %v2289, 16
      %v2502 = vor.u32 %v2499, %v2500
      %v2503 = vsel %vm327, %v2495, %v2502
      %v2504 = vrot.slane %v2499, 4
      %v2506 = vshrl.u32 %v2290, 16
      %v2508 = vrot.slane %v2506, 7
      %v2509 = vshll.u32 %v2290, 16
      %v2511 = vor.u32 %v2508, %v2509
      %v2512 = vsel %vm327, %v2504, %v2511
      %v2513 = vrot.slane %v2508, 4
      %v2515 = vshrl.u32 %v2291, 16
      %v2517 = vrot.slane %v2515, 7
      %v2518 = vshll.u32 %v2291, 16
      %v2520 = vor.u32 %v2517, %v2518
      %v2521 = vsel %vm327, %v2513, %v2520
      %v2522 = vrot.slane %v2517, 4
      %v2524 = vshrl.u32 %v2292, 16
      %v2526 = vrot.slane %v2524, 7
      %v2527 = vshll.u32 %v2292, 16
      %v2529 = vor.u32 %v2526, %v2527
      %v2530 = vsel %vm327, %v2522, %v2529
      %v2531 = vrot.slane %v2526, 4
      %v2533 = vshrl.u32 %v2293, 16
      %v2535 = vrot.slane %v2533, 7
      %v2536 = vshll.u32 %v2293, 16
      %v2538 = vor.u32 %v2535, %v2536
      %v2539 = vsel %vm327, %v2531, %v2538
      %v2540 = vrot.slane %v2535, 4
      %v2542 = vshrl.u32 %v2294, 16
      %v2544 = vrot.slane %v2542, 7
      %v2545 = vshll.u32 %v2294, 16
      %v2547 = vor.u32 %v2544, %v2545
      %v2548 = vsel %vm327, %v2540, %v2547
      %v2549 = vrot.slane %v2544, 4
      %v2551 = vshrl.u32 %v2295, 16
      %v2553 = vrot.slane %v2551, 7
      %v2554 = vshll.u32 %v2295, 16
      %v2556 = vor.u32 %v2553, %v2554
      %v2557 = vsel %vm327, %v2549, %v2556
      %v2558 = vrot.slane %v2553, 4
      %v2560 = vshrl.u32 %v2296, 16
      %v2562 = vrot.slane %v2560, 7
      %v2563 = vshll.u32 %v2296, 16
      %v2565 = vor.u32 %v2562, %v2563
      %v2566 = vsel %vm327, %v2558, %v2565
      %v2567 = vrot.slane %v2562, 4
      %v2569 = vshrl.u32 %v2297, 16
      %v2571 = vrot.slane %v2569, 7
      %v2572 = vshll.u32 %v2297, 16
      %v2574 = vor.u32 %v2571, %v2572
      %v2575 = vsel %vm327, %v2567, %v2574
      %v2576 = vrot.slane %v2571, 4
      %v2578 = vshrl.u32 %v2298, 16
      %v2580 = vrot.slane %v2578, 7
      %v2581 = vshll.u32 %v2298, 16
      %v2583 = vor.u32 %v2580, %v2581
      %v2584 = vsel %vm327, %v2576, %v2583
      %v2585 = vrot.slane %v2580, 4
      %v2587 = vshrl.u32 %v2299, 16
      %v2589 = vrot.slane %v2587, 7
      %v2590 = vshll.u32 %v2299, 16
      %v2592 = vor.u32 %v2589, %v2590
      %v2593 = vsel %vm327, %v2585, %v2592
      %v2594 = vrot.slane %v2589, 4
      %v2596 = vshrl.u32 %v2300, 16
      %v2598 = vrot.slane %v2596, 7
      %v2599 = vshll.u32 %v2300, 16
      %v2601 = vor.u32 %v2598, %v2599
      %v2602 = vsel %vm327, %v2594, %v2601
      %v2603 = vrot.slane %v2598, 4
      %v2605 = vshrl.u32 %v2301, 16
      %v2607 = vrot.slane %v2605, 7
      %v2608 = vshll.u32 %v2301, 16
      %v2610 = vor.u32 %v2607, %v2608
      %v2611 = vsel %vm327, %v2603, %v2610
      %v2612 = vrot.slane %v2607, 4
      %v2614 = vshrl.u32 %v2302, 16
      %v2616 = vrot.slane %v2614, 7
      %v2617 = vshll.u32 %v2302, 16
      %v2619 = vor.u32 %v2616, %v2617
      %v2620 = vsel %vm327, %v2612, %v2619
      %v2621 = vrot.slane %v2616, 4
      %v2623 = vshrl.u32 %v2303, 16
      %v2625 = vrot.slane %v2623, 7
      %v2626 = vshll.u32 %v2303, 16
      %v2628 = vor.u32 %v2625, %v2626
      %v2629 = vsel %vm327, %v2621, %v2628
      %v2630 = vrot.slane %v2625, 4
      %v2632 = vshrl.u32 %v2304, 16
      %v2634 = vrot.slane %v2632, 7
      %v2635 = vshll.u32 %v2304, 16
      %v2637 = vor.u32 %v2634, %v2635
      %v2638 = vsel %vm327, %v2630, %v2637
      %v2639 = vrot.slane %v2634, 4
      %v2641 = vshrl.u32 %v2305, 16
      %v2643 = vrot.slane %v2641, 7
      %v2644 = vshll.u32 %v2305, 16
      %v2646 = vor.u32 %v2643, %v2644
      %v2647 = vsel %vm327, %v2639, %v2646
      %v2648 = vrot.slane %v2643, 4
      %v2650 = vshrl.u32 %v2306, 16
      %v2652 = vrot.slane %v2650, 7
      %v2653 = vshll.u32 %v2306, 16
      %v2655 = vor.u32 %v2652, %v2653
      %v2656 = vsel %vm327, %v2648, %v2655
      %v2657 = vrot.slane %v2652, 4
      %v2659 = vshrl.u32 %v2307, 16
      %v2661 = vrot.slane %v2659, 7
      %v2662 = vshll.u32 %v2307, 16
      %v2664 = vor.u32 %v2661, %v2662
      %v2665 = vsel %vm327, %v2657, %v2664
      %v2666 = vrot.slane %v2661, 4
      %v2668 = vshrl.u32 %v2308, 16
      %v2670 = vrot.slane %v2668, 7
      %v2671 = vshll.u32 %v2308, 16
      %v2673 = vor.u32 %v2670, %v2671
      %v2674 = vsel %vm327, %v2666, %v2673
      %v2675 = vrot.slane %v2670, 4
      %v2677 = vshrl.u32 %v2309, 16
      %v2679 = vrot.slane %v2677, 7
      %v2680 = vshll.u32 %v2309, 16
      %v2682 = vor.u32 %v2679, %v2680
      %v2683 = vsel %vm327, %v2675, %v2682
      %v2684 = vrot.slane %v2679, 4
      %v2686 = vshrl.u32 %v2310, 16
      %v2688 = vrot.slane %v2686, 7
      %v2689 = vshll.u32 %v2310, 16
      %v2691 = vor.u32 %v2688, %v2689
      %v2692 = vsel %vm327, %v2684, %v2691
      %v2693 = vrot.slane %v2688, 4
      %v2695 = vshll.u32 %v2311, 16
      %v2697 = vsel %vm327, %v2693, %v2695
      %v2741 = vsel %vm2316, %v2315, %v2323
      %v2742 = vsel %vm2316, %v239, %v2332
      %v2743 = vsel %vm2316, %v240, %v2341
      %v2744 = vsel %vm2316, %v241, %v2350
      %v2745 = vsel %vm2316, %v242, %v2359
      %v2746 = vsel %vm2316, %v243, %v2368
      %v2747 = vsel %vm2316, %v244, %v2377
      %v2748 = vsel %vm2316, %v245, %v2386
      %v2749 = vsel %vm2316, %v246, %v2395
      %v2750 = vsel %vm2316, %v247, %v2404
      %v2751 = vsel %vm2316, %v248, %v2413
      %v2752 = vsel %vm2316, %v249, %v2422
      %v2753 = vsel %vm2316, %v250, %v2431
      %v2754 = vsel %vm2316, %v251, %v2440
      %v2755 = vsel %vm2316, %v252, %v2449
      %v2756 = vsel %vm2316, %v253, %v2458
      %v2757 = vsel %vm2316, %v254, %v2467
      %v2758 = vsel %vm2316, %v255, %v2476
      %v2759 = vsel %vm2316, %v256, %v2485
      %v2760 = vsel %vm2316, %v257, %v2494
      %v2761 = vsel %vm2316, %v258, %v2503
      %v2762 = vsel %vm2316, %v259, %v2512
      %v2763 = vsel %vm2316, %v260, %v2521
      %v2764 = vsel %vm2316, %v261, %v2530
      %v2765 = vsel %vm2316, %v262, %v2539
      %v2766 = vsel %vm2316, %v263, %v2548
      %v2767 = vsel %vm2316, %v264, %v2557
      %v2768 = vsel %vm2316, %v265, %v2566
      %v2769 = vsel %vm2316, %v266, %v2575
      %v2770 = vsel %vm2316, %v267, %v2584
      %v2771 = vsel %vm2316, %v268, %v2593
      %v2772 = vsel %vm2316, %v269, %v2602
      %v2773 = vsel %vm2316, %v270, %v2611
      %v2774 = vsel %vm2316, %v271, %v2620
      %v2775 = vsel %vm2316, %v272, %v2629
      %v2776 = vsel %vm2316, %v273, %v2638
      %v2777 = vsel %vm2316, %v274, %v2647
      %v2778 = vsel %vm2316, %v802, %v2656
      %v2779 = vsel %vm2316, %v1278, %v2665
      %v2780 = vsel %vm2316, %v1279, %v2674
      %v2781 = vsel %vm2316, %v2265, %v2683
      %v2782 = vsel %vm2316, %v2266, %v2692
      %v2783 = vsel %vm2316, %v2267, %v2697
      %vm2784 = vcmp.ge.s32.totalorder %v229, 64
      %vm2785 = vcmp.lt.s32.totalorder %v229, 72
      %vm2786 = vmand %vm2784, %vm2785
      %v2787 = vld [vmem:[%s219 + $0xc0] sm:$0x3]
      %vm2788 = vmpackc.low %vm2786, %vm2786
      %v2790 = vshrl.u32 %v2741, 16
      %v2792 = vrot.slane %v2790, 7
      %v2793 = vshll.u32 %v2741, 16
      %v2795 = vor.u32 %v2792, %v2793
      %v2796 = vrot.slane %v2792, 4
      %v2798 = vshrl.u32 %v2742, 16
      %v2800 = vrot.slane %v2798, 7
      %v2801 = vshll.u32 %v2742, 16
      %v2803 = vor.u32 %v2800, %v2801
      %v2804 = vsel %vm327, %v2796, %v2803
      %v2805 = vrot.slane %v2800, 4
      %v2807 = vshrl.u32 %v2743, 16
      %v2809 = vrot.slane %v2807, 7
      %v2810 = vshll.u32 %v2743, 16
      %v2812 = vor.u32 %v2809, %v2810
      %v2813 = vsel %vm327, %v2805, %v2812
      %v2814 = vrot.slane %v2809, 4
      %v2816 = vshrl.u32 %v2744, 16
      %v2818 = vrot.slane %v2816, 7
      %v2819 = vshll.u32 %v2744, 16
      %v2821 = vor.u32 %v2818, %v2819
      %v2822 = vsel %vm327, %v2814, %v2821
      %v2823 = vrot.slane %v2818, 4
      %v2825 = vshrl.u32 %v2745, 16
      %v2827 = vrot.slane %v2825, 7
      %v2828 = vshll.u32 %v2745, 16
      %v2830 = vor.u32 %v2827, %v2828
      %v2831 = vsel %vm327, %v2823, %v2830
      %v2832 = vrot.slane %v2827, 4
      %v2834 = vshrl.u32 %v2746, 16
      %v2836 = vrot.slane %v2834, 7
      %v2837 = vshll.u32 %v2746, 16
      %v2839 = vor.u32 %v2836, %v2837
      %v2840 = vsel %vm327, %v2832, %v2839
      %v2841 = vrot.slane %v2836, 4
      %v2843 = vshrl.u32 %v2747, 16
      %v2845 = vrot.slane %v2843, 7
      %v2846 = vshll.u32 %v2747, 16
      %v2848 = vor.u32 %v2845, %v2846
      %v2849 = vsel %vm327, %v2841, %v2848
      %v2850 = vrot.slane %v2845, 4
      %v2852 = vshrl.u32 %v2748, 16
      %v2854 = vrot.slane %v2852, 7
      %v2855 = vshll.u32 %v2748, 16
      %v2857 = vor.u32 %v2854, %v2855
      %v2858 = vsel %vm327, %v2850, %v2857
      %v2859 = vrot.slane %v2854, 4
      %v2861 = vshrl.u32 %v2749, 16
      %v2863 = vrot.slane %v2861, 7
      %v2864 = vshll.u32 %v2749, 16
      %v2866 = vor.u32 %v2863, %v2864
      %v2867 = vsel %vm327, %v2859, %v2866
      %v2868 = vrot.slane %v2863, 4
      %v2870 = vshrl.u32 %v2750, 16
      %v2872 = vrot.slane %v2870, 7
      %v2873 = vshll.u32 %v2750, 16
      %v2875 = vor.u32 %v2872, %v2873
      %v2876 = vsel %vm327, %v2868, %v2875
      %v2877 = vrot.slane %v2872, 4
      %v2879 = vshrl.u32 %v2751, 16
      %v2881 = vrot.slane %v2879, 7
      %v2882 = vshll.u32 %v2751, 16
      %v2884 = vor.u32 %v2881, %v2882
      %v2885 = vsel %vm327, %v2877, %v2884
      %v2886 = vrot.slane %v2881, 4
      %v2888 = vshrl.u32 %v2752, 16
      %v2890 = vrot.slane %v2888, 7
      %v2891 = vshll.u32 %v2752, 16
      %v2893 = vor.u32 %v2890, %v2891
      %v2894 = vsel %vm327, %v2886, %v2893
      %v2895 = vrot.slane %v2890, 4
      %v2897 = vshrl.u32 %v2753, 16
      %v2899 = vrot.slane %v2897, 7
      %v2900 = vshll.u32 %v2753, 16
      %v2902 = vor.u32 %v2899, %v2900
      %v2903 = vsel %vm327, %v2895, %v2902
      %v2904 = vrot.slane %v2899, 4
      %v2906 = vshrl.u32 %v2754, 16
      %v2908 = vrot.slane %v2906, 7
      %v2909 = vshll.u32 %v2754, 16
      %v2911 = vor.u32 %v2908, %v2909
      %v2912 = vsel %vm327, %v2904, %v2911
      %v2913 = vrot.slane %v2908, 4
      %v2915 = vshrl.u32 %v2755, 16
      %v2917 = vrot.slane %v2915, 7
      %v2918 = vshll.u32 %v2755, 16
      %v2920 = vor.u32 %v2917, %v2918
      %v2921 = vsel %vm327, %v2913, %v2920
      %v2922 = vrot.slane %v2917, 4
      %v2924 = vshrl.u32 %v2756, 16
      %v2926 = vrot.slane %v2924, 7
      %v2927 = vshll.u32 %v2756, 16
      %v2929 = vor.u32 %v2926, %v2927
      %v2930 = vsel %vm327, %v2922, %v2929
      %v2931 = vrot.slane %v2926, 4
      %v2933 = vshrl.u32 %v2757, 16
      %v2935 = vrot.slane %v2933, 7
      %v2936 = vshll.u32 %v2757, 16
      %v2938 = vor.u32 %v2935, %v2936
      %v2939 = vsel %vm327, %v2931, %v2938
      %v2940 = vrot.slane %v2935, 4
      %v2942 = vshrl.u32 %v2758, 16
      %v2944 = vrot.slane %v2942, 7
      %v2945 = vshll.u32 %v2758, 16
      %v2947 = vor.u32 %v2944, %v2945
      %v2948 = vsel %vm327, %v2940, %v2947
      %v2949 = vrot.slane %v2944, 4
      %v2951 = vshrl.u32 %v2759, 16
      %v2953 = vrot.slane %v2951, 7
      %v2954 = vshll.u32 %v2759, 16
      %v2956 = vor.u32 %v2953, %v2954
      %v2957 = vsel %vm327, %v2949, %v2956
      %v2958 = vrot.slane %v2953, 4
      %v2960 = vshrl.u32 %v2760, 16
      %v2962 = vrot.slane %v2960, 7
      %v2963 = vshll.u32 %v2760, 16
      %v2965 = vor.u32 %v2962, %v2963
      %v2966 = vsel %vm327, %v2958, %v2965
      %v2967 = vrot.slane %v2962, 4
      %v2969 = vshrl.u32 %v2761, 16
      %v2971 = vrot.slane %v2969, 7
      %v2972 = vshll.u32 %v2761, 16
      %v2974 = vor.u32 %v2971, %v2972
      %v2975 = vsel %vm327, %v2967, %v2974
      %v2976 = vrot.slane %v2971, 4
      %v2978 = vshrl.u32 %v2762, 16
      %v2980 = vrot.slane %v2978, 7
      %v2981 = vshll.u32 %v2762, 16
      %v2983 = vor.u32 %v2980, %v2981
      %v2984 = vsel %vm327, %v2976, %v2983
      %v2985 = vrot.slane %v2980, 4
      %v2987 = vshrl.u32 %v2763, 16
      %v2989 = vrot.slane %v2987, 7
      %v2990 = vshll.u32 %v2763, 16
      %v2992 = vor.u32 %v2989, %v2990
      %v2993 = vsel %vm327, %v2985, %v2992
      %v2994 = vrot.slane %v2989, 4
      %v2996 = vshrl.u32 %v2764, 16
      %v2998 = vrot.slane %v2996, 7
      %v2999 = vshll.u32 %v2764, 16
      %v3001 = vor.u32 %v2998, %v2999
      %v3002 = vsel %vm327, %v2994, %v3001
      %v3003 = vrot.slane %v2998, 4
      %v3005 = vshrl.u32 %v2765, 16
      %v3007 = vrot.slane %v3005, 7
      %v3008 = vshll.u32 %v2765, 16
      %v3010 = vor.u32 %v3007, %v3008
      %v3011 = vsel %vm327, %v3003, %v3010
      %v3012 = vrot.slane %v3007, 4
      %v3014 = vshrl.u32 %v2766, 16
      %v3016 = vrot.slane %v3014, 7
      %v3017 = vshll.u32 %v2766, 16
      %v3019 = vor.u32 %v3016, %v3017
      %v3020 = vsel %vm327, %v3012, %v3019
      %v3021 = vrot.slane %v3016, 4
      %v3023 = vshrl.u32 %v2767, 16
      %v3025 = vrot.slane %v3023, 7
      %v3026 = vshll.u32 %v2767, 16
      %v3028 = vor.u32 %v3025, %v3026
      %v3029 = vsel %vm327, %v3021, %v3028
      %v3030 = vrot.slane %v3025, 4
      %v3032 = vshrl.u32 %v2768, 16
      %v3034 = vrot.slane %v3032, 7
      %v3035 = vshll.u32 %v2768, 16
      %v3037 = vor.u32 %v3034, %v3035
      %v3038 = vsel %vm327, %v3030, %v3037
      %v3039 = vrot.slane %v3034, 4
      %v3041 = vshrl.u32 %v2769, 16
      %v3043 = vrot.slane %v3041, 7
      %v3044 = vshll.u32 %v2769, 16
      %v3046 = vor.u32 %v3043, %v3044
      %v3047 = vsel %vm327, %v3039, %v3046
      %v3048 = vrot.slane %v3043, 4
      %v3050 = vshrl.u32 %v2770, 16
      %v3052 = vrot.slane %v3050, 7
      %v3053 = vshll.u32 %v2770, 16
      %v3055 = vor.u32 %v3052, %v3053
      %v3056 = vsel %vm327, %v3048, %v3055
      %v3057 = vrot.slane %v3052, 4
      %v3059 = vshrl.u32 %v2771, 16
      %v3061 = vrot.slane %v3059, 7
      %v3062 = vshll.u32 %v2771, 16
      %v3064 = vor.u32 %v3061, %v3062
      %v3065 = vsel %vm327, %v3057, %v3064
      %v3066 = vrot.slane %v3061, 4
      %v3068 = vshrl.u32 %v2772, 16
      %v3070 = vrot.slane %v3068, 7
      %v3071 = vshll.u32 %v2772, 16
      %v3073 = vor.u32 %v3070, %v3071
      %v3074 = vsel %vm327, %v3066, %v3073
      %v3075 = vrot.slane %v3070, 4
      %v3077 = vshrl.u32 %v2773, 16
      %v3079 = vrot.slane %v3077, 7
      %v3080 = vshll.u32 %v2773, 16
      %v3082 = vor.u32 %v3079, %v3080
      %v3083 = vsel %vm327, %v3075, %v3082
      %v3084 = vrot.slane %v3079, 4
      %v3086 = vshrl.u32 %v2774, 16
      %v3088 = vrot.slane %v3086, 7
      %v3089 = vshll.u32 %v2774, 16
      %v3091 = vor.u32 %v3088, %v3089
      %v3092 = vsel %vm327, %v3084, %v3091
      %v3093 = vrot.slane %v3088, 4
      %v3095 = vshrl.u32 %v2775, 16
      %v3097 = vrot.slane %v3095, 7
      %v3098 = vshll.u32 %v2775, 16
      %v3100 = vor.u32 %v3097, %v3098
      %v3101 = vsel %vm327, %v3093, %v3100
      %v3102 = vrot.slane %v3097, 4
      %v3104 = vshrl.u32 %v2776, 16
      %v3106 = vrot.slane %v3104, 7
      %v3107 = vshll.u32 %v2776, 16
      %v3109 = vor.u32 %v3106, %v3107
      %v3110 = vsel %vm327, %v3102, %v3109
      %v3111 = vrot.slane %v3106, 4
      %v3113 = vshrl.u32 %v2777, 16
      %v3115 = vrot.slane %v3113, 7
      %v3116 = vshll.u32 %v2777, 16
      %v3118 = vor.u32 %v3115, %v3116
      %v3119 = vsel %vm327, %v3111, %v3118
      %v3120 = vrot.slane %v3115, 4
      %v3122 = vshrl.u32 %v2778, 16
      %v3124 = vrot.slane %v3122, 7
      %v3125 = vshll.u32 %v2778, 16
      %v3127 = vor.u32 %v3124, %v3125
      %v3128 = vsel %vm327, %v3120, %v3127
      %v3129 = vrot.slane %v3124, 4
      %v3131 = vshrl.u32 %v2779, 16
      %v3133 = vrot.slane %v3131, 7
      %v3134 = vshll.u32 %v2779, 16
      %v3136 = vor.u32 %v3133, %v3134
      %v3137 = vsel %vm327, %v3129, %v3136
      %v3138 = vrot.slane %v3133, 4
      %v3140 = vshrl.u32 %v2780, 16
      %v3142 = vrot.slane %v3140, 7
      %v3143 = vshll.u32 %v2780, 16
      %v3145 = vor.u32 %v3142, %v3143
      %v3146 = vsel %vm327, %v3138, %v3145
      %v3147 = vrot.slane %v3142, 4
      %v3149 = vshrl.u32 %v2781, 16
      %v3151 = vrot.slane %v3149, 7
      %v3152 = vshll.u32 %v2781, 16
      %v3154 = vor.u32 %v3151, %v3152
      %v3155 = vsel %vm327, %v3147, %v3154
      %v3156 = vrot.slane %v3151, 4
      %v3158 = vshrl.u32 %v2782, 16
      %v3160 = vrot.slane %v3158, 7
      %v3161 = vshll.u32 %v2782, 16
      %v3163 = vor.u32 %v3160, %v3161
      %v3164 = vsel %vm327, %v3156, %v3163
      %v3165 = vrot.slane %v3160, 4
      %v3167 = vshrl.u32 %v2783, 16
      %v3169 = vrot.slane %v3167, 7
      %v3170 = vshll.u32 %v2783, 16
      %v3172 = vor.u32 %v3169, %v3170
      %v3173 = vsel %vm327, %v3165, %v3172
      %v3217 = vsel %vm2788, %v2315, %v2795
      %v3218 = vsel %vm2788, %v239, %v2804
      %v3219 = vsel %vm2788, %v240, %v2813
      %v3220 = vsel %vm2788, %v241, %v2822
      %v3221 = vsel %vm2788, %v242, %v2831
      %v3222 = vsel %vm2788, %v243, %v2840
      %v3223 = vsel %vm2788, %v244, %v2849
      %v3224 = vsel %vm2788, %v245, %v2858
      %v3225 = vsel %vm2788, %v246, %v2867
      %v3226 = vsel %vm2788, %v247, %v2876
      %v3227 = vsel %vm2788, %v248, %v2885
      %v3228 = vsel %vm2788, %v249, %v2894
      %v3229 = vsel %vm2788, %v250, %v2903
      %v3230 = vsel %vm2788, %v251, %v2912
      %v3231 = vsel %vm2788, %v252, %v2921
      %v3232 = vsel %vm2788, %v253, %v2930
      %v3233 = vsel %vm2788, %v254, %v2939
      %v3234 = vsel %vm2788, %v255, %v2948
      %v3235 = vsel %vm2788, %v256, %v2957
      %v3236 = vsel %vm2788, %v257, %v2966
      %v3237 = vsel %vm2788, %v258, %v2975
      %v3238 = vsel %vm2788, %v259, %v2984
      %v3239 = vsel %vm2788, %v260, %v2993
      %v3240 = vsel %vm2788, %v261, %v3002
      %v3241 = vsel %vm2788, %v262, %v3011
      %v3242 = vsel %vm2788, %v263, %v3020
      %v3243 = vsel %vm2788, %v264, %v3029
      %v3244 = vsel %vm2788, %v265, %v3038
      %v3245 = vsel %vm2788, %v266, %v3047
      %v3246 = vsel %vm2788, %v267, %v3056
      %v3247 = vsel %vm2788, %v268, %v3065
      %v3248 = vsel %vm2788, %v269, %v3074
      %v3249 = vsel %vm2788, %v270, %v3083
      %v3250 = vsel %vm2788, %v271, %v3092
      %v3251 = vsel %vm2788, %v272, %v3101
      %v3252 = vsel %vm2788, %v273, %v3110
      %v3253 = vsel %vm2788, %v274, %v3119
      %v3254 = vsel %vm2788, %v802, %v3128
      %v3255 = vsel %vm2788, %v1278, %v3137
      %v3256 = vsel %vm2788, %v1279, %v3146
      %v3257 = vsel %vm2788, %v2265, %v3155
      %v3258 = vsel %vm2788, %v2266, %v3164
      %v3259 = vsel %vm2788, %v2787, %v3173
      %v3260 = vld [vmem:[%s1] sm:$0xf]
      %v3261 = vld [vmem:[%s1 + $0x4] sm:$0xf]
      %v3262 = vld [vmem:[%s1 + $0x8] sm:$0xf]
      %v3263 = vld [vmem:[%s1 + $0xc] sm:$0xf]
      %v3264 = vld [vmem:[%s1 + $0x10] sm:$0xf]
      %v3265 = vld [vmem:[%s1 + $0x14] sm:$0xf]
      %v3266 = vld [vmem:[%s1 + $0x18] sm:$0xf]
      %v3267 = vld [vmem:[%s1 + $0x1c] sm:$0xf]
      %v3268 = vld [vmem:[%s1 + $0x20] sm:$0xf]
      %v3269 = vld [vmem:[%s1 + $0x24] sm:$0xf]
      %v3270 = vld [vmem:[%s1 + $0x28] sm:$0xf]
      %v3271 = vld [vmem:[%s1 + $0x2c] sm:$0xf]
      %v3272 = vld [vmem:[%s1 + $0x30] sm:$0xf]
      %v3273 = vld [vmem:[%s1 + $0x34] sm:$0xf]
      %v3274 = vld [vmem:[%s1 + $0x38] sm:$0xf]
      %v3275 = vld [vmem:[%s1 + $0x3c] sm:$0xf]
      %v3276 = vld [vmem:[%s2] sm:$0x1]
      %v3278 = vlaneseq
      %v3279 = vshrl.u32 %v3278, 7
      %v3280 = vsub.s32 0, %v3279
      %v3281 = vrot.slane %v3276, %v3280
      %v3326 = vunpack.c.l.b16 %v3217
      %v3327 = vunpack.c.l.b16 %v3218
      %v3328 = vunpack.c.l.b16 %v3219
      %v3329 = vunpack.c.l.b16 %v3220
      %v3330 = vunpack.c.l.b16 %v3221
      %v3331 = vunpack.c.l.b16 %v3222
      %v3332 = vunpack.c.l.b16 %v3223
      %v3333 = vunpack.c.l.b16 %v3224
      %v3334 = vunpack.c.l.b16 %v3225
      %v3335 = vunpack.c.l.b16 %v3226
      %v3336 = vunpack.c.l.b16 %v3227
      %v3337 = vunpack.c.l.b16 %v3228
      %v3338 = vunpack.c.l.b16 %v3229
      %v3339 = vunpack.c.l.b16 %v3230
      %v3340 = vunpack.c.l.b16 %v3231
      %v3341 = vunpack.c.l.b16 %v3232
      %v3342 = vunpack.c.l.b16 %v3233
      %v3343 = vunpack.c.l.b16 %v3234
      %v3344 = vunpack.c.l.b16 %v3235
      %v3345 = vunpack.c.l.b16 %v3236
      %v3346 = vunpack.c.l.b16 %v3237
      %v3347 = vunpack.c.l.b16 %v3238
      %v3348 = vunpack.c.l.b16 %v3239
      %v3349 = vunpack.c.l.b16 %v3240
      %v3350 = vunpack.c.l.b16 %v3241
      %v3351 = vunpack.c.l.b16 %v3242
      %v3352 = vunpack.c.l.b16 %v3243
      %v3353 = vunpack.c.l.b16 %v3244
      %v3354 = vunpack.c.l.b16 %v3245
      %v3355 = vunpack.c.l.b16 %v3246
      %v3356 = vunpack.c.l.b16 %v3247
      %v3357 = vunpack.c.l.b16 %v3248
      %v3358 = vunpack.c.l.b16 %v3249
      %v3359 = vunpack.c.l.b16 %v3250
      %v3360 = vunpack.c.l.b16 %v3251
      %v3361 = vunpack.c.l.b16 %v3252
      %v3362 = vunpack.c.l.b16 %v3253
      %v3363 = vunpack.c.l.b16 %v3254
      %v3364 = vunpack.c.l.b16 %v3255
      %v3365 = vunpack.c.l.b16 %v3256
      %v3366 = vunpack.c.l.b16 %v3257
      %v3367 = vunpack.c.l.b16 %v3258
      %v3368 = vunpack.c.l.b16 %v3259
      %v3369 = vpack.c.b16 %v3327, %v3326
      %v3370 = vpack.c.b16 %v3329, %v3328
      %v3371 = vpack.c.b16 %v3331, %v3330
      %v3372 = vpack.c.b16 %v3333, %v3332
      %v3373 = vpack.c.b16 %v3335, %v3334
      %v3374 = vpack.c.b16 %v3337, %v3336
      %v3375 = vpack.c.b16 %v3339, %v3338
      %v3376 = vpack.c.b16 %v3341, %v3340
      %v3377 = vpack.c.b16 %v3343, %v3342
      %v3378 = vpack.c.b16 %v3345, %v3344
      %v3379 = vpack.c.b16 %v3347, %v3346
      %v3380 = vpack.c.b16 %v3349, %v3348
      %v3381 = vpack.c.b16 %v3351, %v3350
      %v3382 = vpack.c.b16 %v3353, %v3352
      %v3383 = vpack.c.b16 %v3355, %v3354
      %v3384 = vpack.c.b16 %v3357, %v3356
      %v3385 = vpack.c.b16 %v3359, %v3358
      %v3386 = vpack.c.b16 %v3361, %v3360
      %v3387 = vpack.c.b16 %v3363, %v3362
      %v3388 = vpack.c.b16 %v3365, %v3364
      %v3389 = vpack.c.b16 %v3367, %v3366
      %v3390 = vpack.c.b16 %v3368, %v3368
      %vm3391 = vsmask.f32 6400
      %v3393 = vshrl.u32 %v3369, 16
      %v3395 = vrot.slane %v3393, 1
      %v3396 = vshll.u32 %v3369, 16
      %v3398 = vrot.slane %v3396, 2
      %v3399 = vor.u32 %v3395, %v3398
      %v3401 = vshrl.u32 %v3370, 16
      %v3403 = vrot.slane %v3401, 1
      %v3404 = vshll.u32 %v3370, 16
      %v3406 = vrot.slane %v3404, 2
      %v3407 = vor.u32 %v3403, %v3406
      %v3408 = vsel %vm3391, %v3399, %v3407
      %v3410 = vshrl.u32 %v3371, 16
      %v3412 = vrot.slane %v3410, 1
      %v3413 = vshll.u32 %v3371, 16
      %v3415 = vrot.slane %v3413, 2
      %v3416 = vor.u32 %v3412, %v3415
      %v3417 = vsel %vm3391, %v3407, %v3416
      %v3419 = vshrl.u32 %v3372, 16
      %v3421 = vrot.slane %v3419, 1
      %v3422 = vshll.u32 %v3372, 16
      %v3424 = vrot.slane %v3422, 2
      %v3425 = vor.u32 %v3421, %v3424
      %v3426 = vsel %vm3391, %v3416, %v3425
      %v3428 = vshrl.u32 %v3373, 16
      %v3430 = vrot.slane %v3428, 1
      %v3431 = vshll.u32 %v3373, 16
      %v3433 = vrot.slane %v3431, 2
      %v3434 = vor.u32 %v3430, %v3433
      %v3435 = vsel %vm3391, %v3425, %v3434
      %v3437 = vshrl.u32 %v3374, 16
      %v3439 = vrot.slane %v3437, 1
      %v3440 = vshll.u32 %v3374, 16
      %v3442 = vrot.slane %v3440, 2
      %v3443 = vor.u32 %v3439, %v3442
      %v3444 = vsel %vm3391, %v3434, %v3443
      %v3446 = vshrl.u32 %v3375, 16
      %v3448 = vrot.slane %v3446, 1
      %v3449 = vshll.u32 %v3375, 16
      %v3451 = vrot.slane %v3449, 2
      %v3452 = vor.u32 %v3448, %v3451
      %v3453 = vsel %vm3391, %v3443, %v3452
      %v3455 = vshrl.u32 %v3376, 16
      %v3457 = vrot.slane %v3455, 1
      %v3458 = vshll.u32 %v3376, 16
      %v3460 = vrot.slane %v3458, 2
      %v3461 = vor.u32 %v3457, %v3460
      %v3462 = vsel %vm3391, %v3452, %v3461
      %v3464 = vshrl.u32 %v3377, 16
      %v3466 = vrot.slane %v3464, 1
      %v3467 = vshll.u32 %v3377, 16
      %v3469 = vrot.slane %v3467, 2
      %v3470 = vor.u32 %v3466, %v3469
      %v3471 = vsel %vm3391, %v3461, %v3470
      %v3473 = vshrl.u32 %v3378, 16
      %v3475 = vrot.slane %v3473, 1
      %v3476 = vshll.u32 %v3378, 16
      %v3478 = vrot.slane %v3476, 2
      %v3479 = vor.u32 %v3475, %v3478
      %v3480 = vsel %vm3391, %v3470, %v3479
      %v3482 = vshrl.u32 %v3379, 16
      %v3484 = vrot.slane %v3482, 1
      %v3485 = vshll.u32 %v3379, 16
      %v3487 = vrot.slane %v3485, 2
      %v3488 = vor.u32 %v3484, %v3487
      %v3489 = vsel %vm3391, %v3479, %v3488
      %v3491 = vshrl.u32 %v3380, 16
      %v3493 = vrot.slane %v3491, 1
      %v3494 = vshll.u32 %v3380, 16
      %v3496 = vrot.slane %v3494, 2
      %v3497 = vor.u32 %v3493, %v3496
      %v3498 = vsel %vm3391, %v3488, %v3497
      %v3500 = vshrl.u32 %v3381, 16
      %v3502 = vrot.slane %v3500, 1
      %v3503 = vshll.u32 %v3381, 16
      %v3505 = vrot.slane %v3503, 2
      %v3506 = vor.u32 %v3502, %v3505
      %v3507 = vsel %vm3391, %v3497, %v3506
      %v3509 = vshrl.u32 %v3382, 16
      %v3511 = vrot.slane %v3509, 1
      %v3512 = vshll.u32 %v3382, 16
      %v3514 = vrot.slane %v3512, 2
      %v3515 = vor.u32 %v3511, %v3514
      %v3516 = vsel %vm3391, %v3506, %v3515
      %v3518 = vshrl.u32 %v3383, 16
      %v3520 = vrot.slane %v3518, 1
      %v3521 = vshll.u32 %v3383, 16
      %v3523 = vrot.slane %v3521, 2
      %v3524 = vor.u32 %v3520, %v3523
      %v3525 = vsel %vm3391, %v3515, %v3524
      %v3527 = vshrl.u32 %v3384, 16
      %v3529 = vrot.slane %v3527, 1
      %v3530 = vshll.u32 %v3384, 16
      %v3532 = vrot.slane %v3530, 2
      %v3533 = vor.u32 %v3529, %v3532
      %v3534 = vsel %vm3391, %v3524, %v3533
      %v3536 = vshrl.u32 %v3385, 16
      %v3538 = vrot.slane %v3536, 1
      %v3539 = vshll.u32 %v3385, 16
      %v3541 = vrot.slane %v3539, 2
      %v3542 = vor.u32 %v3538, %v3541
      %v3543 = vsel %vm3391, %v3533, %v3542
      %v3545 = vshrl.u32 %v3386, 16
      %v3547 = vrot.slane %v3545, 1
      %v3548 = vshll.u32 %v3386, 16
      %v3550 = vrot.slane %v3548, 2
      %v3551 = vor.u32 %v3547, %v3550
      %v3552 = vsel %vm3391, %v3542, %v3551
      %v3554 = vshrl.u32 %v3387, 16
      %v3556 = vrot.slane %v3554, 1
      %v3557 = vshll.u32 %v3387, 16
      %v3559 = vrot.slane %v3557, 2
      %v3560 = vor.u32 %v3556, %v3559
      %v3561 = vsel %vm3391, %v3551, %v3560
      %v3563 = vshrl.u32 %v3388, 16
      %v3565 = vrot.slane %v3563, 1
      %v3566 = vshll.u32 %v3388, 16
      %v3568 = vrot.slane %v3566, 2
      %v3569 = vor.u32 %v3565, %v3568
      %v3570 = vsel %vm3391, %v3560, %v3569
      %v3572 = vshrl.u32 %v3389, 16
      %v3574 = vrot.slane %v3572, 1
      %v3575 = vshll.u32 %v3389, 16
      %v3577 = vrot.slane %v3575, 2
      %v3578 = vor.u32 %v3574, %v3577
      %v3579 = vsel %vm3391, %v3569, %v3578
      %v3581 = vshrl.u32 %v3390, 16
      %v3583 = vrot.slane %v3581, 1
      %v3584 = vshll.u32 %v3390, 16
      %v3586 = vrot.slane %v3584, 2
      %v3587 = vor.u32 %v3583, %v3586
      %v3588 = vsel %vm3391, %v3578, %v3587
      %v3626 = vunpack.c.l.b16 %v3260
      %v3627 = vunpack.c.l.b16 %v3261
      %v3628 = vunpack.c.l.b16 %v3262
      %v3629 = vunpack.c.l.b16 %v3263
      %v3630 = vunpack.c.l.b16 %v3264
      %v3631 = vunpack.c.l.b16 %v3265
      %v3632 = vunpack.c.l.b16 %v3266
      %v3633 = vunpack.c.l.b16 %v3267
      %v3634 = vunpack.c.l.b16 %v3268
      %v3635 = vunpack.c.l.b16 %v3269
      %v3636 = vunpack.c.l.b16 %v3270
      %v3637 = vunpack.c.l.b16 %v3271
      %v3638 = vunpack.c.l.b16 %v3272
      %v3639 = vunpack.c.l.b16 %v3273
      %v3640 = vunpack.c.l.b16 %v3274
      %v3641 = vunpack.c.l.b16 %v3275
      %v3642 = vpack.c.b16 %v3627, %v3626
      %v3643 = vpack.c.b16 %v3629, %v3628
      %v3644 = vpack.c.b16 %v3631, %v3630
      %v3645 = vpack.c.b16 %v3633, %v3632
      %v3646 = vpack.c.b16 %v3635, %v3634
      %v3647 = vpack.c.b16 %v3637, %v3636
      %v3648 = vpack.c.b16 %v3639, %v3638
      %v3649 = vpack.c.b16 %v3641, %v3640
      %3658 = vmatprep.subr.bf16.mxu0 0
      %3659 = vmatpush1.bf16.msra.mxu0 %v3642
      %3660 = vmatprep.subr.bf16.mxu0 0
      %3661 = vmatpush1.bf16.msra.mxu0 %v3643
      %3662 = vmatprep.subr.bf16.mxu0 0
      %3663 = vmatpush1.bf16.msra.mxu0 %v3644
      %3664 = vmatprep.subr.bf16.mxu0 0
      %3665 = vmatpush1.bf16.msra.mxu0 %v3645
      %3666 = vmatprep.subr.bf16.mxu0 0
      %3667 = vmatpush1.bf16.msra.mxu0 %v3646
      %3668 = vmatprep.subr.bf16.mxu0 0
      %3669 = vmatpush1.bf16.msra.mxu0 %v3647
      %3670 = vmatprep.subr.bf16.mxu0 0
      %3671 = vmatpush1.bf16.msra.mxu0 %v3648
      %3672 = vmatprep.subr.bf16.mxu0 0
      %3673 = vmatpush1.bf16.msra.mxu0 %v3649
      %3674 = vmatprep.subr.bf16.mxu0 0
      %3675 = vmatpush1.bf16.msra.mxu0 0
      %3676 = vmatprep.subr.bf16.mxu0 0
      %3677 = vmatpush1.bf16.msra.mxu0 0
      %3678 = vmatprep.subr.bf16.mxu0 0
      %3679 = vmatpush1.bf16.msra.mxu0 0
      %3680 = vmatprep.subr.bf16.mxu0 0
      %3681 = vmatpush1.bf16.msra.mxu0 0
      %3682 = vmatprep.subr.bf16.mxu0 0
      %3683 = vmatpush1.bf16.msra.mxu0 0
      %3684 = vmatprep.subr.bf16.mxu0 0
      %3685 = vmatpush1.bf16.msra.mxu0 0
      %3686 = vmatprep.subr.bf16.mxu0 0
      %3687 = vmatpush1.bf16.msra.mxu0 0
      %3688 = vmatprep.subr.bf16.mxu0 0
      %3689 = vmatpush1.bf16.msra.mxu0 0
      %3690 = vmatprep.mubr.bf16.mxu0 0
      %3691 = vmatmul.mubr.bf16.gmra.mrb[0].mxu0 %v3408
      %v3692 = vpop.f32.mrb[0].mxu0
      %v3693 = vadd.f32 %v3281, %v3692
      %v3694 = vpop.f32.mrb[0].mxu0
      %v3695 = vpop.f32.mrb[0].mxu0
      %v3696 = vadd.f32 %v3281, %v3695
      %v3697 = vpop.f32.mrb[0].mxu0
      %3698 = vmatprep.mubr.bf16.mxu0 0
      %3699 = vmatmul.mubr.bf16.gmra.mrb[0].mxu0 %v3417
      %v3700 = vpop.f32.mrb[0].mxu0
      %v3701 = vadd.f32 %v3281, %v3700
      %v3702 = vpop.f32.mrb[0].mxu0
      %v3703 = vpop.f32.mrb[0].mxu0
      %v3704 = vadd.f32 %v3281, %v3703
      %v3705 = vpop.f32.mrb[0].mxu0
      %3706 = vmatprep.mubr.bf16.mxu0 0
      %3707 = vmatmul.mubr.bf16.gmra.mrb[0].mxu0 %v3426
      %v3708 = vpop.f32.mrb[0].mxu0
      %v3709 = vadd.f32 %v3281, %v3708
      %v3710 = vpop.f32.mrb[0].mxu0
      %v3711 = vpop.f32.mrb[0].mxu0
      %v3712 = vadd.f32 %v3281, %v3711
      %v3713 = vpop.f32.mrb[0].mxu0
      %3714 = vmatprep.mubr.bf16.mxu0 0
      %3715 = vmatmul.mubr.bf16.gmra.mrb[0].mxu0 %v3435
      %v3716 = vpop.f32.mrb[0].mxu0
      %v3717 = vadd.f32 %v3281, %v3716
      %v3718 = vpop.f32.mrb[0].mxu0
      %v3719 = vpop.f32.mrb[0].mxu0
      %v3720 = vadd.f32 %v3281, %v3719
      %v3721 = vpop.f32.mrb[0].mxu0
      %3722 = vmatprep.mubr.bf16.mxu0 0
      %3723 = vmatmul.mubr.bf16.gmra.mrb[0].mxu0 %v3444
      %v3724 = vpop.f32.mrb[0].mxu0
      %v3725 = vadd.f32 %v3281, %v3724
      %v3726 = vpop.f32.mrb[0].mxu0
      %v3727 = vpop.f32.mrb[0].mxu0
      %v3728 = vadd.f32 %v3281, %v3727
      %v3729 = vpop.f32.mrb[0].mxu0
      %3730 = vmatprep.mubr.bf16.mxu0 0
      %3731 = vmatmul.mubr.bf16.gmra.mrb[0].mxu0 %v3453
      %v3732 = vpop.f32.mrb[0].mxu0
      %v3733 = vadd.f32 %v3281, %v3732
      %v3734 = vpop.f32.mrb[0].mxu0
      %v3735 = vpop.f32.mrb[0].mxu0
      %v3736 = vadd.f32 %v3281, %v3735
      %v3737 = vpop.f32.mrb[0].mxu0
      %3738 = vmatprep.mubr.bf16.mxu0 0
      %3739 = vmatmul.mubr.bf16.gmra.mrb[0].mxu0 %v3462
      %v3740 = vpop.f32.mrb[0].mxu0
      %v3741 = vadd.f32 %v3281, %v3740
      %v3742 = vpop.f32.mrb[0].mxu0
      %v3743 = vpop.f32.mrb[0].mxu0
      %v3744 = vadd.f32 %v3281, %v3743
      %v3745 = vpop.f32.mrb[0].mxu0
      %3746 = vmatprep.mubr.bf16.mxu0 0
      %3747 = vmatmul.mubr.bf16.gmra.mrb[0].mxu0 %v3471
      %v3748 = vpop.f32.mrb[0].mxu0
      %v3749 = vadd.f32 %v3281, %v3748
      %v3750 = vpop.f32.mrb[0].mxu0
      %v3751 = vpop.f32.mrb[0].mxu0
      %v3752 = vadd.f32 %v3281, %v3751
      %v3753 = vpop.f32.mrb[0].mxu0
      %3754 = vmatprep.mubr.bf16.mxu0 0
      %3755 = vmatmul.mubr.bf16.gmra.mrb[0].mxu0 %v3480
      %v3756 = vpop.f32.mrb[0].mxu0
      %v3757 = vadd.f32 %v3281, %v3756
      %v3758 = vpop.f32.mrb[0].mxu0
      %v3759 = vpop.f32.mrb[0].mxu0
      %v3760 = vadd.f32 %v3281, %v3759
      %v3761 = vpop.f32.mrb[0].mxu0
      %3762 = vmatprep.mubr.bf16.mxu0 0
      %3763 = vmatmul.mubr.bf16.gmra.mrb[0].mxu0 %v3489
      %v3764 = vpop.f32.mrb[0].mxu0
      %v3765 = vadd.f32 %v3281, %v3764
      %v3766 = vpop.f32.mrb[0].mxu0
      %v3767 = vpop.f32.mrb[0].mxu0
      %v3768 = vadd.f32 %v3281, %v3767
      %v3769 = vpop.f32.mrb[0].mxu0
      %3770 = vmatprep.mubr.bf16.mxu0 0
      %3771 = vmatmul.mubr.bf16.gmra.mrb[0].mxu0 %v3498
      %v3772 = vpop.f32.mrb[0].mxu0
      %v3773 = vadd.f32 %v3281, %v3772
      %v3774 = vpop.f32.mrb[0].mxu0
      %v3775 = vpop.f32.mrb[0].mxu0
      %v3776 = vadd.f32 %v3281, %v3775
      %v3777 = vpop.f32.mrb[0].mxu0
      %3778 = vmatprep.mubr.bf16.mxu0 0
      %3779 = vmatmul.mubr.bf16.gmra.mrb[0].mxu0 %v3507
      %v3780 = vpop.f32.mrb[0].mxu0
      %v3781 = vadd.f32 %v3281, %v3780
      %v3782 = vpop.f32.mrb[0].mxu0
      %v3783 = vpop.f32.mrb[0].mxu0
      %v3784 = vadd.f32 %v3281, %v3783
      %v3785 = vpop.f32.mrb[0].mxu0
      %3786 = vmatprep.mubr.bf16.mxu0 0
      %3787 = vmatmul.mubr.bf16.gmra.mrb[0].mxu0 %v3516
      %v3788 = vpop.f32.mrb[0].mxu0
      %v3789 = vadd.f32 %v3281, %v3788
      %v3790 = vpop.f32.mrb[0].mxu0
      %v3791 = vpop.f32.mrb[0].mxu0
      %v3792 = vadd.f32 %v3281, %v3791
      %v3793 = vpop.f32.mrb[0].mxu0
      %3794 = vmatprep.mubr.bf16.mxu0 0
      %3795 = vmatmul.mubr.bf16.gmra.mrb[0].mxu0 %v3525
      %v3796 = vpop.f32.mrb[0].mxu0
      %v3797 = vadd.f32 %v3281, %v3796
      %v3798 = vpop.f32.mrb[0].mxu0
      %v3799 = vpop.f32.mrb[0].mxu0
      %v3800 = vadd.f32 %v3281, %v3799
      %v3801 = vpop.f32.mrb[0].mxu0
      %3802 = vmatprep.mubr.bf16.mxu0 0
      %3803 = vmatmul.mubr.bf16.gmra.mrb[0].mxu0 %v3534
      %v3804 = vpop.f32.mrb[0].mxu0
      %v3805 = vadd.f32 %v3281, %v3804
      %v3806 = vpop.f32.mrb[0].mxu0
      %v3807 = vpop.f32.mrb[0].mxu0
      %v3808 = vadd.f32 %v3281, %v3807
      %v3809 = vpop.f32.mrb[0].mxu0
      %3810 = vmatprep.mubr.bf16.mxu0 0
      %3811 = vmatmul.mubr.bf16.gmra.mrb[0].mxu0 %v3543
      %v3812 = vpop.f32.mrb[0].mxu0
      %v3813 = vadd.f32 %v3281, %v3812
      %v3814 = vpop.f32.mrb[0].mxu0
      %v3815 = vpop.f32.mrb[0].mxu0
      %v3816 = vadd.f32 %v3281, %v3815
      %v3817 = vpop.f32.mrb[0].mxu0
      %3818 = vmatprep.mubr.bf16.mxu0 0
      %3819 = vmatmul.mubr.bf16.gmra.mrb[0].mxu0 %v3552
      %v3820 = vpop.f32.mrb[0].mxu0
      %v3821 = vadd.f32 %v3281, %v3820
      %v3822 = vpop.f32.mrb[0].mxu0
      %v3823 = vpop.f32.mrb[0].mxu0
      %v3824 = vadd.f32 %v3281, %v3823
      %v3825 = vpop.f32.mrb[0].mxu0
      %3826 = vmatprep.mubr.bf16.mxu0 0
      %3827 = vmatmul.mubr.bf16.gmra.mrb[0].mxu0 %v3561
      %v3828 = vpop.f32.mrb[0].mxu0
      %v3829 = vadd.f32 %v3281, %v3828
      %v3830 = vpop.f32.mrb[0].mxu0
      %v3831 = vpop.f32.mrb[0].mxu0
      %v3832 = vadd.f32 %v3281, %v3831
      %v3833 = vpop.f32.mrb[0].mxu0
      %3834 = vmatprep.mubr.bf16.mxu0 0
      %3835 = vmatmul.mubr.bf16.gmra.mrb[0].mxu0 %v3570
      %v3836 = vpop.f32.mrb[0].mxu0
      %v3837 = vadd.f32 %v3281, %v3836
      %v3838 = vpop.f32.mrb[0].mxu0
      %v3839 = vpop.f32.mrb[0].mxu0
      %v3840 = vadd.f32 %v3281, %v3839
      %v3841 = vpop.f32.mrb[0].mxu0
      %3842 = vmatprep.mubr.bf16.mxu0 0
      %3843 = vmatmul.mubr.bf16.gmra.mrb[0].mxu0 %v3579
      %v3844 = vpop.f32.mrb[0].mxu0
      %v3845 = vadd.f32 %v3281, %v3844
      %v3846 = vpop.f32.mrb[0].mxu0
      %v3847 = vpop.f32.mrb[0].mxu0
      %v3848 = vadd.f32 %v3281, %v3847
      %v3849 = vpop.f32.mrb[0].mxu0
      %3850 = vmatprep.mubr.bf16.mxu0 0
      %3851 = vmatmul.mubr.bf16.gmra.mrb[0].mxu0 %v3588
      %v3852 = vpop.f32.mrb[0].mxu0
      %v3853 = vadd.f32 %v3281, %v3852
      %v3854 = vpop.f32.mrb[0].mxu0
      %v3855 = vpop.f32.mrb[0].mxu0
      %v3856 = vadd.f32 %v3281, %v3855
      %v3857 = vpop.f32.mrb[0].mxu0
      %3858 = vdwg.mxu0
      %v3859 = vmax.f32 %v3693, 0.0
      %v3860 = vmax.f32 %v3696, 0.0
      %v3861 = vmax.f32 %v3701, 0.0
      %v3862 = vmax.f32 %v3704, 0.0
      %v3863 = vmax.f32 %v3709, 0.0
      %v3864 = vmax.f32 %v3712, 0.0
      %v3865 = vmax.f32 %v3717, 0.0
      %v3866 = vmax.f32 %v3720, 0.0
      %v3867 = vmax.f32 %v3725, 0.0
      %v3868 = vmax.f32 %v3728, 0.0
      %v3869 = vmax.f32 %v3733, 0.0
      %v3870 = vmax.f32 %v3736, 0.0
      %v3871 = vmax.f32 %v3741, 0.0
      %v3872 = vmax.f32 %v3744, 0.0
      %v3873 = vmax.f32 %v3749, 0.0
      %v3874 = vmax.f32 %v3752, 0.0
      %v3875 = vmax.f32 %v3757, 0.0
      %v3876 = vmax.f32 %v3760, 0.0
      %v3877 = vmax.f32 %v3765, 0.0
      %v3878 = vmax.f32 %v3768, 0.0
      %v3879 = vmax.f32 %v3773, 0.0
      %v3880 = vmax.f32 %v3776, 0.0
      %v3881 = vmax.f32 %v3781, 0.0
      %v3882 = vmax.f32 %v3784, 0.0
      %v3883 = vmax.f32 %v3789, 0.0
      %v3884 = vmax.f32 %v3792, 0.0
      %v3885 = vmax.f32 %v3797, 0.0
      %v3886 = vmax.f32 %v3800, 0.0
      %v3887 = vmax.f32 %v3805, 0.0
      %v3888 = vmax.f32 %v3808, 0.0
      %v3889 = vmax.f32 %v3813, 0.0
      %v3890 = vmax.f32 %v3816, 0.0
      %v3891 = vmax.f32 %v3821, 0.0
      %v3892 = vmax.f32 %v3824, 0.0
      %v3893 = vmax.f32 %v3829, 0.0
      %v3894 = vmax.f32 %v3832, 0.0
      %v3895 = vmax.f32 %v3837, 0.0
      %v3896 = vmax.f32 %v3840, 0.0
      %v3897 = vmax.f32 %v3845, 0.0
      %v3898 = vmax.f32 %v3848, 0.0
      %v3899 = vmax.f32 %v3853, 0.0
      %v3900 = vmax.f32 %v3856, 0.0
      %v3901 = vlaneseq
      %v3902 = vshrl.u32 %v3901, 7
      %v3903 = vadd.s32 %v3902, 8
      %v3904 = vadd.s32 %v3902, 16
      %v3905 = vadd.s32 %v3902, 24
      %v3906 = vadd.s32 %v3902, 32
      %v3907 = vadd.s32 %v3902, 40
      %v3908 = vadd.s32 %v3902, 48
      %v3909 = vadd.s32 %v3902, 56
      %v3910 = vadd.s32 %v3902, 64
      %v3911 = vadd.s32 %v3902, 72
      %v3912 = vadd.s32 %v3902, 80
      %v3913 = vadd.s32 %v3902, 88
      %v3914 = vadd.s32 %v3902, 96
      %v3915 = vadd.s32 %v3902, 104
      %v3916 = vadd.s32 %v3902, 112
      %v3917 = vadd.s32 %v3902, 120
      %v3918 = vadd.s32 %v3902, 128
      %v3919 = vadd.s32 %v3902, 136
      %v3920 = vadd.s32 %v3902, 144
      %v3921 = vadd.s32 %v3902, 152
      %v3922 = vadd.s32 %v3902, 160
      %v3923 = vadd.s32 %v3902, 168
      %v3924 = vadd.s32 %v3902, 176
      %v3925 = vadd.s32 %v3902, 184
      %v3926 = vadd.s32 %v3902, 192
      %v3927 = vadd.s32 %v3902, 200
      %v3928 = vadd.s32 %v3902, 208
      %v3929 = vadd.s32 %v3902, 216
      %v3930 = vadd.s32 %v3902, 224
      %v3931 = vadd.s32 %v3902, 232
      %v3932 = vadd.s32 %v3902, 240
      %v3933 = vadd.s32 %v3902, 248
      %v3934 = vadd.s32 %v3902, 256
      %v3935 = vadd.s32 %v3902, 264
      %v3936 = vadd.s32 %v3902, 272
      %v3937 = vadd.s32 %v3902, 280
      %v3938 = vadd.s32 %v3902, 288
      %v3939 = vadd.s32 %v3902, 296
      %v3940 = vadd.s32 %v3902, 304
      %v3941 = vadd.s32 %v3902, 312
      %v3942 = vadd.s32 %v3902, 320
      %v3943 = vadd.s32 %v3902, 328
      %v3944 = vcvt.s32.f32 %v3902
      %v3945 = vcvt.s32.f32 %v3903
      %v3946 = vcvt.s32.f32 %v3904
      %v3947 = vcvt.s32.f32 %v3905
      %v3948 = vcvt.s32.f32 %v3906
      %v3949 = vcvt.s32.f32 %v3907
      %v3950 = vcvt.s32.f32 %v3908
      %v3951 = vcvt.s32.f32 %v3909
      %v3952 = vcvt.s32.f32 %v3910
      %v3953 = vcvt.s32.f32 %v3911
      %v3954 = vcvt.s32.f32 %v3912
      %v3955 = vcvt.s32.f32 %v3913
      %v3956 = vcvt.s32.f32 %v3914
      %v3957 = vcvt.s32.f32 %v3915
      %v3958 = vcvt.s32.f32 %v3916
      %v3959 = vcvt.s32.f32 %v3917
      %v3960 = vcvt.s32.f32 %v3918
      %v3961 = vcvt.s32.f32 %v3919
      %v3962 = vcvt.s32.f32 %v3920
      %v3963 = vcvt.s32.f32 %v3921
      %v3964 = vcvt.s32.f32 %v3922
      %v3965 = vcvt.s32.f32 %v3923
      %v3966 = vcvt.s32.f32 %v3924
      %v3967 = vcvt.s32.f32 %v3925
      %v3968 = vcvt.s32.f32 %v3926
      %v3969 = vcvt.s32.f32 %v3927
      %v3970 = vcvt.s32.f32 %v3928
      %v3971 = vcvt.s32.f32 %v3929
      %v3972 = vcvt.s32.f32 %v3930
      %v3973 = vcvt.s32.f32 %v3931
      %v3974 = vcvt.s32.f32 %v3932
      %v3975 = vcvt.s32.f32 %v3933
      %v3976 = vcvt.s32.f32 %v3934
      %v3977 = vcvt.s32.f32 %v3935
      %v3978 = vcvt.s32.f32 %v3936
      %v3979 = vcvt.s32.f32 %v3937
      %v3980 = vcvt.s32.f32 %v3938
      %v3981 = vcvt.s32.f32 %v3939
      %v3982 = vcvt.s32.f32 %v3940
      %v3983 = vcvt.s32.f32 %v3941
      %v3984 = vcvt.s32.f32 %v3942
      %v3985 = vcvt.s32.f32 %v3943
      %v3986 = vadd.f32 %v3944, 0.5
      %v3987 = vadd.f32 %v3945, 0.5
      %v3988 = vadd.f32 %v3946, 0.5
      %v3989 = vadd.f32 %v3947, 0.5
      %v3990 = vadd.f32 %v3948, 0.5
      %v3991 = vadd.f32 %v3949, 0.5
      %v3992 = vadd.f32 %v3950, 0.5
      %v3993 = vadd.f32 %v3951, 0.5
      %v3994 = vadd.f32 %v3952, 0.5
      %v3995 = vadd.f32 %v3953, 0.5
      %v3996 = vadd.f32 %v3954, 0.5
      %v3997 = vadd.f32 %v3955, 0.5
      %v3998 = vadd.f32 %v3956, 0.5
      %v3999 = vadd.f32 %v3957, 0.5
      %v4000 = vadd.f32 %v3958, 0.5
      %v4001 = vadd.f32 %v3959, 0.5
      %v4002 = vadd.f32 %v3960, 0.5
      %v4003 = vadd.f32 %v3961, 0.5
      %v4004 = vadd.f32 %v3962, 0.5
      %v4005 = vadd.f32 %v3963, 0.5
      %v4006 = vadd.f32 %v3964, 0.5
      %v4007 = vadd.f32 %v3965, 0.5
      %v4008 = vadd.f32 %v3966, 0.5
      %v4009 = vadd.f32 %v3967, 0.5
      %v4010 = vadd.f32 %v3968, 0.5
      %v4011 = vadd.f32 %v3969, 0.5
      %v4012 = vadd.f32 %v3970, 0.5
      %v4013 = vadd.f32 %v3971, 0.5
      %v4014 = vadd.f32 %v3972, 0.5
      %v4015 = vadd.f32 %v3973, 0.5
      %v4016 = vadd.f32 %v3974, 0.5
      %v4017 = vadd.f32 %v3975, 0.5
      %v4018 = vadd.f32 %v3976, 0.5
      %v4019 = vadd.f32 %v3977, 0.5
      %v4020 = vadd.f32 %v3978, 0.5
      %v4021 = vadd.f32 %v3979, 0.5
      %v4022 = vadd.f32 %v3980, 0.5
      %v4023 = vadd.f32 %v3981, 0.5
      %v4024 = vadd.f32 %v3982, 0.5
      %v4025 = vadd.f32 %v3983, 0.5
      %v4026 = vadd.f32 %v3984, 0.5
      %v4027 = vadd.f32 %v3985, 0.5
      %v4028 = vmul.f32 %v3986, 0.055555556
      %v4029 = vmul.f32 %v3987, 0.055555556
      %v4030 = vmul.f32 %v3988, 0.055555556
      %v4031 = vmul.f32 %v3989, 0.055555556
      %v4032 = vmul.f32 %v3990, 0.055555556
      %v4033 = vmul.f32 %v3991, 0.055555556
      %v4034 = vmul.f32 %v3992, 0.055555556
      %v4035 = vmul.f32 %v3993, 0.055555556
      %v4036 = vmul.f32 %v3994, 0.055555556
      %v4037 = vmul.f32 %v3995, 0.055555556
      %v4038 = vmul.f32 %v3996, 0.055555556
      %v4039 = vmul.f32 %v3997, 0.055555556
      %v4040 = vmul.f32 %v3998, 0.055555556
      %v4041 = vmul.f32 %v3999, 0.055555556
      %v4042 = vmul.f32 %v4000, 0.055555556
      %v4043 = vmul.f32 %v4001, 0.055555556
      %v4044 = vmul.f32 %v4002, 0.055555556
      %v4045 = vmul.f32 %v4003, 0.055555556
      %v4046 = vmul.f32 %v4004, 0.055555556
      %v4047 = vmul.f32 %v4005, 0.055555556
      %v4048 = vmul.f32 %v4006, 0.055555556
      %v4049 = vmul.f32 %v4007, 0.055555556
      %v4050 = vmul.f32 %v4008, 0.055555556
      %v4051 = vmul.f32 %v4009, 0.055555556
      %v4052 = vmul.f32 %v4010, 0.055555556
      %v4053 = vmul.f32 %v4011, 0.055555556
      %v4054 = vmul.f32 %v4012, 0.055555556
      %v4055 = vmul.f32 %v4013, 0.055555556
      %v4056 = vmul.f32 %v4014, 0.055555556
      %v4057 = vmul.f32 %v4015, 0.055555556
      %v4058 = vmul.f32 %v4016, 0.055555556
      %v4059 = vmul.f32 %v4017, 0.055555556
      %v4060 = vmul.f32 %v4018, 0.055555556
      %v4061 = vmul.f32 %v4019, 0.055555556
      %v4062 = vmul.f32 %v4020, 0.055555556
      %v4063 = vmul.f32 %v4021, 0.055555556
      %v4064 = vmul.f32 %v4022, 0.055555556
      %v4065 = vmul.f32 %v4023, 0.055555556
      %v4066 = vmul.f32 %v4024, 0.055555556
      %v4067 = vmul.f32 %v4025, 0.055555556
      %v4068 = vmul.f32 %v4026, 0.055555556
      %v4069 = vmul.f32 %v4027, 0.055555556
      %v4070 = vfloor.f32 %v4028
      %v4071 = vfloor.f32 %v4029
      %v4072 = vfloor.f32 %v4030
      %v4073 = vfloor.f32 %v4031
      %v4074 = vfloor.f32 %v4032
      %v4075 = vfloor.f32 %v4033
      %v4076 = vfloor.f32 %v4034
      %v4077 = vfloor.f32 %v4035
      %v4078 = vfloor.f32 %v4036
      %v4079 = vfloor.f32 %v4037
      %v4080 = vfloor.f32 %v4038
      %v4081 = vfloor.f32 %v4039
      %v4082 = vfloor.f32 %v4040
      %v4083 = vfloor.f32 %v4041
      %v4084 = vfloor.f32 %v4042
      %v4085 = vfloor.f32 %v4043
      %v4086 = vfloor.f32 %v4044
      %v4087 = vfloor.f32 %v4045
      %v4088 = vfloor.f32 %v4046
      %v4089 = vfloor.f32 %v4047
      %v4090 = vfloor.f32 %v4048
      %v4091 = vfloor.f32 %v4049
      %v4092 = vfloor.f32 %v4050
      %v4093 = vfloor.f32 %v4051
      %v4094 = vfloor.f32 %v4052
      %v4095 = vfloor.f32 %v4053
      %v4096 = vfloor.f32 %v4054
      %v4097 = vfloor.f32 %v4055
      %v4098 = vfloor.f32 %v4056
      %v4099 = vfloor.f32 %v4057
      %v4100 = vfloor.f32 %v4058
      %v4101 = vfloor.f32 %v4059
      %v4102 = vfloor.f32 %v4060
      %v4103 = vfloor.f32 %v4061
      %v4104 = vfloor.f32 %v4062
      %v4105 = vfloor.f32 %v4063
      %v4106 = vfloor.f32 %v4064
      %v4107 = vfloor.f32 %v4065
      %v4108 = vfloor.f32 %v4066
      %v4109 = vfloor.f32 %v4067
      %v4110 = vfloor.f32 %v4068
      %v4111 = vfloor.f32 %v4069
      %v4112 = vcvt.f32.s32.to.zero.pseudo %v4070
      %v4113 = vcvt.f32.s32.to.zero.pseudo %v4071
      %v4114 = vcvt.f32.s32.to.zero.pseudo %v4072
      %v4115 = vcvt.f32.s32.to.zero.pseudo %v4073
      %v4116 = vcvt.f32.s32.to.zero.pseudo %v4074
      %v4117 = vcvt.f32.s32.to.zero.pseudo %v4075
      %v4118 = vcvt.f32.s32.to.zero.pseudo %v4076
      %v4119 = vcvt.f32.s32.to.zero.pseudo %v4077
      %v4120 = vcvt.f32.s32.to.zero.pseudo %v4078
      %v4121 = vcvt.f32.s32.to.zero.pseudo %v4079
      %v4122 = vcvt.f32.s32.to.zero.pseudo %v4080
      %v4123 = vcvt.f32.s32.to.zero.pseudo %v4081
      %v4124 = vcvt.f32.s32.to.zero.pseudo %v4082
      %v4125 = vcvt.f32.s32.to.zero.pseudo %v4083
      %v4126 = vcvt.f32.s32.to.zero.pseudo %v4084
      %v4127 = vcvt.f32.s32.to.zero.pseudo %v4085
      %v4128 = vcvt.f32.s32.to.zero.pseudo %v4086
      %v4129 = vcvt.f32.s32.to.zero.pseudo %v4087
      %v4130 = vcvt.f32.s32.to.zero.pseudo %v4088
      %v4131 = vcvt.f32.s32.to.zero.pseudo %v4089
      %v4132 = vcvt.f32.s32.to.zero.pseudo %v4090
      %v4133 = vcvt.f32.s32.to.zero.pseudo %v4091
      %v4134 = vcvt.f32.s32.to.zero.pseudo %v4092
      %v4135 = vcvt.f32.s32.to.zero.pseudo %v4093
      %v4136 = vcvt.f32.s32.to.zero.pseudo %v4094
      %v4137 = vcvt.f32.s32.to.zero.pseudo %v4095
      %v4138 = vcvt.f32.s32.to.zero.pseudo %v4096
      %v4139 = vcvt.f32.s32.to.zero.pseudo %v4097
      %v4140 = vcvt.f32.s32.to.zero.pseudo %v4098
      %v4141 = vcvt.f32.s32.to.zero.pseudo %v4099
      %v4142 = vcvt.f32.s32.to.zero.pseudo %v4100
      %v4143 = vcvt.f32.s32.to.zero.pseudo %v4101
      %v4144 = vcvt.f32.s32.to.zero.pseudo %v4102
      %v4145 = vcvt.f32.s32.to.zero.pseudo %v4103
      %v4146 = vcvt.f32.s32.to.zero.pseudo %v4104
      %v4147 = vcvt.f32.s32.to.zero.pseudo %v4105
      %v4148 = vcvt.f32.s32.to.zero.pseudo %v4106
      %v4149 = vcvt.f32.s32.to.zero.pseudo %v4107
      %v4150 = vcvt.f32.s32.to.zero.pseudo %v4108
      %v4151 = vcvt.f32.s32.to.zero.pseudo %v4109
      %v4152 = vcvt.f32.s32.to.zero.pseudo %v4110
      %v4153 = vcvt.f32.s32.to.zero.pseudo %v4111
      %v4154 = vmul.u32 %v4112, 18
      %v4155 = vmul.u32 %v4113, 18
      %v4156 = vmul.u32 %v4114, 18
      %v4157 = vmul.u32 %v4115, 18
      %v4158 = vmul.u32 %v4116, 18
      %v4159 = vmul.u32 %v4117, 18
      %v4160 = vmul.u32 %v4118, 18
      %v4161 = vmul.u32 %v4119, 18
      %v4162 = vmul.u32 %v4120, 18
      %v4163 = vmul.u32 %v4121, 18
      %v4164 = vmul.u32 %v4122, 18
      %v4165 = vmul.u32 %v4123, 18
      %v4166 = vmul.u32 %v4124, 18
      %v4167 = vmul.u32 %v4125, 18
      %v4168 = vmul.u32 %v4126, 18
      %v4169 = vmul.u32 %v4127, 18
      %v4170 = vmul.u32 %v4128, 18
      %v4171 = vmul.u32 %v4129, 18
      %v4172 = vmul.u32 %v4130, 18
      %v4173 = vmul.u32 %v4131, 18
      %v4174 = vmul.u32 %v4132, 18
      %v4175 = vmul.u32 %v4133, 18
      %v4176 = vmul.u32 %v4134, 18
      %v4177 = vmul.u32 %v4135, 18
      %v4178 = vmul.u32 %v4136, 18
      %v4179 = vmul.u32 %v4137, 18
      %v4180 = vmul.u32 %v4138, 18
      %v4181 = vmul.u32 %v4139, 18
      %v4182 = vmul.u32 %v4140, 18
      %v4183 = vmul.u32 %v4141, 18
      %v4184 = vmul.u32 %v4142, 18
      %v4185 = vmul.u32 %v4143, 18
      %v4186 = vmul.u32 %v4144, 18
      %v4187 = vmul.u32 %v4145, 18
      %v4188 = vmul.u32 %v4146, 18
      %v4189 = vmul.u32 %v4147, 18
      %v4190 = vmul.u32 %v4148, 18
      %v4191 = vmul.u32 %v4149, 18
      %v4192 = vmul.u32 %v4150, 18
      %v4193 = vmul.u32 %v4151, 18
      %v4194 = vmul.u32 %v4152, 18
      %v4195 = vmul.u32 %v4153, 18
      %v4196 = vsub.s32 %v3902, %v4154
      %v4197 = vsub.s32 %v3903, %v4155
      %v4198 = vsub.s32 %v3904, %v4156
      %v4199 = vsub.s32 %v3905, %v4157
      %v4200 = vsub.s32 %v3906, %v4158
      %v4201 = vsub.s32 %v3907, %v4159
      %v4202 = vsub.s32 %v3908, %v4160
      %v4203 = vsub.s32 %v3909, %v4161
      %v4204 = vsub.s32 %v3910, %v4162
      %v4205 = vsub.s32 %v3911, %v4163
      %v4206 = vsub.s32 %v3912, %v4164
      %v4207 = vsub.s32 %v3913, %v4165
      %v4208 = vsub.s32 %v3914, %v4166
      %v4209 = vsub.s32 %v3915, %v4167
      %v4210 = vsub.s32 %v3916, %v4168
      %v4211 = vsub.s32 %v3917, %v4169
      %v4212 = vsub.s32 %v3918, %v4170
      %v4213 = vsub.s32 %v3919, %v4171
      %v4214 = vsub.s32 %v3920, %v4172
      %v4215 = vsub.s32 %v3921, %v4173
      %v4216 = vsub.s32 %v3922, %v4174
      %v4217 = vsub.s32 %v3923, %v4175
      %v4218 = vsub.s32 %v3924, %v4176
      %v4219 = vsub.s32 %v3925, %v4177
      %v4220 = vsub.s32 %v3926, %v4178
      %v4221 = vsub.s32 %v3927, %v4179
      %v4222 = vsub.s32 %v3928, %v4180
      %v4223 = vsub.s32 %v3929, %v4181
      %v4224 = vsub.s32 %v3930, %v4182
      %v4225 = vsub.s32 %v3931, %v4183
      %v4226 = vsub.s32 %v3932, %v4184
      %v4227 = vsub.s32 %v3933, %v4185
      %v4228 = vsub.s32 %v3934, %v4186
      %v4229 = vsub.s32 %v3935, %v4187
      %v4230 = vsub.s32 %v3936, %v4188
      %v4231 = vsub.s32 %v3937, %v4189
      %v4232 = vsub.s32 %v3938, %v4190
      %v4233 = vsub.s32 %v3939, %v4191
      %v4234 = vsub.s32 %v3940, %v4192
      %v4235 = vsub.s32 %v3941, %v4193
      %v4236 = vsub.s32 %v3942, %v4194
      %v4237 = vsub.s32 %v3943, %v4195
      %vm4238 = vcmp.ge.s32.totalorder %v4112, 1
      %vm4239 = vcmp.ge.s32.totalorder %v4113, 1
      %vm4240 = vcmp.ge.s32.totalorder %v4114, 1
      %vm4241 = vcmp.ge.s32.totalorder %v4115, 1
      %vm4242 = vcmp.ge.s32.totalorder %v4116, 1
      %vm4243 = vcmp.ge.s32.totalorder %v4117, 1
      %vm4244 = vcmp.ge.s32.totalorder %v4118, 1
      %vm4245 = vcmp.ge.s32.totalorder %v4119, 1
      %vm4246 = vcmp.ge.s32.totalorder %v4120, 1
      %vm4247 = vcmp.ge.s32.totalorder %v4121, 1
      %vm4248 = vcmp.ge.s32.totalorder %v4122, 1
      %vm4249 = vcmp.ge.s32.totalorder %v4123, 1
      %vm4250 = vcmp.ge.s32.totalorder %v4124, 1
      %vm4251 = vcmp.ge.s32.totalorder %v4125, 1
      %vm4252 = vcmp.ge.s32.totalorder %v4126, 1
      %vm4253 = vcmp.ge.s32.totalorder %v4127, 1
      %vm4254 = vcmp.ge.s32.totalorder %v4128, 1
      %vm4255 = vcmp.ge.s32.totalorder %v4129, 1
      %vm4256 = vcmp.ge.s32.totalorder %v4130, 1
      %vm4257 = vcmp.ge.s32.totalorder %v4131, 1
      %vm4258 = vcmp.ge.s32.totalorder %v4132, 1
      %vm4259 = vcmp.ge.s32.totalorder %v4133, 1
      %vm4260 = vcmp.ge.s32.totalorder %v4134, 1
      %vm4261 = vcmp.ge.s32.totalorder %v4135, 1
      %vm4262 = vcmp.ge.s32.totalorder %v4136, 1
      %vm4263 = vcmp.ge.s32.totalorder %v4137, 1
      %vm4264 = vcmp.ge.s32.totalorder %v4138, 1
      %vm4265 = vcmp.ge.s32.totalorder %v4139, 1
      %vm4266 = vcmp.ge.s32.totalorder %v4140, 1
      %vm4267 = vcmp.ge.s32.totalorder %v4141, 1
      %vm4268 = vcmp.ge.s32.totalorder %v4142, 1
      %vm4269 = vcmp.ge.s32.totalorder %v4143, 1
      %vm4270 = vcmp.ge.s32.totalorder %v4144, 1
      %vm4271 = vcmp.ge.s32.totalorder %v4145, 1
      %vm4272 = vcmp.ge.s32.totalorder %v4146, 1
      %vm4273 = vcmp.ge.s32.totalorder %v4147, 1
      %vm4274 = vcmp.ge.s32.totalorder %v4148, 1
      %vm4275 = vcmp.ge.s32.totalorder %v4149, 1
      %vm4276 = vcmp.ge.s32.totalorder %v4150, 1
      %vm4277 = vcmp.ge.s32.totalorder %v4151, 1
      %vm4278 = vcmp.ge.s32.totalorder %v4152, 1
      %vm4279 = vcmp.ge.s32.totalorder %v4153, 1
      %vm4280 = vcmp.le.s32.totalorder %v4112, 16
      %vm4281 = vcmp.le.s32.totalorder %v4113, 16
      %vm4282 = vcmp.le.s32.totalorder %v4114, 16
      %vm4283 = vcmp.le.s32.totalorder %v4115, 16
      %vm4284 = vcmp.le.s32.totalorder %v4116, 16
      %vm4285 = vcmp.le.s32.totalorder %v4117, 16
      %vm4286 = vcmp.le.s32.totalorder %v4118, 16
      %vm4287 = vcmp.le.s32.totalorder %v4119, 16
      %vm4288 = vcmp.le.s32.totalorder %v4120, 16
      %vm4289 = vcmp.le.s32.totalorder %v4121, 16
      %vm4290 = vcmp.le.s32.totalorder %v4122, 16
      %vm4291 = vcmp.le.s32.totalorder %v4123, 16
      %vm4292 = vcmp.le.s32.totalorder %v4124, 16
      %vm4293 = vcmp.le.s32.totalorder %v4125, 16
      %vm4294 = vcmp.le.s32.totalorder %v4126, 16
      %vm4295 = vcmp.le.s32.totalorder %v4127, 16
      %vm4296 = vcmp.le.s32.totalorder %v4128, 16
      %vm4297 = vcmp.le.s32.totalorder %v4129, 16
      %vm4298 = vcmp.le.s32.totalorder %v4130, 16
      %vm4299 = vcmp.le.s32.totalorder %v4131, 16
      %vm4300 = vcmp.le.s32.totalorder %v4132, 16
      %vm4301 = vcmp.le.s32.totalorder %v4133, 16
      %vm4302 = vcmp.le.s32.totalorder %v4134, 16
      %vm4303 = vcmp.le.s32.totalorder %v4135, 16
      %vm4304 = vcmp.le.s32.totalorder %v4136, 16
      %vm4305 = vcmp.le.s32.totalorder %v4137, 16
      %vm4306 = vcmp.le.s32.totalorder %v4138, 16
      %vm4307 = vcmp.le.s32.totalorder %v4139, 16
      %vm4308 = vcmp.le.s32.totalorder %v4140, 16
      %vm4309 = vcmp.le.s32.totalorder %v4141, 16
      %vm4310 = vcmp.le.s32.totalorder %v4142, 16
      %vm4311 = vcmp.le.s32.totalorder %v4143, 16
      %vm4312 = vcmp.le.s32.totalorder %v4144, 16
      %vm4313 = vcmp.le.s32.totalorder %v4145, 16
      %vm4314 = vcmp.le.s32.totalorder %v4146, 16
      %vm4315 = vcmp.le.s32.totalorder %v4147, 16
      %vm4316 = vcmp.le.s32.totalorder %v4148, 16
      %vm4317 = vcmp.le.s32.totalorder %v4149, 16
      %vm4318 = vcmp.le.s32.totalorder %v4150, 16
      %vm4319 = vcmp.le.s32.totalorder %v4151, 16
      %vm4320 = vcmp.le.s32.totalorder %v4152, 16
      %vm4321 = vcmp.le.s32.totalorder %v4153, 16
      %vm4322 = vmand %vm4238, %vm4280
      %vm4323 = vmand %vm4239, %vm4281
      %vm4324 = vmand %vm4240, %vm4282
      %vm4325 = vmand %vm4241, %vm4283
      %vm4326 = vmand %vm4242, %vm4284
      %vm4327 = vmand %vm4243, %vm4285
      %vm4328 = vmand %vm4244, %vm4286
      %vm4329 = vmand %vm4245, %vm4287
      %vm4330 = vmand %vm4246, %vm4288
      %vm4331 = vmand %vm4247, %vm4289
      %vm4332 = vmand %vm4248, %vm4290
      %vm4333 = vmand %vm4249, %vm4291
      %vm4334 = vmand %vm4250, %vm4292
      %vm4335 = vmand %vm4251, %vm4293
      %vm4336 = vmand %vm4252, %vm4294
      %vm4337 = vmand %vm4253, %vm4295
      %vm4338 = vmand %vm4254, %vm4296
      %vm4339 = vmand %vm4255, %vm4297
      %vm4340 = vmand %vm4256, %vm4298
      %vm4341 = vmand %vm4257, %vm4299
      %vm4342 = vmand %vm4258, %vm4300
      %vm4343 = vmand %vm4259, %vm4301
      %vm4344 = vmand %vm4260, %vm4302
      %vm4345 = vmand %vm4261, %vm4303
      %vm4346 = vmand %vm4262, %vm4304
      %vm4347 = vmand %vm4263, %vm4305
      %vm4348 = vmand %vm4264, %vm4306
      %vm4349 = vmand %vm4265, %vm4307
      %vm4350 = vmand %vm4266, %vm4308
      %vm4351 = vmand %vm4267, %vm4309
      %vm4352 = vmand %vm4268, %vm4310
      %vm4353 = vmand %vm4269, %vm4311
      %vm4354 = vmand %vm4270, %vm4312
      %vm4355 = vmand %vm4271, %vm4313
      %vm4356 = vmand %vm4272, %vm4314
      %vm4357 = vmand %vm4273, %vm4315
      %vm4358 = vmand %vm4274, %vm4316
      %vm4359 = vmand %vm4275, %vm4317
      %vm4360 = vmand %vm4276, %vm4318
      %vm4361 = vmand %vm4277, %vm4319
      %vm4362 = vmand %vm4278, %vm4320
      %vm4363 = vmand %vm4279, %vm4321
      %vm4364 = vcmp.ge.s32.totalorder %v4196, 1
      %vm4365 = vcmp.ge.s32.totalorder %v4197, 1
      %vm4366 = vcmp.ge.s32.totalorder %v4198, 1
      %vm4367 = vcmp.ge.s32.totalorder %v4199, 1
      %vm4368 = vcmp.ge.s32.totalorder %v4200, 1
      %vm4369 = vcmp.ge.s32.totalorder %v4201, 1
      %vm4370 = vcmp.ge.s32.totalorder %v4202, 1
      %vm4371 = vcmp.ge.s32.totalorder %v4203, 1
      %vm4372 = vcmp.ge.s32.totalorder %v4204, 1
      %vm4373 = vcmp.ge.s32.totalorder %v4205, 1
      %vm4374 = vcmp.ge.s32.totalorder %v4206, 1
      %vm4375 = vcmp.ge.s32.totalorder %v4207, 1
      %vm4376 = vcmp.ge.s32.totalorder %v4208, 1
      %vm4377 = vcmp.ge.s32.totalorder %v4209, 1
      %vm4378 = vcmp.ge.s32.totalorder %v4210, 1
      %vm4379 = vcmp.ge.s32.totalorder %v4211, 1
      %vm4380 = vcmp.ge.s32.totalorder %v4212, 1
      %vm4381 = vcmp.ge.s32.totalorder %v4213, 1
      %vm4382 = vcmp.ge.s32.totalorder %v4214, 1
      %vm4383 = vcmp.ge.s32.totalorder %v4215, 1
      %vm4384 = vcmp.ge.s32.totalorder %v4216, 1
      %vm4385 = vcmp.ge.s32.totalorder %v4217, 1
      %vm4386 = vcmp.ge.s32.totalorder %v4218, 1
      %vm4387 = vcmp.ge.s32.totalorder %v4219, 1
      %vm4388 = vcmp.ge.s32.totalorder %v4220, 1
      %vm4389 = vcmp.ge.s32.totalorder %v4221, 1
      %vm4390 = vcmp.ge.s32.totalorder %v4222, 1
      %vm4391 = vcmp.ge.s32.totalorder %v4223, 1
      %vm4392 = vcmp.ge.s32.totalorder %v4224, 1
      %vm4393 = vcmp.ge.s32.totalorder %v4225, 1
      %vm4394 = vcmp.ge.s32.totalorder %v4226, 1
      %vm4395 = vcmp.ge.s32.totalorder %v4227, 1
      %vm4396 = vcmp.ge.s32.totalorder %v4228, 1
      %vm4397 = vcmp.ge.s32.totalorder %v4229, 1
      %vm4398 = vcmp.ge.s32.totalorder %v4230, 1
      %vm4399 = vcmp.ge.s32.totalorder %v4231, 1
      %vm4400 = vcmp.ge.s32.totalorder %v4232, 1
      %vm4401 = vcmp.ge.s32.totalorder %v4233, 1
      %vm4402 = vcmp.ge.s32.totalorder %v4234, 1
      %vm4403 = vcmp.ge.s32.totalorder %v4235, 1
      %vm4404 = vcmp.ge.s32.totalorder %v4236, 1
      %vm4405 = vcmp.ge.s32.totalorder %v4237, 1
      %vm4406 = vmand %vm4322, %vm4364
      %vm4407 = vmand %vm4323, %vm4365
      %vm4408 = vmand %vm4324, %vm4366
      %vm4409 = vmand %vm4325, %vm4367
      %vm4410 = vmand %vm4326, %vm4368
      %vm4411 = vmand %vm4327, %vm4369
      %vm4412 = vmand %vm4328, %vm4370
      %vm4413 = vmand %vm4329, %vm4371
      %vm4414 = vmand %vm4330, %vm4372
      %vm4415 = vmand %vm4331, %vm4373
      %vm4416 = vmand %vm4332, %vm4374
      %vm4417 = vmand %vm4333, %vm4375
      %vm4418 = vmand %vm4334, %vm4376
      %vm4419 = vmand %vm4335, %vm4377
      %vm4420 = vmand %vm4336, %vm4378
      %vm4421 = vmand %vm4337, %vm4379
      %vm4422 = vmand %vm4338, %vm4380
      %vm4423 = vmand %vm4339, %vm4381
      %vm4424 = vmand %vm4340, %vm4382
      %vm4425 = vmand %vm4341, %vm4383
      %vm4426 = vmand %vm4342, %vm4384
      %vm4427 = vmand %vm4343, %vm4385
      %vm4428 = vmand %vm4344, %vm4386
      %vm4429 = vmand %vm4345, %vm4387
      %vm4430 = vmand %vm4346, %vm4388
      %vm4431 = vmand %vm4347, %vm4389
      %vm4432 = vmand %vm4348, %vm4390
      %vm4433 = vmand %vm4349, %vm4391
      %vm4434 = vmand %vm4350, %vm4392
      %vm4435 = vmand %vm4351, %vm4393
      %vm4436 = vmand %vm4352, %vm4394
      %vm4437 = vmand %vm4353, %vm4395
      %vm4438 = vmand %vm4354, %vm4396
      %vm4439 = vmand %vm4355, %vm4397
      %vm4440 = vmand %vm4356, %vm4398
      %vm4441 = vmand %vm4357, %vm4399
      %vm4442 = vmand %vm4358, %vm4400
      %vm4443 = vmand %vm4359, %vm4401
      %vm4444 = vmand %vm4360, %vm4402
      %vm4445 = vmand %vm4361, %vm4403
      %vm4446 = vmand %vm4362, %vm4404
      %vm4447 = vmand %vm4363, %vm4405
      %vm4448 = vcmp.le.s32.totalorder %v4196, 16
      %vm4449 = vcmp.le.s32.totalorder %v4197, 16
      %vm4450 = vcmp.le.s32.totalorder %v4198, 16
      %vm4451 = vcmp.le.s32.totalorder %v4199, 16
      %vm4452 = vcmp.le.s32.totalorder %v4200, 16
      %vm4453 = vcmp.le.s32.totalorder %v4201, 16
      %vm4454 = vcmp.le.s32.totalorder %v4202, 16
      %vm4455 = vcmp.le.s32.totalorder %v4203, 16
      %vm4456 = vcmp.le.s32.totalorder %v4204, 16
      %vm4457 = vcmp.le.s32.totalorder %v4205, 16
      %vm4458 = vcmp.le.s32.totalorder %v4206, 16
      %vm4459 = vcmp.le.s32.totalorder %v4207, 16
      %vm4460 = vcmp.le.s32.totalorder %v4208, 16
      %vm4461 = vcmp.le.s32.totalorder %v4209, 16
      %vm4462 = vcmp.le.s32.totalorder %v4210, 16
      %vm4463 = vcmp.le.s32.totalorder %v4211, 16
      %vm4464 = vcmp.le.s32.totalorder %v4212, 16
      %vm4465 = vcmp.le.s32.totalorder %v4213, 16
      %vm4466 = vcmp.le.s32.totalorder %v4214, 16
      %vm4467 = vcmp.le.s32.totalorder %v4215, 16
      %vm4468 = vcmp.le.s32.totalorder %v4216, 16
      %vm4469 = vcmp.le.s32.totalorder %v4217, 16
      %vm4470 = vcmp.le.s32.totalorder %v4218, 16
      %vm4471 = vcmp.le.s32.totalorder %v4219, 16
      %vm4472 = vcmp.le.s32.totalorder %v4220, 16
      %vm4473 = vcmp.le.s32.totalorder %v4221, 16
      %vm4474 = vcmp.le.s32.totalorder %v4222, 16
      %vm4475 = vcmp.le.s32.totalorder %v4223, 16
      %vm4476 = vcmp.le.s32.totalorder %v4224, 16
      %vm4477 = vcmp.le.s32.totalorder %v4225, 16
      %vm4478 = vcmp.le.s32.totalorder %v4226, 16
      %vm4479 = vcmp.le.s32.totalorder %v4227, 16
      %vm4480 = vcmp.le.s32.totalorder %v4228, 16
      %vm4481 = vcmp.le.s32.totalorder %v4229, 16
      %vm4482 = vcmp.le.s32.totalorder %v4230, 16
      %vm4483 = vcmp.le.s32.totalorder %v4231, 16
      %vm4484 = vcmp.le.s32.totalorder %v4232, 16
      %vm4485 = vcmp.le.s32.totalorder %v4233, 16
      %vm4486 = vcmp.le.s32.totalorder %v4234, 16
      %vm4487 = vcmp.le.s32.totalorder %v4235, 16
      %vm4488 = vcmp.le.s32.totalorder %v4236, 16
      %vm4489 = vcmp.le.s32.totalorder %v4237, 16
      %vm4490 = vmand %vm4406, %vm4448
      %vm4491 = vmand %vm4407, %vm4449
      %vm4492 = vmand %vm4408, %vm4450
      %vm4493 = vmand %vm4409, %vm4451
      %vm4494 = vmand %vm4410, %vm4452
      %vm4495 = vmand %vm4411, %vm4453
      %vm4496 = vmand %vm4412, %vm4454
      %vm4497 = vmand %vm4413, %vm4455
      %vm4498 = vmand %vm4414, %vm4456
      %vm4499 = vmand %vm4415, %vm4457
      %vm4500 = vmand %vm4416, %vm4458
      %vm4501 = vmand %vm4417, %vm4459
      %vm4502 = vmand %vm4418, %vm4460
      %vm4503 = vmand %vm4419, %vm4461
      %vm4504 = vmand %vm4420, %vm4462
      %vm4505 = vmand %vm4421, %vm4463
      %vm4506 = vmand %vm4422, %vm4464
      %vm4507 = vmand %vm4423, %vm4465
      %vm4508 = vmand %vm4424, %vm4466
      %vm4509 = vmand %vm4425, %vm4467
      %vm4510 = vmand %vm4426, %vm4468
      %vm4511 = vmand %vm4427, %vm4469
      %vm4512 = vmand %vm4428, %vm4470
      %vm4513 = vmand %vm4429, %vm4471
      %vm4514 = vmand %vm4430, %vm4472
      %vm4515 = vmand %vm4431, %vm4473
      %vm4516 = vmand %vm4432, %vm4474
      %vm4517 = vmand %vm4433, %vm4475
      %vm4518 = vmand %vm4434, %vm4476
      %vm4519 = vmand %vm4435, %vm4477
      %vm4520 = vmand %vm4436, %vm4478
      %vm4521 = vmand %vm4437, %vm4479
      %vm4522 = vmand %vm4438, %vm4480
      %vm4523 = vmand %vm4439, %vm4481
      %vm4524 = vmand %vm4440, %vm4482
      %vm4525 = vmand %vm4441, %vm4483
      %vm4526 = vmand %vm4442, %vm4484
      %vm4527 = vmand %vm4443, %vm4485
      %vm4528 = vmand %vm4444, %vm4486
      %vm4529 = vmand %vm4445, %vm4487
      %vm4530 = vmand %vm4446, %vm4488
      %vm4531 = vmand %vm4447, %vm4489
      %v4532 = vsel %vm4490, %v3859, 0.0
      %v4533 = vsel %vm4491, %v3860, 0.0
      %v4534 = vsel %vm4492, %v3861, 0.0
      %v4535 = vsel %vm4493, %v3862, 0.0
      %v4536 = vsel %vm4494, %v3863, 0.0
      %v4537 = vsel %vm4495, %v3864, 0.0
      %v4538 = vsel %vm4496, %v3865, 0.0
      %v4539 = vsel %vm4497, %v3866, 0.0
      %v4540 = vsel %vm4498, %v3867, 0.0
      %v4541 = vsel %vm4499, %v3868, 0.0
      %v4542 = vsel %vm4500, %v3869, 0.0
      %v4543 = vsel %vm4501, %v3870, 0.0
      %v4544 = vsel %vm4502, %v3871, 0.0
      %v4545 = vsel %vm4503, %v3872, 0.0
      %v4546 = vsel %vm4504, %v3873, 0.0
      %v4547 = vsel %vm4505, %v3874, 0.0
      %v4548 = vsel %vm4506, %v3875, 0.0
      %v4549 = vsel %vm4507, %v3876, 0.0
      %v4550 = vsel %vm4508, %v3877, 0.0
      %v4551 = vsel %vm4509, %v3878, 0.0
      %v4552 = vsel %vm4510, %v3879, 0.0
      %v4553 = vsel %vm4511, %v3880, 0.0
      %v4554 = vsel %vm4512, %v3881, 0.0
      %v4555 = vsel %vm4513, %v3882, 0.0
      %v4556 = vsel %vm4514, %v3883, 0.0
      %v4557 = vsel %vm4515, %v3884, 0.0
      %v4558 = vsel %vm4516, %v3885, 0.0
      %v4559 = vsel %vm4517, %v3886, 0.0
      %v4560 = vsel %vm4518, %v3887, 0.0
      %v4561 = vsel %vm4519, %v3888, 0.0
      %v4562 = vsel %vm4520, %v3889, 0.0
      %v4563 = vsel %vm4521, %v3890, 0.0
      %v4564 = vsel %vm4522, %v3891, 0.0
      %v4565 = vsel %vm4523, %v3892, 0.0
      %v4566 = vsel %vm4524, %v3893, 0.0
      %v4567 = vsel %vm4525, %v3894, 0.0
      %v4568 = vsel %vm4526, %v3895, 0.0
      %v4569 = vsel %vm4527, %v3896, 0.0
      %v4570 = vsel %vm4528, %v3897, 0.0
      %v4571 = vsel %vm4529, %v3898, 0.0
      %v4572 = vsel %vm4530, %v3899, 0.0
      %v4573 = vsel %vm4531, %v3900, 0.0
      %v4574 = vpack.c.bf16 %v4533, %v4532
      %v4575 = vpack.c.bf16 %v4535, %v4534
      %v4576 = vpack.c.bf16 %v4537, %v4536
      %v4577 = vpack.c.bf16 %v4539, %v4538
      %v4578 = vpack.c.bf16 %v4541, %v4540
      %v4579 = vpack.c.bf16 %v4543, %v4542
      %v4580 = vpack.c.bf16 %v4545, %v4544
      %v4581 = vpack.c.bf16 %v4547, %v4546
      %v4582 = vpack.c.bf16 %v4549, %v4548
      %v4583 = vpack.c.bf16 %v4551, %v4550
      %v4584 = vpack.c.bf16 %v4553, %v4552
      %v4585 = vpack.c.bf16 %v4555, %v4554
      %v4586 = vpack.c.bf16 %v4557, %v4556
      %v4587 = vpack.c.bf16 %v4559, %v4558
      %v4588 = vpack.c.bf16 %v4561, %v4560
      %v4589 = vpack.c.bf16 %v4563, %v4562
      %v4590 = vpack.c.bf16 %v4565, %v4564
      %v4591 = vpack.c.bf16 %v4567, %v4566
      %v4592 = vpack.c.bf16 %v4569, %v4568
      %v4593 = vpack.c.bf16 %v4571, %v4570
      %v4594 = vpack.c.bf16 %v4573, %v4572
      %4595 = vst [vmem:[#allocation2 + $0x10] sm:$0xff] %v4574
      %4596 = vst [vmem:[#allocation2 + $0x18] sm:$0xff] %v4575
      %4597 = vst [vmem:[#allocation2 + $0x20] sm:$0xff] %v4576
      %4598 = vst [vmem:[#allocation2 + $0x28] sm:$0xff] %v4577
      %4599 = vst [vmem:[#allocation2 + $0x30] sm:$0xff] %v4578
      %4600 = vst [vmem:[#allocation2 + $0x38] sm:$0xff] %v4579
      %4601 = vst [vmem:[#allocation2 + $0x40] sm:$0xff] %v4580
      %4602 = vst [vmem:[#allocation2 + $0x48] sm:$0xff] %v4581
      %4603 = vst [vmem:[#allocation2 + $0x50] sm:$0xff] %v4582
      %4604 = vst [vmem:[#allocation2 + $0x58] sm:$0xff] %v4583
      %4605 = vst [vmem:[#allocation2 + $0x60] sm:$0xff] %v4584
      %4606 = vst [vmem:[#allocation2 + $0x68] sm:$0xff] %v4585
      %4607 = vst [vmem:[#allocation2 + $0x70] sm:$0xff] %v4586
      %4608 = vst [vmem:[#allocation2 + $0x78] sm:$0xff] %v4587
      %4609 = vst [vmem:[#allocation2 + $0x80] sm:$0xff] %v4588
      %4610 = vst [vmem:[#allocation2 + $0x88] sm:$0xff] %v4589
      %4611 = vst [vmem:[#allocation2 + $0x90] sm:$0xff] %v4590
      %4612 = vst [vmem:[#allocation2 + $0x98] sm:$0xff] %v4591
      %4613 = vst [vmem:[#allocation2 + $0xa0] sm:$0xff] %v4592
      %4614 = vst [vmem:[#allocation2 + $0xa8] sm:$0xff] %v4593
      %4615 = vst [vmem:[#allocation2 + $0xb0] sm:$0xff] %v4594
      %v4616 = vld [vmem:[#allocation2] sm:$0xc0]
      %v4617 = vld [vmem:[#allocation2 + $0x8] sm:$0xff]
      %v4618 = vld [vmem:[#allocation2 + $0x10] sm:$0xff]
      %v4619 = vld [vmem:[#allocation2 + $0x18] sm:$0xff]
      %v4620 = vld [vmem:[#allocation2 + $0x20] sm:$0xff]
      %v4621 = vld [vmem:[#allocation2 + $0x28] sm:$0xff]
      %v4622 = vld [vmem:[#allocation2 + $0x30] sm:$0xff]
      %v4623 = vld [vmem:[#allocation2 + $0x38] sm:$0xff]
      %v4624 = vld [vmem:[#allocation2 + $0x40] sm:$0xff]
      %v4625 = vld [vmem:[#allocation2 + $0x48] sm:$0xff]
      %v4626 = vld [vmem:[#allocation2 + $0x50] sm:$0xff]
      %v4627 = vld [vmem:[#allocation2 + $0x58] sm:$0xff]
      %v4628 = vld [vmem:[#allocation2 + $0x60] sm:$0xff]
      %v4629 = vld [vmem:[#allocation2 + $0x68] sm:$0xff]
      %v4630 = vld [vmem:[#allocation2 + $0x70] sm:$0xff]
      %v4631 = vld [vmem:[#allocation2 + $0x78] sm:$0xff]
      %v4632 = vld [vmem:[#allocation2 + $0x80] sm:$0xff]
      %v4633 = vld [vmem:[#allocation2 + $0x88] sm:$0xff]
      %v4634 = vld [vmem:[#allocation2 + $0x90] sm:$0xff]
      %v4635 = vld [vmem:[#allocation2 + $0x98] sm:$0xff]
      %v4636 = vld [vmem:[#allocation2 + $0xa0] sm:$0xff]
      %v4637 = vld [vmem:[#allocation2 + $0xa8] sm:$0x7f]
      %v4638 = vsel %vm276, 65537, 0
      %v4639 = vlaneseq
      %v4640 = vshrl.u32 %v4639, 7
      %v4641 = vsub.s32 0, %v4640
      %v4642 = vrot.slane %v4638, %v4641
      %vm4643 = vcmp.ne.s16.totalorder %v4642, 0
      %v4644 = vsel %vm4643, %v4616, 0
      %v4645 = vsel %vm4643, %v4617, 0
      %v4646 = vsel %vm4643, %v4618, 0
      %v4647 = vsel %vm4643, %v4619, 0
      %v4648 = vsel %vm4643, %v4620, 0
      %v4649 = vsel %vm4643, %v4621, 0
      %v4650 = vsel %vm4643, %v4622, 0
      %v4651 = vsel %vm4643, %v4623, 0
      %v4652 = vsel %vm4643, %v4624, 0
      %v4653 = vsel %vm4643, %v4625, 0
      %v4654 = vsel %vm4643, %v4626, 0
      %v4655 = vsel %vm4643, %v4627, 0
      %v4656 = vsel %vm4643, %v4628, 0
      %v4657 = vsel %vm4643, %v4629, 0
      %v4658 = vsel %vm4643, %v4630, 0
      %v4659 = vsel %vm4643, %v4631, 0
      %v4660 = vsel %vm4643, %v4632, 0
      %v4661 = vsel %vm4643, %v4633, 0
      %v4662 = vsel %vm4643, %v4634, 0
      %v4663 = vsel %vm4643, %v4635, 0
      %v4664 = vsel %vm4643, %v4636, 0
      %v4665 = vsel %vm4643, %v4637, 0
      %v4666 = vld [vmem:[#allocation2] sm:$0x80]
      %v4667 = vsel %vm324, 65537, 0
      %v4668 = vlaneseq
      %v4669 = vshrl.u32 %v4668, 7
      %v4670 = vsub.s32 0, %v4669
      %v4671 = vrot.slane %v4667, %v4670
      %vm4672 = vcmp.ne.s16.totalorder %v4671, 0
      %v4674 = vshrl.u32 %v4644, 16
      %v4676 = vrot.slane %v4674, 7
      %v4677 = vshll.u32 %v4644, 16
      %v4679 = vor.u32 %v4676, %v4677
      %v4681 = vshrl.u32 %v4645, 16
      %v4683 = vrot.slane %v4681, 7
      %v4684 = vshll.u32 %v4645, 16
      %v4686 = vor.u32 %v4683, %v4684
      %v4687 = vsel %vm325, %v4676, %v4686
      %v4689 = vshrl.u32 %v4646, 16
      %v4691 = vrot.slane %v4689, 7
      %v4692 = vshll.u32 %v4646, 16
      %v4694 = vor.u32 %v4691, %v4692
      %v4695 = vsel %vm325, %v4683, %v4694
      %v4697 = vshrl.u32 %v4647, 16
      %v4699 = vrot.slane %v4697, 7
      %v4700 = vshll.u32 %v4647, 16
      %v4702 = vor.u32 %v4699, %v4700
      %v4703 = vsel %vm325, %v4691, %v4702
      %v4705 = vshrl.u32 %v4648, 16
      %v4707 = vrot.slane %v4705, 7
      %v4708 = vshll.u32 %v4648, 16
      %v4710 = vor.u32 %v4707, %v4708
      %v4711 = vsel %vm325, %v4699, %v4710
      %v4713 = vshrl.u32 %v4649, 16
      %v4715 = vrot.slane %v4713, 7
      %v4716 = vshll.u32 %v4649, 16
      %v4718 = vor.u32 %v4715, %v4716
      %v4719 = vsel %vm325, %v4707, %v4718
      %v4721 = vshrl.u32 %v4650, 16
      %v4723 = vrot.slane %v4721, 7
      %v4724 = vshll.u32 %v4650, 16
      %v4726 = vor.u32 %v4723, %v4724
      %v4727 = vsel %vm325, %v4715, %v4726
      %v4729 = vshrl.u32 %v4651, 16
      %v4731 = vrot.slane %v4729, 7
      %v4732 = vshll.u32 %v4651, 16
      %v4734 = vor.u32 %v4731, %v4732
      %v4735 = vsel %vm325, %v4723, %v4734
      %v4737 = vshrl.u32 %v4652, 16
      %v4739 = vrot.slane %v4737, 7
      %v4740 = vshll.u32 %v4652, 16
      %v4742 = vor.u32 %v4739, %v4740
      %v4743 = vsel %vm325, %v4731, %v4742
      %v4745 = vshrl.u32 %v4653, 16
      %v4747 = vrot.slane %v4745, 7
      %v4748 = vshll.u32 %v4653, 16
      %v4750 = vor.u32 %v4747, %v4748
      %v4751 = vsel %vm325, %v4739, %v4750
      %v4753 = vshrl.u32 %v4654, 16
      %v4755 = vrot.slane %v4753, 7
      %v4756 = vshll.u32 %v4654, 16
      %v4758 = vor.u32 %v4755, %v4756
      %v4759 = vsel %vm325, %v4747, %v4758
      %v4761 = vshrl.u32 %v4655, 16
      %v4763 = vrot.slane %v4761, 7
      %v4764 = vshll.u32 %v4655, 16
      %v4766 = vor.u32 %v4763, %v4764
      %v4767 = vsel %vm325, %v4755, %v4766
      %v4769 = vshrl.u32 %v4656, 16
      %v4771 = vrot.slane %v4769, 7
      %v4772 = vshll.u32 %v4656, 16
      %v4774 = vor.u32 %v4771, %v4772
      %v4775 = vsel %vm325, %v4763, %v4774
      %v4777 = vshrl.u32 %v4657, 16
      %v4779 = vrot.slane %v4777, 7
      %v4780 = vshll.u32 %v4657, 16
      %v4782 = vor.u32 %v4779, %v4780
      %v4783 = vsel %vm325, %v4771, %v4782
      %v4785 = vshrl.u32 %v4658, 16
      %v4787 = vrot.slane %v4785, 7
      %v4788 = vshll.u32 %v4658, 16
      %v4790 = vor.u32 %v4787, %v4788
      %v4791 = vsel %vm325, %v4779, %v4790
      %v4793 = vshrl.u32 %v4659, 16
      %v4795 = vrot.slane %v4793, 7
      %v4796 = vshll.u32 %v4659, 16
      %v4798 = vor.u32 %v4795, %v4796
      %v4799 = vsel %vm325, %v4787, %v4798
      %v4801 = vshrl.u32 %v4660, 16
      %v4803 = vrot.slane %v4801, 7
      %v4804 = vshll.u32 %v4660, 16
      %v4806 = vor.u32 %v4803, %v4804
      %v4807 = vsel %vm325, %v4795, %v4806
      %v4809 = vshrl.u32 %v4661, 16
      %v4811 = vrot.slane %v4809, 7
      %v4812 = vshll.u32 %v4661, 16
      %v4814 = vor.u32 %v4811, %v4812
      %v4815 = vsel %vm325, %v4803, %v4814
      %v4817 = vshrl.u32 %v4662, 16
      %v4819 = vrot.slane %v4817, 7
      %v4820 = vshll.u32 %v4662, 16
      %v4822 = vor.u32 %v4819, %v4820
      %v4823 = vsel %vm325, %v4811, %v4822
      %v4825 = vshrl.u32 %v4663, 16
      %v4827 = vrot.slane %v4825, 7
      %v4828 = vshll.u32 %v4663, 16
      %v4830 = vor.u32 %v4827, %v4828
      %v4831 = vsel %vm325, %v4819, %v4830
      %v4833 = vshrl.u32 %v4664, 16
      %v4835 = vrot.slane %v4833, 7
      %v4836 = vshll.u32 %v4664, 16
      %v4838 = vor.u32 %v4835, %v4836
      %v4839 = vsel %vm325, %v4827, %v4838
      %v4841 = vshrl.u32 %v4665, 16
      %v4843 = vrot.slane %v4841, 7
      %v4844 = vshll.u32 %v4665, 16
      %v4846 = vor.u32 %v4843, %v4844
      %v4847 = vsel %vm325, %v4835, %v4846
      %v4870 = vsel %vm4672, %v4666, %v4679
      %v4871 = vsel %vm4672, %v4617, %v4687
      %v4872 = vsel %vm4672, %v4618, %v4695
      %v4873 = vsel %vm4672, %v4619, %v4703
      %v4874 = vsel %vm4672, %v4620, %v4711
      %v4875 = vsel %vm4672, %v4621, %v4719
      %v4876 = vsel %vm4672, %v4622, %v4727
      %v4877 = vsel %vm4672, %v4623, %v4735
      %v4878 = vsel %vm4672, %v4624, %v4743
      %v4879 = vsel %vm4672, %v4625, %v4751
      %v4880 = vsel %vm4672, %v4626, %v4759
      %v4881 = vsel %vm4672, %v4627, %v4767
      %v4882 = vsel %vm4672, %v4628, %v4775
      %v4883 = vsel %vm4672, %v4629, %v4783
      %v4884 = vsel %vm4672, %v4630, %v4791
      %v4885 = vsel %vm4672, %v4631, %v4799
      %v4886 = vsel %vm4672, %v4632, %v4807
      %v4887 = vsel %vm4672, %v4633, %v4815
      %v4888 = vsel %vm4672, %v4634, %v4823
      %v4889 = vsel %vm4672, %v4635, %v4831
      %v4890 = vsel %vm4672, %v4636, %v4839
      %v4891 = vsel %vm4672, %v4637, %v4847
      %v4892 = vld [vmem:[#allocation2 + $0xa8] sm:$0xff]
      %v4893 = vsel %vm803, 65537, 0
      %v4894 = vlaneseq
      %v4895 = vshrl.u32 %v4894, 7
      %v4896 = vsub.s32 0, %v4895
      %v4897 = vrot.slane %v4893, %v4896
      %vm4898 = vcmp.ne.s16.totalorder %v4897, 0
      %v4900 = vshll.u32 %v4870, 16
      %v4902 = vshrl.u32 %v4870, 16
      %v4904 = vrot.slane %v4902, 7
      %v4906 = vshrl.u32 %v4871, 16
      %v4908 = vrot.slane %v4906, 7
      %v4909 = vshll.u32 %v4871, 16
      %v4911 = vor.u32 %v4908, %v4909
      %v4912 = vsel %vm325, %v4904, %v4911
      %v4914 = vshrl.u32 %v4872, 16
      %v4916 = vrot.slane %v4914, 7
      %v4917 = vshll.u32 %v4872, 16
      %v4919 = vor.u32 %v4916, %v4917
      %v4920 = vsel %vm325, %v4908, %v4919
      %v4922 = vshrl.u32 %v4873, 16
      %v4924 = vrot.slane %v4922, 7
      %v4925 = vshll.u32 %v4873, 16
      %v4927 = vor.u32 %v4924, %v4925
      %v4928 = vsel %vm325, %v4916, %v4927
      %v4930 = vshrl.u32 %v4874, 16
      %v4932 = vrot.slane %v4930, 7
      %v4933 = vshll.u32 %v4874, 16
      %v4935 = vor.u32 %v4932, %v4933
      %v4936 = vsel %vm325, %v4924, %v4935
      %v4938 = vshrl.u32 %v4875, 16
      %v4940 = vrot.slane %v4938, 7
      %v4941 = vshll.u32 %v4875, 16
      %v4943 = vor.u32 %v4940, %v4941
      %v4944 = vsel %vm325, %v4932, %v4943
      %v4946 = vshrl.u32 %v4876, 16
      %v4948 = vrot.slane %v4946, 7
      %v4949 = vshll.u32 %v4876, 16
      %v4951 = vor.u32 %v4948, %v4949
      %v4952 = vsel %vm325, %v4940, %v4951
      %v4954 = vshrl.u32 %v4877, 16
      %v4956 = vrot.slane %v4954, 7
      %v4957 = vshll.u32 %v4877, 16
      %v4959 = vor.u32 %v4956, %v4957
      %v4960 = vsel %vm325, %v4948, %v4959
      %v4962 = vshrl.u32 %v4878, 16
      %v4964 = vrot.slane %v4962, 7
      %v4965 = vshll.u32 %v4878, 16
      %v4967 = vor.u32 %v4964, %v4965
      %v4968 = vsel %vm325, %v4956, %v4967
      %v4970 = vshrl.u32 %v4879, 16
      %v4972 = vrot.slane %v4970, 7
      %v4973 = vshll.u32 %v4879, 16
      %v4975 = vor.u32 %v4972, %v4973
      %v4976 = vsel %vm325, %v4964, %v4975
      %v4978 = vshrl.u32 %v4880, 16
      %v4980 = vrot.slane %v4978, 7
      %v4981 = vshll.u32 %v4880, 16
      %v4983 = vor.u32 %v4980, %v4981
      %v4984 = vsel %vm325, %v4972, %v4983
      %v4986 = vshrl.u32 %v4881, 16
      %v4988 = vrot.slane %v4986, 7
      %v4989 = vshll.u32 %v4881, 16
      %v4991 = vor.u32 %v4988, %v4989
      %v4992 = vsel %vm325, %v4980, %v4991
      %v4994 = vshrl.u32 %v4882, 16
      %v4996 = vrot.slane %v4994, 7
      %v4997 = vshll.u32 %v4882, 16
      %v4999 = vor.u32 %v4996, %v4997
      %v5000 = vsel %vm325, %v4988, %v4999
      %v5002 = vshrl.u32 %v4883, 16
      %v5004 = vrot.slane %v5002, 7
      %v5005 = vshll.u32 %v4883, 16
      %v5007 = vor.u32 %v5004, %v5005
      %v5008 = vsel %vm325, %v4996, %v5007
      %v5010 = vshrl.u32 %v4884, 16
      %v5012 = vrot.slane %v5010, 7
      %v5013 = vshll.u32 %v4884, 16
      %v5015 = vor.u32 %v5012, %v5013
      %v5016 = vsel %vm325, %v5004, %v5015
      %v5018 = vshrl.u32 %v4885, 16
      %v5020 = vrot.slane %v5018, 7
      %v5021 = vshll.u32 %v4885, 16
      %v5023 = vor.u32 %v5020, %v5021
      %v5024 = vsel %vm325, %v5012, %v5023
      %v5026 = vshrl.u32 %v4886, 16
      %v5028 = vrot.slane %v5026, 7
      %v5029 = vshll.u32 %v4886, 16
      %v5031 = vor.u32 %v5028, %v5029
      %v5032 = vsel %vm325, %v5020, %v5031
      %v5034 = vshrl.u32 %v4887, 16
      %v5036 = vrot.slane %v5034, 7
      %v5037 = vshll.u32 %v4887, 16
      %v5039 = vor.u32 %v5036, %v5037
      %v5040 = vsel %vm325, %v5028, %v5039
      %v5042 = vshrl.u32 %v4888, 16
      %v5044 = vrot.slane %v5042, 7
      %v5045 = vshll.u32 %v4888, 16
      %v5047 = vor.u32 %v5044, %v5045
      %v5048 = vsel %vm325, %v5036, %v5047
      %v5050 = vshrl.u32 %v4889, 16
      %v5052 = vrot.slane %v5050, 7
      %v5053 = vshll.u32 %v4889, 16
      %v5055 = vor.u32 %v5052, %v5053
      %v5056 = vsel %vm325, %v5044, %v5055
      %v5058 = vshrl.u32 %v4890, 16
      %v5060 = vrot.slane %v5058, 7
      %v5061 = vshll.u32 %v4890, 16
      %v5063 = vor.u32 %v5060, %v5061
      %v5064 = vsel %vm325, %v5052, %v5063
      %v5066 = vshrl.u32 %v4891, 16
      %v5068 = vrot.slane %v5066, 7
      %v5069 = vshll.u32 %v4891, 16
      %v5071 = vor.u32 %v5068, %v5069
      %v5072 = vsel %vm325, %v5060, %v5071
      %v5095 = vsel %vm4898, %v4666, %v4900
      %v5096 = vsel %vm4898, %v4617, %v4912
      %v5097 = vsel %vm4898, %v4618, %v4920
      %v5098 = vsel %vm4898, %v4619, %v4928
      %v5099 = vsel %vm4898, %v4620, %v4936
      %v5100 = vsel %vm4898, %v4621, %v4944
      %v5101 = vsel %vm4898, %v4622, %v4952
      %v5102 = vsel %vm4898, %v4623, %v4960
      %v5103 = vsel %vm4898, %v4624, %v4968
      %v5104 = vsel %vm4898, %v4625, %v4976
      %v5105 = vsel %vm4898, %v4626, %v4984
      %v5106 = vsel %vm4898, %v4627, %v4992
      %v5107 = vsel %vm4898, %v4628, %v5000
      %v5108 = vsel %vm4898, %v4629, %v5008
      %v5109 = vsel %vm4898, %v4630, %v5016
      %v5110 = vsel %vm4898, %v4631, %v5024
      %v5111 = vsel %vm4898, %v4632, %v5032
      %v5112 = vsel %vm4898, %v4633, %v5040
      %v5113 = vsel %vm4898, %v4634, %v5048
      %v5114 = vsel %vm4898, %v4635, %v5056
      %v5115 = vsel %vm4898, %v4636, %v5064
      %v5116 = vsel %vm4898, %v4892, %v5072
      %v5117 = vld [vmem:[#allocation2 + $0x8] sm:$0x80]
      %v5118 = vld [vmem:[#allocation2 + $0xb0] sm:$0xff]
      %v5119 = vsel %vm1280, 65537, 0
      %v5120 = vlaneseq
      %v5121 = vshrl.u32 %v5120, 7
      %v5122 = vsub.s32 0, %v5121
      %v5123 = vrot.slane %v5119, %v5122
      %vm5124 = vcmp.ne.s16.totalorder %v5123, 0
      %v5125 = vsel %vm5124, %v5117, %v5095
      %v5126 = vsel %vm5124, %v4618, %v5096
      %v5127 = vsel %vm5124, %v4619, %v5097
      %v5128 = vsel %vm5124, %v4620, %v5098
      %v5129 = vsel %vm5124, %v4621, %v5099
      %v5130 = vsel %vm5124, %v4622, %v5100
      %v5131 = vsel %vm5124, %v4623, %v5101
      %v5132 = vsel %vm5124, %v4624, %v5102
      %v5133 = vsel %vm5124, %v4625, %v5103
      %v5134 = vsel %vm5124, %v4626, %v5104
      %v5135 = vsel %vm5124, %v4627, %v5105
      %v5136 = vsel %vm5124, %v4628, %v5106
      %v5137 = vsel %vm5124, %v4629, %v5107
      %v5138 = vsel %vm5124, %v4630, %v5108
      %v5139 = vsel %vm5124, %v4631, %v5109
      %v5140 = vsel %vm5124, %v4632, %v5110
      %v5141 = vsel %vm5124, %v4633, %v5111
      %v5142 = vsel %vm5124, %v4634, %v5112
      %v5143 = vsel %vm5124, %v4635, %v5113
      %v5144 = vsel %vm5124, %v4636, %v5114
      %v5145 = vsel %vm5124, %v4892, %v5115
      %v5146 = vsel %vm5124, %v5118, %v5116
      %v5147 = vsel %vm1327, 65537, 0
      %v5148 = vlaneseq
      %v5149 = vshrl.u32 %v5148, 7
      %v5150 = vsub.s32 0, %v5149
      %v5151 = vrot.slane %v5147, %v5150
      %vm5152 = vcmp.ne.s16.totalorder %v5151, 0
      %v5154 = vshrl.u32 %v5125, 16
      %v5156 = vrot.slane %v5154, 7
      %v5158 = vshrl.u32 %v5126, 16
      %v5160 = vrot.slane %v5158, 7
      %v5161 = vshll.u32 %v5126, 16
      %v5163 = vor.u32 %v5160, %v5161
      %v5164 = vsel %vm325, %v5156, %v5163
      %v5166 = vshrl.u32 %v5127, 16
      %v5168 = vrot.slane %v5166, 7
      %v5169 = vshll.u32 %v5127, 16
      %v5171 = vor.u32 %v5168, %v5169
      %v5172 = vsel %vm325, %v5160, %v5171
      %v5174 = vshrl.u32 %v5128, 16
      %v5176 = vrot.slane %v5174, 7
      %v5177 = vshll.u32 %v5128, 16
      %v5179 = vor.u32 %v5176, %v5177
      %v5180 = vsel %vm325, %v5168, %v5179
      %v5182 = vshrl.u32 %v5129, 16
      %v5184 = vrot.slane %v5182, 7
      %v5185 = vshll.u32 %v5129, 16
      %v5187 = vor.u32 %v5184, %v5185
      %v5188 = vsel %vm325, %v5176, %v5187
      %v5190 = vshrl.u32 %v5130, 16
      %v5192 = vrot.slane %v5190, 7
      %v5193 = vshll.u32 %v5130, 16
      %v5195 = vor.u32 %v5192, %v5193
      %v5196 = vsel %vm325, %v5184, %v5195
      %v5198 = vshrl.u32 %v5131, 16
      %v5200 = vrot.slane %v5198, 7
      %v5201 = vshll.u32 %v5131, 16
      %v5203 = vor.u32 %v5200, %v5201
      %v5204 = vsel %vm325, %v5192, %v5203
      %v5206 = vshrl.u32 %v5132, 16
      %v5208 = vrot.slane %v5206, 7
      %v5209 = vshll.u32 %v5132, 16
      %v5211 = vor.u32 %v5208, %v5209
      %v5212 = vsel %vm325, %v5200, %v5211
      %v5214 = vshrl.u32 %v5133, 16
      %v5216 = vrot.slane %v5214, 7
      %v5217 = vshll.u32 %v5133, 16
      %v5219 = vor.u32 %v5216, %v5217
      %v5220 = vsel %vm325, %v5208, %v5219
      %v5222 = vshrl.u32 %v5134, 16
      %v5224 = vrot.slane %v5222, 7
      %v5225 = vshll.u32 %v5134, 16
      %v5227 = vor.u32 %v5224, %v5225
      %v5228 = vsel %vm325, %v5216, %v5227
      %v5230 = vshrl.u32 %v5135, 16
      %v5232 = vrot.slane %v5230, 7
      %v5233 = vshll.u32 %v5135, 16
      %v5235 = vor.u32 %v5232, %v5233
      %v5236 = vsel %vm325, %v5224, %v5235
      %v5238 = vshrl.u32 %v5136, 16
      %v5240 = vrot.slane %v5238, 7
      %v5241 = vshll.u32 %v5136, 16
      %v5243 = vor.u32 %v5240, %v5241
      %v5244 = vsel %vm325, %v5232, %v5243
      %v5246 = vshrl.u32 %v5137, 16
      %v5248 = vrot.slane %v5246, 7
      %v5249 = vshll.u32 %v5137, 16
      %v5251 = vor.u32 %v5248, %v5249
      %v5252 = vsel %vm325, %v5240, %v5251
      %v5254 = vshrl.u32 %v5138, 16
      %v5256 = vrot.slane %v5254, 7
      %v5257 = vshll.u32 %v5138, 16
      %v5259 = vor.u32 %v5256, %v5257
      %v5260 = vsel %vm325, %v5248, %v5259
      %v5262 = vshrl.u32 %v5139, 16
      %v5264 = vrot.slane %v5262, 7
      %v5265 = vshll.u32 %v5139, 16
      %v5267 = vor.u32 %v5264, %v5265
      %v5268 = vsel %vm325, %v5256, %v5267
      %v5270 = vshrl.u32 %v5140, 16
      %v5272 = vrot.slane %v5270, 7
      %v5273 = vshll.u32 %v5140, 16
      %v5275 = vor.u32 %v5272, %v5273
      %v5276 = vsel %vm325, %v5264, %v5275
      %v5278 = vshrl.u32 %v5141, 16
      %v5280 = vrot.slane %v5278, 7
      %v5281 = vshll.u32 %v5141, 16
      %v5283 = vor.u32 %v5280, %v5281
      %v5284 = vsel %vm325, %v5272, %v5283
      %v5286 = vshrl.u32 %v5142, 16
      %v5288 = vrot.slane %v5286, 7
      %v5289 = vshll.u32 %v5142, 16
      %v5291 = vor.u32 %v5288, %v5289
      %v5292 = vsel %vm325, %v5280, %v5291
      %v5294 = vshrl.u32 %v5143, 16
      %v5296 = vrot.slane %v5294, 7
      %v5297 = vshll.u32 %v5143, 16
      %v5299 = vor.u32 %v5296, %v5297
      %v5300 = vsel %vm325, %v5288, %v5299
      %v5302 = vshrl.u32 %v5144, 16
      %v5304 = vrot.slane %v5302, 7
      %v5305 = vshll.u32 %v5144, 16
      %v5307 = vor.u32 %v5304, %v5305
      %v5308 = vsel %vm325, %v5296, %v5307
      %v5310 = vshrl.u32 %v5145, 16
      %v5312 = vrot.slane %v5310, 7
      %v5313 = vshll.u32 %v5145, 16
      %v5315 = vor.u32 %v5312, %v5313
      %v5316 = vsel %vm325, %v5304, %v5315
      %v5318 = vshrl.u32 %v5146, 16
      %v5320 = vrot.slane %v5318, 7
      %v5321 = vshll.u32 %v5146, 16
      %v5323 = vor.u32 %v5320, %v5321
      %v5324 = vsel %vm325, %v5312, %v5323
      %v5346 = vsel %vm5152, %v4618, %v5164
      %v5347 = vsel %vm5152, %v4619, %v5172
      %v5348 = vsel %vm5152, %v4620, %v5180
      %v5349 = vsel %vm5152, %v4621, %v5188
      %v5350 = vsel %vm5152, %v4622, %v5196
      %v5351 = vsel %vm5152, %v4623, %v5204
      %v5352 = vsel %vm5152, %v4624, %v5212
      %v5353 = vsel %vm5152, %v4625, %v5220
      %v5354 = vsel %vm5152, %v4626, %v5228
      %v5355 = vsel %vm5152, %v4627, %v5236
      %v5356 = vsel %vm5152, %v4628, %v5244
      %v5357 = vsel %vm5152, %v4629, %v5252
      %v5358 = vsel %vm5152, %v4630, %v5260
      %v5359 = vsel %vm5152, %v4631, %v5268
      %v5360 = vsel %vm5152, %v4632, %v5276
      %v5361 = vsel %vm5152, %v4633, %v5284
      %v5362 = vsel %vm5152, %v4634, %v5292
      %v5363 = vsel %vm5152, %v4635, %v5300
      %v5364 = vsel %vm5152, %v4636, %v5308
      %v5365 = vsel %vm5152, %v4892, %v5316
      %v5366 = vsel %vm5152, %v5118, %v5324
      %v5367 = vld [vmem:[#allocation2 + $0xb8] sm:$0x1]
      %v5368 = vsel %vm1798, 65537, 0
      %v5369 = vlaneseq
      %v5370 = vshrl.u32 %v5369, 7
      %v5371 = vsub.s32 0, %v5370
      %v5372 = vrot.slane %v5368, %v5371
      %vm5373 = vcmp.ne.s16.totalorder %v5372, 0
      %v5375 = vshrl.u32 %v5346, 16
      %v5377 = vrot.slane %v5375, 7
      %v5378 = vshll.u32 %v5346, 16
      %v5380 = vor.u32 %v5377, %v5378
      %v5382 = vshrl.u32 %v5347, 16
      %v5384 = vrot.slane %v5382, 7
      %v5385 = vshll.u32 %v5347, 16
      %v5387 = vor.u32 %v5384, %v5385
      %v5388 = vsel %vm325, %v5377, %v5387
      %v5390 = vshrl.u32 %v5348, 16
      %v5392 = vrot.slane %v5390, 7
      %v5393 = vshll.u32 %v5348, 16
      %v5395 = vor.u32 %v5392, %v5393
      %v5396 = vsel %vm325, %v5384, %v5395
      %v5398 = vshrl.u32 %v5349, 16
      %v5400 = vrot.slane %v5398, 7
      %v5401 = vshll.u32 %v5349, 16
      %v5403 = vor.u32 %v5400, %v5401
      %v5404 = vsel %vm325, %v5392, %v5403
      %v5406 = vshrl.u32 %v5350, 16
      %v5408 = vrot.slane %v5406, 7
      %v5409 = vshll.u32 %v5350, 16
      %v5411 = vor.u32 %v5408, %v5409
      %v5412 = vsel %vm325, %v5400, %v5411
      %v5414 = vshrl.u32 %v5351, 16
      %v5416 = vrot.slane %v5414, 7
      %v5417 = vshll.u32 %v5351, 16
      %v5419 = vor.u32 %v5416, %v5417
      %v5420 = vsel %vm325, %v5408, %v5419
      %v5422 = vshrl.u32 %v5352, 16
      %v5424 = vrot.slane %v5422, 7
      %v5425 = vshll.u32 %v5352, 16
      %v5427 = vor.u32 %v5424, %v5425
      %v5428 = vsel %vm325, %v5416, %v5427
      %v5430 = vshrl.u32 %v5353, 16
      %v5432 = vrot.slane %v5430, 7
      %v5433 = vshll.u32 %v5353, 16
      %v5435 = vor.u32 %v5432, %v5433
      %v5436 = vsel %vm325, %v5424, %v5435
      %v5438 = vshrl.u32 %v5354, 16
      %v5440 = vrot.slane %v5438, 7
      %v5441 = vshll.u32 %v5354, 16
      %v5443 = vor.u32 %v5440, %v5441
      %v5444 = vsel %vm325, %v5432, %v5443
      %v5446 = vshrl.u32 %v5355, 16
      %v5448 = vrot.slane %v5446, 7
      %v5449 = vshll.u32 %v5355, 16
      %v5451 = vor.u32 %v5448, %v5449
      %v5452 = vsel %vm325, %v5440, %v5451
      %v5454 = vshrl.u32 %v5356, 16
      %v5456 = vrot.slane %v5454, 7
      %v5457 = vshll.u32 %v5356, 16
      %v5459 = vor.u32 %v5456, %v5457
      %v5460 = vsel %vm325, %v5448, %v5459
      %v5462 = vshrl.u32 %v5357, 16
      %v5464 = vrot.slane %v5462, 7
      %v5465 = vshll.u32 %v5357, 16
      %v5467 = vor.u32 %v5464, %v5465
      %v5468 = vsel %vm325, %v5456, %v5467
      %v5470 = vshrl.u32 %v5358, 16
      %v5472 = vrot.slane %v5470, 7
      %v5473 = vshll.u32 %v5358, 16
      %v5475 = vor.u32 %v5472, %v5473
      %v5476 = vsel %vm325, %v5464, %v5475
      %v5478 = vshrl.u32 %v5359, 16
      %v5480 = vrot.slane %v5478, 7
      %v5481 = vshll.u32 %v5359, 16
      %v5483 = vor.u32 %v5480, %v5481
      %v5484 = vsel %vm325, %v5472, %v5483
      %v5486 = vshrl.u32 %v5360, 16
      %v5488 = vrot.slane %v5486, 7
      %v5489 = vshll.u32 %v5360, 16
      %v5491 = vor.u32 %v5488, %v5489
      %v5492 = vsel %vm325, %v5480, %v5491
      %v5494 = vshrl.u32 %v5361, 16
      %v5496 = vrot.slane %v5494, 7
      %v5497 = vshll.u32 %v5361, 16
      %v5499 = vor.u32 %v5496, %v5497
      %v5500 = vsel %vm325, %v5488, %v5499
      %v5502 = vshrl.u32 %v5362, 16
      %v5504 = vrot.slane %v5502, 7
      %v5505 = vshll.u32 %v5362, 16
      %v5507 = vor.u32 %v5504, %v5505
      %v5508 = vsel %vm325, %v5496, %v5507
      %v5510 = vshrl.u32 %v5363, 16
      %v5512 = vrot.slane %v5510, 7
      %v5513 = vshll.u32 %v5363, 16
      %v5515 = vor.u32 %v5512, %v5513
      %v5516 = vsel %vm325, %v5504, %v5515
      %v5518 = vshrl.u32 %v5364, 16
      %v5520 = vrot.slane %v5518, 7
      %v5521 = vshll.u32 %v5364, 16
      %v5523 = vor.u32 %v5520, %v5521
      %v5524 = vsel %vm325, %v5512, %v5523
      %v5526 = vshrl.u32 %v5365, 16
      %v5528 = vrot.slane %v5526, 7
      %v5529 = vshll.u32 %v5365, 16
      %v5531 = vor.u32 %v5528, %v5529
      %v5532 = vsel %vm325, %v5520, %v5531
      %v5534 = vshrl.u32 %v5366, 16
      %v5536 = vrot.slane %v5534, 7
      %v5537 = vshll.u32 %v5366, 16
      %v5539 = vor.u32 %v5536, %v5537
      %v5540 = vsel %vm325, %v5528, %v5539
      %v5563 = vsel %vm5373, %v4618, %v5380
      %v5564 = vsel %vm5373, %v4619, %v5388
      %v5565 = vsel %vm5373, %v4620, %v5396
      %v5566 = vsel %vm5373, %v4621, %v5404
      %v5567 = vsel %vm5373, %v4622, %v5412
      %v5568 = vsel %vm5373, %v4623, %v5420
      %v5569 = vsel %vm5373, %v4624, %v5428
      %v5570 = vsel %vm5373, %v4625, %v5436
      %v5571 = vsel %vm5373, %v4626, %v5444
      %v5572 = vsel %vm5373, %v4627, %v5452
      %v5573 = vsel %vm5373, %v4628, %v5460
      %v5574 = vsel %vm5373, %v4629, %v5468
      %v5575 = vsel %vm5373, %v4630, %v5476
      %v5576 = vsel %vm5373, %v4631, %v5484
      %v5577 = vsel %vm5373, %v4632, %v5492
      %v5578 = vsel %vm5373, %v4633, %v5500
      %v5579 = vsel %vm5373, %v4634, %v5508
      %v5580 = vsel %vm5373, %v4635, %v5516
      %v5581 = vsel %vm5373, %v4636, %v5524
      %v5582 = vsel %vm5373, %v4892, %v5532
      %v5583 = vsel %vm5373, %v5118, %v5540
      %v5584 = vsel %vm5373, %v5367, %v5536
      %v5585 = vld [vmem:[#allocation2 + $0x18] sm:$0xff]
      %v5586 = vld [vmem:[#allocation2 + $0x20] sm:$0xff]
      %v5587 = vld [vmem:[#allocation2 + $0x28] sm:$0xff]
      %v5588 = vld [vmem:[#allocation2 + $0x30] sm:$0xff]
      %v5589 = vld [vmem:[#allocation2 + $0x38] sm:$0xff]
      %v5590 = vld [vmem:[#allocation2 + $0x40] sm:$0xff]
      %v5591 = vld [vmem:[#allocation2 + $0x48] sm:$0xff]
      %v5592 = vld [vmem:[#allocation2 + $0x50] sm:$0xff]
      %v5593 = vld [vmem:[#allocation2 + $0x58] sm:$0xff]
      %v5594 = vld [vmem:[#allocation2 + $0x60] sm:$0xff]
      %v5595 = vld [vmem:[#allocation2 + $0x68] sm:$0xff]
      %v5596 = vld [vmem:[#allocation2 + $0x70] sm:$0xff]
      %v5597 = vld [vmem:[#allocation2 + $0x78] sm:$0xff]
      %v5598 = vld [vmem:[#allocation2 + $0x80] sm:$0xff]
      %v5599 = vld [vmem:[#allocation2 + $0x88] sm:$0xff]
      %v5600 = vld [vmem:[#allocation2 + $0x90] sm:$0xff]
      %v5601 = vld [vmem:[#allocation2 + $0x98] sm:$0xff]
      %v5602 = vld [vmem:[#allocation2 + $0xa0] sm:$0xff]
      %v5603 = vld [vmem:[#allocation2 + $0xa8] sm:$0xff]
      %v5604 = vld [vmem:[#allocation2 + $0xb0] sm:$0xff]
      %v5605 = vld [vmem:[#allocation2 + $0xb8] sm:$0xff]
      %v5606 = vld [vmem:[#allocation2 + $0xc0] sm:$0x1]
      %v5607 = vsel %vm2268, 65537, 0
      %v5608 = vlaneseq
      %v5609 = vshrl.u32 %v5608, 7
      %v5610 = vsub.s32 0, %v5609
      %v5611 = vrot.slane %v5607, %v5610
      %vm5612 = vcmp.ne.s16.totalorder %v5611, 0
      %v5613 = vsel %vm5612, %v5585, %v5563
      %v5614 = vsel %vm5612, %v5586, %v5564
      %v5615 = vsel %vm5612, %v5587, %v5565
      %v5616 = vsel %vm5612, %v5588, %v5566
      %v5617 = vsel %vm5612, %v5589, %v5567
      %v5618 = vsel %vm5612, %v5590, %v5568
      %v5619 = vsel %vm5612, %v5591, %v5569
      %v5620 = vsel %vm5612, %v5592, %v5570
      %v5621 = vsel %vm5612, %v5593, %v5571
      %v5622 = vsel %vm5612, %v5594, %v5572
      %v5623 = vsel %vm5612, %v5595, %v5573
      %v5624 = vsel %vm5612, %v5596, %v5574
      %v5625 = vsel %vm5612, %v5597, %v5575
      %v5626 = vsel %vm5612, %v5598, %v5576
      %v5627 = vsel %vm5612, %v5599, %v5577
      %v5628 = vsel %vm5612, %v5600, %v5578
      %v5629 = vsel %vm5612, %v5601, %v5579
      %v5630 = vsel %vm5612, %v5602, %v5580
      %v5631 = vsel %vm5612, %v5603, %v5581
      %v5632 = vsel %vm5612, %v5604, %v5582
      %v5633 = vsel %vm5612, %v5605, %v5583
      %v5634 = vsel %vm5612, %v5606, %v5584
      %v5635 = vld [vmem:[#allocation2 + $0x18] sm:$0xfe]
      %v5636 = vsel %vm2316, 65537, 0
      %v5637 = vlaneseq
      %v5638 = vshrl.u32 %v5637, 7
      %v5639 = vsub.s32 0, %v5638
      %v5640 = vrot.slane %v5636, %v5639
      %vm5641 = vcmp.ne.s16.totalorder %v5640, 0
      %v5643 = vshrl.u32 %v5613, 16
      %v5645 = vrot.slane %v5643, 7
      %v5646 = vshll.u32 %v5613, 16
      %v5648 = vor.u32 %v5645, %v5646
      %v5650 = vshrl.u32 %v5614, 16
      %v5652 = vrot.slane %v5650, 7
      %v5653 = vshll.u32 %v5614, 16
      %v5655 = vor.u32 %v5652, %v5653
      %v5656 = vsel %vm325, %v5645, %v5655
      %v5658 = vshrl.u32 %v5615, 16
      %v5660 = vrot.slane %v5658, 7
      %v5661 = vshll.u32 %v5615, 16
      %v5663 = vor.u32 %v5660, %v5661
      %v5664 = vsel %vm325, %v5652, %v5663
      %v5666 = vshrl.u32 %v5616, 16
      %v5668 = vrot.slane %v5666, 7
      %v5669 = vshll.u32 %v5616, 16
      %v5671 = vor.u32 %v5668, %v5669
      %v5672 = vsel %vm325, %v5660, %v5671
      %v5674 = vshrl.u32 %v5617, 16
      %v5676 = vrot.slane %v5674, 7
      %v5677 = vshll.u32 %v5617, 16
      %v5679 = vor.u32 %v5676, %v5677
      %v5680 = vsel %vm325, %v5668, %v5679
      %v5682 = vshrl.u32 %v5618, 16
      %v5684 = vrot.slane %v5682, 7
      %v5685 = vshll.u32 %v5618, 16
      %v5687 = vor.u32 %v5684, %v5685
      %v5688 = vsel %vm325, %v5676, %v5687
      %v5690 = vshrl.u32 %v5619, 16
      %v5692 = vrot.slane %v5690, 7
      %v5693 = vshll.u32 %v5619, 16
      %v5695 = vor.u32 %v5692, %v5693
      %v5696 = vsel %vm325, %v5684, %v5695
      %v5698 = vshrl.u32 %v5620, 16
      %v5700 = vrot.slane %v5698, 7
      %v5701 = vshll.u32 %v5620, 16
      %v5703 = vor.u32 %v5700, %v5701
      %v5704 = vsel %vm325, %v5692, %v5703
      %v5706 = vshrl.u32 %v5621, 16
      %v5708 = vrot.slane %v5706, 7
      %v5709 = vshll.u32 %v5621, 16
      %v5711 = vor.u32 %v5708, %v5709
      %v5712 = vsel %vm325, %v5700, %v5711
      %v5714 = vshrl.u32 %v5622, 16
      %v5716 = vrot.slane %v5714, 7
      %v5717 = vshll.u32 %v5622, 16
      %v5719 = vor.u32 %v5716, %v5717
      %v5720 = vsel %vm325, %v5708, %v5719
      %v5722 = vshrl.u32 %v5623, 16
      %v5724 = vrot.slane %v5722, 7
      %v5725 = vshll.u32 %v5623, 16
      %v5727 = vor.u32 %v5724, %v5725
      %v5728 = vsel %vm325, %v5716, %v5727
      %v5730 = vshrl.u32 %v5624, 16
      %v5732 = vrot.slane %v5730, 7
      %v5733 = vshll.u32 %v5624, 16
      %v5735 = vor.u32 %v5732, %v5733
      %v5736 = vsel %vm325, %v5724, %v5735
      %v5738 = vshrl.u32 %v5625, 16
      %v5740 = vrot.slane %v5738, 7
      %v5741 = vshll.u32 %v5625, 16
      %v5743 = vor.u32 %v5740, %v5741
      %v5744 = vsel %vm325, %v5732, %v5743
      %v5746 = vshrl.u32 %v5626, 16
      %v5748 = vrot.slane %v5746, 7
      %v5749 = vshll.u32 %v5626, 16
      %v5751 = vor.u32 %v5748, %v5749
      %v5752 = vsel %vm325, %v5740, %v5751
      %v5754 = vshrl.u32 %v5627, 16
      %v5756 = vrot.slane %v5754, 7
      %v5757 = vshll.u32 %v5627, 16
      %v5759 = vor.u32 %v5756, %v5757
      %v5760 = vsel %vm325, %v5748, %v5759
      %v5762 = vshrl.u32 %v5628, 16
      %v5764 = vrot.slane %v5762, 7
      %v5765 = vshll.u32 %v5628, 16
      %v5767 = vor.u32 %v5764, %v5765
      %v5768 = vsel %vm325, %v5756, %v5767
      %v5770 = vshrl.u32 %v5629, 16
      %v5772 = vrot.slane %v5770, 7
      %v5773 = vshll.u32 %v5629, 16
      %v5775 = vor.u32 %v5772, %v5773
      %v5776 = vsel %vm325, %v5764, %v5775
      %v5778 = vshrl.u32 %v5630, 16
      %v5780 = vrot.slane %v5778, 7
      %v5781 = vshll.u32 %v5630, 16
      %v5783 = vor.u32 %v5780, %v5781
      %v5784 = vsel %vm325, %v5772, %v5783
      %v5786 = vshrl.u32 %v5631, 16
      %v5788 = vrot.slane %v5786, 7
      %v5789 = vshll.u32 %v5631, 16
      %v5791 = vor.u32 %v5788, %v5789
      %v5792 = vsel %vm325, %v5780, %v5791
      %v5794 = vshrl.u32 %v5632, 16
      %v5796 = vrot.slane %v5794, 7
      %v5797 = vshll.u32 %v5632, 16
      %v5799 = vor.u32 %v5796, %v5797
      %v5800 = vsel %vm325, %v5788, %v5799
      %v5802 = vshrl.u32 %v5633, 16
      %v5804 = vrot.slane %v5802, 7
      %v5805 = vshll.u32 %v5633, 16
      %v5807 = vor.u32 %v5804, %v5805
      %v5808 = vsel %vm325, %v5796, %v5807
      %v5810 = vshll.u32 %v5634, 16
      %v5812 = vsel %vm325, %v5804, %v5810
      %v5835 = vsel %vm5641, %v5635, %v5648
      %v5836 = vsel %vm5641, %v5586, %v5656
      %v5837 = vsel %vm5641, %v5587, %v5664
      %v5838 = vsel %vm5641, %v5588, %v5672
      %v5839 = vsel %vm5641, %v5589, %v5680
      %v5840 = vsel %vm5641, %v5590, %v5688
      %v5841 = vsel %vm5641, %v5591, %v5696
      %v5842 = vsel %vm5641, %v5592, %v5704
      %v5843 = vsel %vm5641, %v5593, %v5712
      %v5844 = vsel %vm5641, %v5594, %v5720
      %v5845 = vsel %vm5641, %v5595, %v5728
      %v5846 = vsel %vm5641, %v5596, %v5736
      %v5847 = vsel %vm5641, %v5597, %v5744
      %v5848 = vsel %vm5641, %v5598, %v5752
      %v5849 = vsel %vm5641, %v5599, %v5760
      %v5850 = vsel %vm5641, %v5600, %v5768
      %v5851 = vsel %vm5641, %v5601, %v5776
      %v5852 = vsel %vm5641, %v5602, %v5784
      %v5853 = vsel %vm5641, %v5603, %v5792
      %v5854 = vsel %vm5641, %v5604, %v5800
      %v5855 = vsel %vm5641, %v5605, %v5808
      %v5856 = vsel %vm5641, %v5606, %v5812
      %v5857 = vld [vmem:[#allocation2 + $0xc0] sm:$0x3]
      %v5858 = vsel %vm2788, 65537, 0
      %v5859 = vlaneseq
      %v5860 = vshrl.u32 %v5859, 7
      %v5861 = vsub.s32 0, %v5860
      %v5862 = vrot.slane %v5858, %v5861
      %vm5863 = vcmp.ne.s16.totalorder %v5862, 0
      %v5865 = vshrl.u32 %v5835, 16
      %v5867 = vrot.slane %v5865, 7
      %v5868 = vshll.u32 %v5835, 16
      %v5870 = vor.u32 %v5867, %v5868
      %v5872 = vshrl.u32 %v5836, 16
      %v5874 = vrot.slane %v5872, 7
      %v5875 = vshll.u32 %v5836, 16
      %v5877 = vor.u32 %v5874, %v5875
      %v5878 = vsel %vm325, %v5867, %v5877
      %v5880 = vshrl.u32 %v5837, 16
      %v5882 = vrot.slane %v5880, 7
      %v5883 = vshll.u32 %v5837, 16
      %v5885 = vor.u32 %v5882, %v5883
      %v5886 = vsel %vm325, %v5874, %v5885
      %v5888 = vshrl.u32 %v5838, 16
      %v5890 = vrot.slane %v5888, 7
      %v5891 = vshll.u32 %v5838, 16
      %v5893 = vor.u32 %v5890, %v5891
      %v5894 = vsel %vm325, %v5882, %v5893
      %v5896 = vshrl.u32 %v5839, 16
      %v5898 = vrot.slane %v5896, 7
      %v5899 = vshll.u32 %v5839, 16
      %v5901 = vor.u32 %v5898, %v5899
      %v5902 = vsel %vm325, %v5890, %v5901
      %v5904 = vshrl.u32 %v5840, 16
      %v5906 = vrot.slane %v5904, 7
      %v5907 = vshll.u32 %v5840, 16
      %v5909 = vor.u32 %v5906, %v5907
      %v5910 = vsel %vm325, %v5898, %v5909
      %v5912 = vshrl.u32 %v5841, 16
      %v5914 = vrot.slane %v5912, 7
      %v5915 = vshll.u32 %v5841, 16
      %v5917 = vor.u32 %v5914, %v5915
      %v5918 = vsel %vm325, %v5906, %v5917
      %v5920 = vshrl.u32 %v5842, 16
      %v5922 = vrot.slane %v5920, 7
      %v5923 = vshll.u32 %v5842, 16
      %v5925 = vor.u32 %v5922, %v5923
      %v5926 = vsel %vm325, %v5914, %v5925
      %v5928 = vshrl.u32 %v5843, 16
      %v5930 = vrot.slane %v5928, 7
      %v5931 = vshll.u32 %v5843, 16
      %v5933 = vor.u32 %v5930, %v5931
      %v5934 = vsel %vm325, %v5922, %v5933
      %v5936 = vshrl.u32 %v5844, 16
      %v5938 = vrot.slane %v5936, 7
      %v5939 = vshll.u32 %v5844, 16
      %v5941 = vor.u32 %v5938, %v5939
      %v5942 = vsel %vm325, %v5930, %v5941
      %v5944 = vshrl.u32 %v5845, 16
      %v5946 = vrot.slane %v5944, 7
      %v5947 = vshll.u32 %v5845, 16
      %v5949 = vor.u32 %v5946, %v5947
      %v5950 = vsel %vm325, %v5938, %v5949
      %v5952 = vshrl.u32 %v5846, 16
      %v5954 = vrot.slane %v5952, 7
      %v5955 = vshll.u32 %v5846, 16
      %v5957 = vor.u32 %v5954, %v5955
      %v5958 = vsel %vm325, %v5946, %v5957
      %v5960 = vshrl.u32 %v5847, 16
      %v5962 = vrot.slane %v5960, 7
      %v5963 = vshll.u32 %v5847, 16
      %v5965 = vor.u32 %v5962, %v5963
      %v5966 = vsel %vm325, %v5954, %v5965
      %v5968 = vshrl.u32 %v5848, 16
      %v5970 = vrot.slane %v5968, 7
      %v5971 = vshll.u32 %v5848, 16
      %v5973 = vor.u32 %v5970, %v5971
      %v5974 = vsel %vm325, %v5962, %v5973
      %v5976 = vshrl.u32 %v5849, 16
      %v5978 = vrot.slane %v5976, 7
      %v5979 = vshll.u32 %v5849, 16
      %v5981 = vor.u32 %v5978, %v5979
      %v5982 = vsel %vm325, %v5970, %v5981
      %v5984 = vshrl.u32 %v5850, 16
      %v5986 = vrot.slane %v5984, 7
      %v5987 = vshll.u32 %v5850, 16
      %v5989 = vor.u32 %v5986, %v5987
      %v5990 = vsel %vm325, %v5978, %v5989
      %v5992 = vshrl.u32 %v5851, 16
      %v5994 = vrot.slane %v5992, 7
      %v5995 = vshll.u32 %v5851, 16
      %v5997 = vor.u32 %v5994, %v5995
      %v5998 = vsel %vm325, %v5986, %v5997
      %v6000 = vshrl.u32 %v5852, 16
      %v6002 = vrot.slane %v6000, 7
      %v6003 = vshll.u32 %v5852, 16
      %v6005 = vor.u32 %v6002, %v6003
      %v6006 = vsel %vm325, %v5994, %v6005
      %v6008 = vshrl.u32 %v5853, 16
      %v6010 = vrot.slane %v6008, 7
      %v6011 = vshll.u32 %v5853, 16
      %v6013 = vor.u32 %v6010, %v6011
      %v6014 = vsel %vm325, %v6002, %v6013
      %v6016 = vshrl.u32 %v5854, 16
      %v6018 = vrot.slane %v6016, 7
      %v6019 = vshll.u32 %v5854, 16
      %v6021 = vor.u32 %v6018, %v6019
      %v6022 = vsel %vm325, %v6010, %v6021
      %v6024 = vshrl.u32 %v5855, 16
      %v6026 = vrot.slane %v6024, 7
      %v6027 = vshll.u32 %v5855, 16
      %v6029 = vor.u32 %v6026, %v6027
      %v6030 = vsel %vm325, %v6018, %v6029
      %v6032 = vshrl.u32 %v5856, 16
      %v6034 = vrot.slane %v6032, 7
      %v6035 = vshll.u32 %v5856, 16
      %v6037 = vor.u32 %v6034, %v6035
      %v6038 = vsel %vm325, %v6026, %v6037
      %v6061 = vsel %vm5863, %v5635, %v5870
      %v6062 = vsel %vm5863, %v5586, %v5878
      %v6063 = vsel %vm5863, %v5587, %v5886
      %v6064 = vsel %vm5863, %v5588, %v5894
      %v6065 = vsel %vm5863, %v5589, %v5902
      %v6066 = vsel %vm5863, %v5590, %v5910
      %v6067 = vsel %vm5863, %v5591, %v5918
      %v6068 = vsel %vm5863, %v5592, %v5926
      %v6069 = vsel %vm5863, %v5593, %v5934
      %v6070 = vsel %vm5863, %v5594, %v5942
      %v6071 = vsel %vm5863, %v5595, %v5950
      %v6072 = vsel %vm5863, %v5596, %v5958
      %v6073 = vsel %vm5863, %v5597, %v5966
      %v6074 = vsel %vm5863, %v5598, %v5974
      %v6075 = vsel %vm5863, %v5599, %v5982
      %v6076 = vsel %vm5863, %v5600, %v5990
      %v6077 = vsel %vm5863, %v5601, %v5998
      %v6078 = vsel %vm5863, %v5602, %v6006
      %v6079 = vsel %vm5863, %v5603, %v6014
      %v6080 = vsel %vm5863, %v5604, %v6022
      %v6081 = vsel %vm5863, %v5605, %v6030
      %v6082 = vsel %vm5863, %v5857, %v6038
      %v6083 = vld [vmem:[%s3] sm:$0xf]
      %v6084 = vld [vmem:[%s3 + $0x4] sm:$0xf]
      %v6085 = vld [vmem:[%s3 + $0x8] sm:$0xf]
      %v6086 = vld [vmem:[%s3 + $0xc] sm:$0xf]
      %v6087 = vld [vmem:[%s3 + $0x10] sm:$0xf]
      %v6088 = vld [vmem:[%s3 + $0x14] sm:$0xf]
      %v6089 = vld [vmem:[%s3 + $0x18] sm:$0xf]
      %v6090 = vld [vmem:[%s3 + $0x1c] sm:$0xf]
      %v6091 = vld [vmem:[%s3 + $0x20] sm:$0xf]
      %v6092 = vld [vmem:[%s3 + $0x24] sm:$0xf]
      %v6093 = vld [vmem:[%s3 + $0x28] sm:$0xf]
      %v6094 = vld [vmem:[%s3 + $0x2c] sm:$0xf]
      %v6095 = vld [vmem:[%s3 + $0x30] sm:$0xf]
      %v6096 = vld [vmem:[%s3 + $0x34] sm:$0xf]
      %v6097 = vld [vmem:[%s3 + $0x38] sm:$0xf]
      %v6098 = vld [vmem:[%s3 + $0x3c] sm:$0xf]
      %v6099 = vld [vmem:[%s219 + $0x10] sm:$0xf]
      %v6100 = vld [vmem:[%s219 + $0x14] sm:$0xf]
      %v6101 = vld [vmem:[%s219 + $0x18] sm:$0xf]
      %v6102 = vld [vmem:[%s219 + $0x1c] sm:$0xf]
      %v6103 = vld [vmem:[%s219 + $0x20] sm:$0xf]
      %v6104 = vld [vmem:[%s219 + $0x24] sm:$0xf]
      %v6105 = vld [vmem:[%s219 + $0x28] sm:$0xf]
      %v6106 = vld [vmem:[%s219 + $0x2c] sm:$0xf]
      %v6107 = vld [vmem:[%s219 + $0x30] sm:$0xf]
      %v6108 = vld [vmem:[%s219 + $0x34] sm:$0xf]
      %v6109 = vld [vmem:[%s219 + $0x38] sm:$0xf]
      %v6110 = vld [vmem:[%s219 + $0x3c] sm:$0xf]
      %v6111 = vld [vmem:[%s219 + $0x40] sm:$0xf]
      %v6112 = vld [vmem:[%s219 + $0x44] sm:$0xf]
      %v6113 = vld [vmem:[%s219 + $0x48] sm:$0xf]
      %v6114 = vld [vmem:[%s219 + $0x4c] sm:$0xf]
      %v6115 = vld [vmem:[%s219 + $0x50] sm:$0xf]
      %v6116 = vld [vmem:[%s219 + $0x54] sm:$0xf]
      %v6117 = vld [vmem:[%s219 + $0x58] sm:$0xf]
      %v6118 = vld [vmem:[%s219 + $0x5c] sm:$0xf]
      %v6119 = vld [vmem:[%s219 + $0x60] sm:$0xf]
      %v6120 = vld [vmem:[%s219 + $0x64] sm:$0xf]
      %v6121 = vld [vmem:[%s219 + $0x68] sm:$0xf]
      %v6122 = vld [vmem:[%s219 + $0x6c] sm:$0xf]
      %v6123 = vld [vmem:[%s219 + $0x70] sm:$0xf]
      %v6124 = vld [vmem:[%s219 + $0x74] sm:$0xf]
      %v6125 = vld [vmem:[%s219 + $0x78] sm:$0xf]
      %v6126 = vld [vmem:[%s219 + $0x7c] sm:$0xf]
      %v6127 = vld [vmem:[%s219 + $0x80] sm:$0xf]
      %v6128 = vld [vmem:[%s219 + $0x84] sm:$0xf]
      %v6129 = vld [vmem:[%s219 + $0x88] sm:$0xf]
      %v6130 = vld [vmem:[%s219 + $0x8c] sm:$0xf]
      %v6131 = vld [vmem:[%s219 + $0x90] sm:$0xf]
      %v6132 = vld [vmem:[%s219 + $0x94] sm:$0xf]
      %v6133 = vld [vmem:[%s219 + $0x98] sm:$0xf]
      %v6134 = vld [vmem:[%s219 + $0x9c] sm:$0xf]
      %v6135 = vld [vmem:[%s219 + $0xa0] sm:$0xf]
      %v6136 = vld [vmem:[%s219 + $0xa4] sm:$0xf]
      %v6137 = vld [vmem:[%s219 + $0xa8] sm:$0xf]
      %v6138 = vld [vmem:[%s219 + $0xac] sm:$0xf]
      %v6139 = vld [vmem:[%s219 + $0xb0] sm:$0xf]
      %v6140 = vld [vmem:[%s219 + $0xb4] sm:$0xf]
      %v6141 = vunpack.c.l.bf16 %v6099
      %v6142 = vunpack.c.l.bf16 %v6100
      %v6143 = vunpack.c.l.bf16 %v6101
      %v6144 = vunpack.c.l.bf16 %v6102
      %v6145 = vunpack.c.l.bf16 %v6103
      %v6146 = vunpack.c.l.bf16 %v6104
      %v6147 = vunpack.c.l.bf16 %v6105
      %v6148 = vunpack.c.l.bf16 %v6106
      %v6149 = vunpack.c.l.bf16 %v6107
      %v6150 = vunpack.c.l.bf16 %v6108
      %v6151 = vunpack.c.l.bf16 %v6109
      %v6152 = vunpack.c.l.bf16 %v6110
      %v6153 = vunpack.c.l.bf16 %v6111
      %v6154 = vunpack.c.l.bf16 %v6112
      %v6155 = vunpack.c.l.bf16 %v6113
      %v6156 = vunpack.c.l.bf16 %v6114
      %v6157 = vunpack.c.l.bf16 %v6115
      %v6158 = vunpack.c.l.bf16 %v6116
      %v6159 = vunpack.c.l.bf16 %v6117
      %v6160 = vunpack.c.l.bf16 %v6118
      %v6161 = vunpack.c.l.bf16 %v6119
      %v6162 = vunpack.c.l.bf16 %v6120
      %v6163 = vunpack.c.l.bf16 %v6121
      %v6164 = vunpack.c.l.bf16 %v6122
      %v6165 = vunpack.c.l.bf16 %v6123
      %v6166 = vunpack.c.l.bf16 %v6124
      %v6167 = vunpack.c.l.bf16 %v6125
      %v6168 = vunpack.c.l.bf16 %v6126
      %v6169 = vunpack.c.l.bf16 %v6127
      %v6170 = vunpack.c.l.bf16 %v6128
      %v6171 = vunpack.c.l.bf16 %v6129
      %v6172 = vunpack.c.l.bf16 %v6130
      %v6173 = vunpack.c.l.bf16 %v6131
      %v6174 = vunpack.c.l.bf16 %v6132
      %v6175 = vunpack.c.l.bf16 %v6133
      %v6176 = vunpack.c.l.bf16 %v6134
      %v6177 = vunpack.c.l.bf16 %v6135
      %v6178 = vunpack.c.l.bf16 %v6136
      %v6179 = vunpack.c.l.bf16 %v6137
      %v6180 = vunpack.c.l.bf16 %v6138
      %v6181 = vunpack.c.l.bf16 %v6139
      %v6182 = vunpack.c.l.bf16 %v6140
      %v6183 = vld [vmem:[%s4] sm:$0x1]
      %v6185 = vlaneseq
      %v6186 = vshrl.u32 %v6185, 7
      %v6187 = vsub.s32 0, %v6186
      %v6188 = vrot.slane %v6183, %v6187
      %v6191 = vshrl.u32 %v6061, 16
      %v6193 = vrot.slane %v6191, 1
      %v6194 = vshll.u32 %v6061, 16
      %v6196 = vrot.slane %v6194, 2
      %v6197 = vor.u32 %v6193, %v6196
      %v6199 = vshrl.u32 %v6062, 16
      %v6201 = vrot.slane %v6199, 1
      %v6202 = vshll.u32 %v6062, 16
      %v6204 = vrot.slane %v6202, 2
      %v6205 = vor.u32 %v6201, %v6204
      %v6206 = vsel %vm3391, %v6197, %v6205
      %v6208 = vshrl.u32 %v6063, 16
      %v6210 = vrot.slane %v6208, 1
      %v6211 = vshll.u32 %v6063, 16
      %v6213 = vrot.slane %v6211, 2
      %v6214 = vor.u32 %v6210, %v6213
      %v6215 = vsel %vm3391, %v6205, %v6214
      %v6217 = vshrl.u32 %v6064, 16
      %v6219 = vrot.slane %v6217, 1
      %v6220 = vshll.u32 %v6064, 16
      %v6222 = vrot.slane %v6220, 2
      %v6223 = vor.u32 %v6219, %v6222
      %v6224 = vsel %vm3391, %v6214, %v6223
      %v6226 = vshrl.u32 %v6065, 16
      %v6228 = vrot.slane %v6226, 1
      %v6229 = vshll.u32 %v6065, 16
      %v6231 = vrot.slane %v6229, 2
      %v6232 = vor.u32 %v6228, %v6231
      %v6233 = vsel %vm3391, %v6223, %v6232
      %v6235 = vshrl.u32 %v6066, 16
      %v6237 = vrot.slane %v6235, 1
      %v6238 = vshll.u32 %v6066, 16
      %v6240 = vrot.slane %v6238, 2
      %v6241 = vor.u32 %v6237, %v6240
      %v6242 = vsel %vm3391, %v6232, %v6241
      %v6244 = vshrl.u32 %v6067, 16
      %v6246 = vrot.slane %v6244, 1
      %v6247 = vshll.u32 %v6067, 16
      %v6249 = vrot.slane %v6247, 2
      %v6250 = vor.u32 %v6246, %v6249
      %v6251 = vsel %vm3391, %v6241, %v6250
      %v6253 = vshrl.u32 %v6068, 16
      %v6255 = vrot.slane %v6253, 1
      %v6256 = vshll.u32 %v6068, 16
      %v6258 = vrot.slane %v6256, 2
      %v6259 = vor.u32 %v6255, %v6258
      %v6260 = vsel %vm3391, %v6250, %v6259
      %v6262 = vshrl.u32 %v6069, 16
      %v6264 = vrot.slane %v6262, 1
      %v6265 = vshll.u32 %v6069, 16
      %v6267 = vrot.slane %v6265, 2
      %v6268 = vor.u32 %v6264, %v6267
      %v6269 = vsel %vm3391, %v6259, %v6268
      %v6271 = vshrl.u32 %v6070, 16
      %v6273 = vrot.slane %v6271, 1
      %v6274 = vshll.u32 %v6070, 16
      %v6276 = vrot.slane %v6274, 2
      %v6277 = vor.u32 %v6273, %v6276
      %v6278 = vsel %vm3391, %v6268, %v6277
      %v6280 = vshrl.u32 %v6071, 16
      %v6282 = vrot.slane %v6280, 1
      %v6283 = vshll.u32 %v6071, 16
      %v6285 = vrot.slane %v6283, 2
      %v6286 = vor.u32 %v6282, %v6285
      %v6287 = vsel %vm3391, %v6277, %v6286
      %v6289 = vshrl.u32 %v6072, 16
      %v6291 = vrot.slane %v6289, 1
      %v6292 = vshll.u32 %v6072, 16
      %v6294 = vrot.slane %v6292, 2
      %v6295 = vor.u32 %v6291, %v6294
      %v6296 = vsel %vm3391, %v6286, %v6295
      %v6298 = vshrl.u32 %v6073, 16
      %v6300 = vrot.slane %v6298, 1
      %v6301 = vshll.u32 %v6073, 16
      %v6303 = vrot.slane %v6301, 2
      %v6304 = vor.u32 %v6300, %v6303
      %v6305 = vsel %vm3391, %v6295, %v6304
      %v6307 = vshrl.u32 %v6074, 16
      %v6309 = vrot.slane %v6307, 1
      %v6310 = vshll.u32 %v6074, 16
      %v6312 = vrot.slane %v6310, 2
      %v6313 = vor.u32 %v6309, %v6312
      %v6314 = vsel %vm3391, %v6304, %v6313
      %v6316 = vshrl.u32 %v6075, 16
      %v6318 = vrot.slane %v6316, 1
      %v6319 = vshll.u32 %v6075, 16
      %v6321 = vrot.slane %v6319, 2
      %v6322 = vor.u32 %v6318, %v6321
      %v6323 = vsel %vm3391, %v6313, %v6322
      %v6325 = vshrl.u32 %v6076, 16
      %v6327 = vrot.slane %v6325, 1
      %v6328 = vshll.u32 %v6076, 16
      %v6330 = vrot.slane %v6328, 2
      %v6331 = vor.u32 %v6327, %v6330
      %v6332 = vsel %vm3391, %v6322, %v6331
      %v6334 = vshrl.u32 %v6077, 16
      %v6336 = vrot.slane %v6334, 1
      %v6337 = vshll.u32 %v6077, 16
      %v6339 = vrot.slane %v6337, 2
      %v6340 = vor.u32 %v6336, %v6339
      %v6341 = vsel %vm3391, %v6331, %v6340
      %v6343 = vshrl.u32 %v6078, 16
      %v6345 = vrot.slane %v6343, 1
      %v6346 = vshll.u32 %v6078, 16
      %v6348 = vrot.slane %v6346, 2
      %v6349 = vor.u32 %v6345, %v6348
      %v6350 = vsel %vm3391, %v6340, %v6349
      %v6352 = vshrl.u32 %v6079, 16
      %v6354 = vrot.slane %v6352, 1
      %v6355 = vshll.u32 %v6079, 16
      %v6357 = vrot.slane %v6355, 2
      %v6358 = vor.u32 %v6354, %v6357
      %v6359 = vsel %vm3391, %v6349, %v6358
      %v6361 = vshrl.u32 %v6080, 16
      %v6363 = vrot.slane %v6361, 1
      %v6364 = vshll.u32 %v6080, 16
      %v6366 = vrot.slane %v6364, 2
      %v6367 = vor.u32 %v6363, %v6366
      %v6368 = vsel %vm3391, %v6358, %v6367
      %v6370 = vshrl.u32 %v6081, 16
      %v6372 = vrot.slane %v6370, 1
      %v6373 = vshll.u32 %v6081, 16
      %v6375 = vrot.slane %v6373, 2
      %v6376 = vor.u32 %v6372, %v6375
      %v6377 = vsel %vm3391, %v6367, %v6376
      %v6379 = vshrl.u32 %v6082, 16
      %v6381 = vrot.slane %v6379, 1
      %v6382 = vshll.u32 %v6082, 16
      %v6384 = vrot.slane %v6382, 2
      %v6385 = vor.u32 %v6381, %v6384
      %v6386 = vsel %vm3391, %v6376, %v6385
      %v6424 = vunpack.c.l.b16 %v6083
      %v6425 = vunpack.c.l.b16 %v6084
      %v6426 = vunpack.c.l.b16 %v6085
      %v6427 = vunpack.c.l.b16 %v6086
      %v6428 = vunpack.c.l.b16 %v6087
      %v6429 = vunpack.c.l.b16 %v6088
      %v6430 = vunpack.c.l.b16 %v6089
      %v6431 = vunpack.c.l.b16 %v6090
      %v6432 = vunpack.c.l.b16 %v6091
      %v6433 = vunpack.c.l.b16 %v6092
      %v6434 = vunpack.c.l.b16 %v6093
      %v6435 = vunpack.c.l.b16 %v6094
      %v6436 = vunpack.c.l.b16 %v6095
      %v6437 = vunpack.c.l.b16 %v6096
      %v6438 = vunpack.c.l.b16 %v6097
      %v6439 = vunpack.c.l.b16 %v6098
      %v6440 = vpack.c.b16 %v6425, %v6424
      %v6441 = vpack.c.b16 %v6427, %v6426
      %v6442 = vpack.c.b16 %v6429, %v6428
      %v6443 = vpack.c.b16 %v6431, %v6430
      %v6444 = vpack.c.b16 %v6433, %v6432
      %v6445 = vpack.c.b16 %v6435, %v6434
      %v6446 = vpack.c.b16 %v6437, %v6436
      %v6447 = vpack.c.b16 %v6439, %v6438
      %6456 = vmatprep.subr.bf16.mxu0 0
      %6457 = vmatpush1.bf16.msra.mxu0 %v6440
      %6458 = vmatprep.subr.bf16.mxu0 0
      %6459 = vmatpush1.bf16.msra.mxu0 %v6441
      %6460 = vmatprep.subr.bf16.mxu0 0
      %6461 = vmatpush1.bf16.msra.mxu0 %v6442
      %6462 = vmatprep.subr.bf16.mxu0 0
      %6463 = vmatpush1.bf16.msra.mxu0 %v6443
      %6464 = vmatprep.subr.bf16.mxu0 0
      %6465 = vmatpush1.bf16.msra.mxu0 %v6444
      %6466 = vmatprep.subr.bf16.mxu0 0
      %6467 = vmatpush1.bf16.msra.mxu0 %v6445
      %6468 = vmatprep.subr.bf16.mxu0 0
      %6469 = vmatpush1.bf16.msra.mxu0 %v6446
      %6470 = vmatprep.subr.bf16.mxu0 0
      %6471 = vmatpush1.bf16.msra.mxu0 %v6447
      %6472 = vmatprep.subr.bf16.mxu0 0
      %6473 = vmatpush1.bf16.msra.mxu0 0
      %6474 = vmatprep.subr.bf16.mxu0 0
      %6475 = vmatpush1.bf16.msra.mxu0 0
      %6476 = vmatprep.subr.bf16.mxu0 0
      %6477 = vmatpush1.bf16.msra.mxu0 0
      %6478 = vmatprep.subr.bf16.mxu0 0
      %6479 = vmatpush1.bf16.msra.mxu0 0
      %6480 = vmatprep.subr.bf16.mxu0 0
      %6481 = vmatpush1.bf16.msra.mxu0 0
      %6482 = vmatprep.subr.bf16.mxu0 0
      %6483 = vmatpush1.bf16.msra.mxu0 0
      %6484 = vmatprep.subr.bf16.mxu0 0
      %6485 = vmatpush1.bf16.msra.mxu0 0
      %6486 = vmatprep.subr.bf16.mxu0 0
      %6487 = vmatpush1.bf16.msra.mxu0 0
      %6488 = vmatprep.mubr.bf16.mxu0 0
      %6489 = vmatmul.mubr.bf16.gmra.mrb[0].mxu0 %v6206
      %v6490 = vpop.f32.mrb[0].mxu0
      %v6491 = vadd.f32 %v6188, %v6490
      %v6492 = vpop.f32.mrb[0].mxu0
      %v6493 = vpop.f32.mrb[0].mxu0
      %v6494 = vadd.f32 %v6188, %v6493
      %v6495 = vpop.f32.mrb[0].mxu0
      %6496 = vmatprep.mubr.bf16.mxu0 0
      %6497 = vmatmul.mubr.bf16.gmra.mrb[0].mxu0 %v6215
      %v6498 = vpop.f32.mrb[0].mxu0
      %v6499 = vadd.f32 %v6188, %v6498
      %v6500 = vpop.f32.mrb[0].mxu0
      %v6501 = vpop.f32.mrb[0].mxu0
      %v6502 = vadd.f32 %v6188, %v6501
      %v6503 = vpop.f32.mrb[0].mxu0
      %6504 = vmatprep.mubr.bf16.mxu0 0
      %6505 = vmatmul.mubr.bf16.gmra.mrb[0].mxu0 %v6224
      %v6506 = vpop.f32.mrb[0].mxu0
      %v6507 = vadd.f32 %v6188, %v6506
      %v6508 = vpop.f32.mrb[0].mxu0
      %v6509 = vpop.f32.mrb[0].mxu0
      %v6510 = vadd.f32 %v6188, %v6509
      %v6511 = vpop.f32.mrb[0].mxu0
      %6512 = vmatprep.mubr.bf16.mxu0 0
      %6513 = vmatmul.mubr.bf16.gmra.mrb[0].mxu0 %v6233
      %v6514 = vpop.f32.mrb[0].mxu0
      %v6515 = vadd.f32 %v6188, %v6514
      %v6516 = vpop.f32.mrb[0].mxu0
      %v6517 = vpop.f32.mrb[0].mxu0
      %v6518 = vadd.f32 %v6188, %v6517
      %v6519 = vpop.f32.mrb[0].mxu0
      %6520 = vmatprep.mubr.bf16.mxu0 0
      %6521 = vmatmul.mubr.bf16.gmra.mrb[0].mxu0 %v6242
      %v6522 = vpop.f32.mrb[0].mxu0
      %v6523 = vadd.f32 %v6188, %v6522
      %v6524 = vpop.f32.mrb[0].mxu0
      %v6525 = vpop.f32.mrb[0].mxu0
      %v6526 = vadd.f32 %v6188, %v6525
      %v6527 = vpop.f32.mrb[0].mxu0
      %6528 = vmatprep.mubr.bf16.mxu0 0
      %6529 = vmatmul.mubr.bf16.gmra.mrb[0].mxu0 %v6251
      %v6530 = vpop.f32.mrb[0].mxu0
      %v6531 = vadd.f32 %v6188, %v6530
      %v6532 = vpop.f32.mrb[0].mxu0
      %v6533 = vpop.f32.mrb[0].mxu0
      %v6534 = vadd.f32 %v6188, %v6533
      %v6535 = vpop.f32.mrb[0].mxu0
      %6536 = vmatprep.mubr.bf16.mxu0 0
      %6537 = vmatmul.mubr.bf16.gmra.mrb[0].mxu0 %v6260
      %v6538 = vpop.f32.mrb[0].mxu0
      %v6539 = vadd.f32 %v6188, %v6538
      %v6540 = vpop.f32.mrb[0].mxu0
      %v6541 = vpop.f32.mrb[0].mxu0
      %v6542 = vadd.f32 %v6188, %v6541
      %v6543 = vpop.f32.mrb[0].mxu0
      %6544 = vmatprep.mubr.bf16.mxu0 0
      %6545 = vmatmul.mubr.bf16.gmra.mrb[0].mxu0 %v6269
      %v6546 = vpop.f32.mrb[0].mxu0
      %v6547 = vadd.f32 %v6188, %v6546
      %v6548 = vpop.f32.mrb[0].mxu0
      %v6549 = vpop.f32.mrb[0].mxu0
      %v6550 = vadd.f32 %v6188, %v6549
      %v6551 = vpop.f32.mrb[0].mxu0
      %6552 = vmatprep.mubr.bf16.mxu0 0
      %6553 = vmatmul.mubr.bf16.gmra.mrb[0].mxu0 %v6278
      %v6554 = vpop.f32.mrb[0].mxu0
      %v6555 = vadd.f32 %v6188, %v6554
      %v6556 = vpop.f32.mrb[0].mxu0
      %v6557 = vpop.f32.mrb[0].mxu0
      %v6558 = vadd.f32 %v6188, %v6557
      %v6559 = vpop.f32.mrb[0].mxu0
      %6560 = vmatprep.mubr.bf16.mxu0 0
      %6561 = vmatmul.mubr.bf16.gmra.mrb[0].mxu0 %v6287
      %v6562 = vpop.f32.mrb[0].mxu0
      %v6563 = vadd.f32 %v6188, %v6562
      %v6564 = vpop.f32.mrb[0].mxu0
      %v6565 = vpop.f32.mrb[0].mxu0
      %v6566 = vadd.f32 %v6188, %v6565
      %v6567 = vpop.f32.mrb[0].mxu0
      %6568 = vmatprep.mubr.bf16.mxu0 0
      %6569 = vmatmul.mubr.bf16.gmra.mrb[0].mxu0 %v6296
      %v6570 = vpop.f32.mrb[0].mxu0
      %v6571 = vadd.f32 %v6188, %v6570
      %v6572 = vpop.f32.mrb[0].mxu0
      %v6573 = vpop.f32.mrb[0].mxu0
      %v6574 = vadd.f32 %v6188, %v6573
      %v6575 = vpop.f32.mrb[0].mxu0
      %6576 = vmatprep.mubr.bf16.mxu0 0
      %6577 = vmatmul.mubr.bf16.gmra.mrb[0].mxu0 %v6305
      %v6578 = vpop.f32.mrb[0].mxu0
      %v6579 = vadd.f32 %v6188, %v6578
      %v6580 = vpop.f32.mrb[0].mxu0
      %v6581 = vpop.f32.mrb[0].mxu0
      %v6582 = vadd.f32 %v6188, %v6581
      %v6583 = vpop.f32.mrb[0].mxu0
      %6584 = vmatprep.mubr.bf16.mxu0 0
      %6585 = vmatmul.mubr.bf16.gmra.mrb[0].mxu0 %v6314
      %v6586 = vpop.f32.mrb[0].mxu0
      %v6587 = vadd.f32 %v6188, %v6586
      %v6588 = vpop.f32.mrb[0].mxu0
      %v6589 = vpop.f32.mrb[0].mxu0
      %v6590 = vadd.f32 %v6188, %v6589
      %v6591 = vpop.f32.mrb[0].mxu0
      %6592 = vmatprep.mubr.bf16.mxu0 0
      %6593 = vmatmul.mubr.bf16.gmra.mrb[0].mxu0 %v6323
      %v6594 = vpop.f32.mrb[0].mxu0
      %v6595 = vadd.f32 %v6188, %v6594
      %v6596 = vpop.f32.mrb[0].mxu0
      %v6597 = vpop.f32.mrb[0].mxu0
      %v6598 = vadd.f32 %v6188, %v6597
      %v6599 = vpop.f32.mrb[0].mxu0
      %6600 = vmatprep.mubr.bf16.mxu0 0
      %6601 = vmatmul.mubr.bf16.gmra.mrb[0].mxu0 %v6332
      %v6602 = vpop.f32.mrb[0].mxu0
      %v6603 = vadd.f32 %v6188, %v6602
      %v6604 = vpop.f32.mrb[0].mxu0
      %v6605 = vpop.f32.mrb[0].mxu0
      %v6606 = vadd.f32 %v6188, %v6605
      %v6607 = vpop.f32.mrb[0].mxu0
      %6608 = vmatprep.mubr.bf16.mxu0 0
      %6609 = vmatmul.mubr.bf16.gmra.mrb[0].mxu0 %v6341
      %v6610 = vpop.f32.mrb[0].mxu0
      %v6611 = vadd.f32 %v6188, %v6610
      %v6612 = vpop.f32.mrb[0].mxu0
      %v6613 = vpop.f32.mrb[0].mxu0
      %v6614 = vadd.f32 %v6188, %v6613
      %v6615 = vpop.f32.mrb[0].mxu0
      %6616 = vmatprep.mubr.bf16.mxu0 0
      %6617 = vmatmul.mubr.bf16.gmra.mrb[0].mxu0 %v6350
      %v6618 = vpop.f32.mrb[0].mxu0
      %v6619 = vadd.f32 %v6188, %v6618
      %v6620 = vpop.f32.mrb[0].mxu0
      %v6621 = vpop.f32.mrb[0].mxu0
      %v6622 = vadd.f32 %v6188, %v6621
      %v6623 = vpop.f32.mrb[0].mxu0
      %6624 = vmatprep.mubr.bf16.mxu0 0
      %6625 = vmatmul.mubr.bf16.gmra.mrb[0].mxu0 %v6359
      %v6626 = vpop.f32.mrb[0].mxu0
      %v6627 = vadd.f32 %v6188, %v6626
      %v6628 = vpop.f32.mrb[0].mxu0
      %v6629 = vpop.f32.mrb[0].mxu0
      %v6630 = vadd.f32 %v6188, %v6629
      %v6631 = vpop.f32.mrb[0].mxu0
      %6632 = vmatprep.mubr.bf16.mxu0 0
      %6633 = vmatmul.mubr.bf16.gmra.mrb[0].mxu0 %v6368
      %v6634 = vpop.f32.mrb[0].mxu0
      %v6635 = vadd.f32 %v6188, %v6634
      %v6636 = vpop.f32.mrb[0].mxu0
      %v6637 = vpop.f32.mrb[0].mxu0
      %v6638 = vadd.f32 %v6188, %v6637
      %v6639 = vpop.f32.mrb[0].mxu0
      %6640 = vmatprep.mubr.bf16.mxu0 0
      %6641 = vmatmul.mubr.bf16.gmra.mrb[0].mxu0 %v6377
      %v6642 = vpop.f32.mrb[0].mxu0
      %v6643 = vadd.f32 %v6188, %v6642
      %v6644 = vpop.f32.mrb[0].mxu0
      %v6645 = vpop.f32.mrb[0].mxu0
      %v6646 = vadd.f32 %v6188, %v6645
      %v6647 = vpop.f32.mrb[0].mxu0
      %6648 = vmatprep.mubr.bf16.mxu0 0
      %6649 = vmatmul.mubr.bf16.gmra.mrb[0].mxu0 %v6386
      %v6650 = vpop.f32.mrb[0].mxu0
      %v6651 = vadd.f32 %v6188, %v6650
      %v6652 = vpop.f32.mrb[0].mxu0
      %v6653 = vpop.f32.mrb[0].mxu0
      %v6654 = vadd.f32 %v6188, %v6653
      %v6655 = vpop.f32.mrb[0].mxu0
      %6656 = vdwg.mxu0
      %v6657 = vadd.f32 %v6491, %v6141
      %v6658 = vadd.f32 %v6494, %v6142
      %v6659 = vadd.f32 %v6499, %v6143
      %v6660 = vadd.f32 %v6502, %v6144
      %v6661 = vadd.f32 %v6507, %v6145
      %v6662 = vadd.f32 %v6510, %v6146
      %v6663 = vadd.f32 %v6515, %v6147
      %v6664 = vadd.f32 %v6518, %v6148
      %v6665 = vadd.f32 %v6523, %v6149
      %v6666 = vadd.f32 %v6526, %v6150
      %v6667 = vadd.f32 %v6531, %v6151
      %v6668 = vadd.f32 %v6534, %v6152
      %v6669 = vadd.f32 %v6539, %v6153
      %v6670 = vadd.f32 %v6542, %v6154
      %v6671 = vadd.f32 %v6547, %v6155
      %v6672 = vadd.f32 %v6550, %v6156
      %v6673 = vadd.f32 %v6555, %v6157
      %v6674 = vadd.f32 %v6558, %v6158
      %v6675 = vadd.f32 %v6563, %v6159
      %v6676 = vadd.f32 %v6566, %v6160
      %v6677 = vadd.f32 %v6571, %v6161
      %v6678 = vadd.f32 %v6574, %v6162
      %v6679 = vadd.f32 %v6579, %v6163
      %v6680 = vadd.f32 %v6582, %v6164
      %v6681 = vadd.f32 %v6587, %v6165
      %v6682 = vadd.f32 %v6590, %v6166
      %v6683 = vadd.f32 %v6595, %v6167
      %v6684 = vadd.f32 %v6598, %v6168
      %v6685 = vadd.f32 %v6603, %v6169
      %v6686 = vadd.f32 %v6606, %v6170
      %v6687 = vadd.f32 %v6611, %v6171
      %v6688 = vadd.f32 %v6614, %v6172
      %v6689 = vadd.f32 %v6619, %v6173
      %v6690 = vadd.f32 %v6622, %v6174
      %v6691 = vadd.f32 %v6627, %v6175
      %v6692 = vadd.f32 %v6630, %v6176
      %v6693 = vadd.f32 %v6635, %v6177
      %v6694 = vadd.f32 %v6638, %v6178
      %v6695 = vadd.f32 %v6643, %v6179
      %v6696 = vadd.f32 %v6646, %v6180
      %v6697 = vadd.f32 %v6651, %v6181
      %v6698 = vadd.f32 %v6654, %v6182
      %v6699 = vmax.f32 %v6657, 0.0
      %v6700 = vmax.f32 %v6658, 0.0
      %v6701 = vmax.f32 %v6659, 0.0
      %v6702 = vmax.f32 %v6660, 0.0
      %v6703 = vmax.f32 %v6661, 0.0
      %v6704 = vmax.f32 %v6662, 0.0
      %v6705 = vmax.f32 %v6663, 0.0
      %v6706 = vmax.f32 %v6664, 0.0
      %v6707 = vmax.f32 %v6665, 0.0
      %v6708 = vmax.f32 %v6666, 0.0
      %v6709 = vmax.f32 %v6667, 0.0
      %v6710 = vmax.f32 %v6668, 0.0
      %v6711 = vmax.f32 %v6669, 0.0
      %v6712 = vmax.f32 %v6670, 0.0
      %v6713 = vmax.f32 %v6671, 0.0
      %v6714 = vmax.f32 %v6672, 0.0
      %v6715 = vmax.f32 %v6673, 0.0
      %v6716 = vmax.f32 %v6674, 0.0
      %v6717 = vmax.f32 %v6675, 0.0
      %v6718 = vmax.f32 %v6676, 0.0
      %v6719 = vmax.f32 %v6677, 0.0
      %v6720 = vmax.f32 %v6678, 0.0
      %v6721 = vmax.f32 %v6679, 0.0
      %v6722 = vmax.f32 %v6680, 0.0
      %v6723 = vmax.f32 %v6681, 0.0
      %v6724 = vmax.f32 %v6682, 0.0
      %v6725 = vmax.f32 %v6683, 0.0
      %v6726 = vmax.f32 %v6684, 0.0
      %v6727 = vmax.f32 %v6685, 0.0
      %v6728 = vmax.f32 %v6686, 0.0
      %v6729 = vmax.f32 %v6687, 0.0
      %v6730 = vmax.f32 %v6688, 0.0
      %v6731 = vmax.f32 %v6689, 0.0
      %v6732 = vmax.f32 %v6690, 0.0
      %v6733 = vmax.f32 %v6691, 0.0
      %v6734 = vmax.f32 %v6692, 0.0
      %v6735 = vmax.f32 %v6693, 0.0
      %v6736 = vmax.f32 %v6694, 0.0
      %v6737 = vmax.f32 %v6695, 0.0
      %v6738 = vmax.f32 %v6696, 0.0
      %v6739 = vmax.f32 %v6697, 0.0
      %v6740 = vmax.f32 %v6698, 0.0
      %v6741 = vpack.c.bf16 %v6700, %v6699
      %v6742 = vpack.c.bf16 %v6702, %v6701
      %v6743 = vpack.c.bf16 %v6704, %v6703
      %v6744 = vpack.c.bf16 %v6706, %v6705
      %v6745 = vpack.c.bf16 %v6708, %v6707
      %v6746 = vpack.c.bf16 %v6710, %v6709
      %v6747 = vpack.c.bf16 %v6712, %v6711
      %v6748 = vpack.c.bf16 %v6714, %v6713
      %v6749 = vpack.c.bf16 %v6716, %v6715
      %v6750 = vpack.c.bf16 %v6718, %v6717
      %v6751 = vpack.c.bf16 %v6720, %v6719
      %v6752 = vpack.c.bf16 %v6722, %v6721
      %v6753 = vpack.c.bf16 %v6724, %v6723
      %v6754 = vpack.c.bf16 %v6726, %v6725
      %v6755 = vpack.c.bf16 %v6728, %v6727
      %v6756 = vpack.c.bf16 %v6730, %v6729
      %v6757 = vpack.c.bf16 %v6732, %v6731
      %v6758 = vpack.c.bf16 %v6734, %v6733
      %v6759 = vpack.c.bf16 %v6736, %v6735
      %v6760 = vpack.c.bf16 %v6738, %v6737
      %v6761 = vpack.c.bf16 %v6740, %v6739
      %v6783 = vunpack.c.l.b16 %v6741
      %v6784 = vunpack.c.h.b16 %v6741
      %v6785 = vunpack.c.l.b16 %v6742
      %v6786 = vunpack.c.h.b16 %v6742
      %v6787 = vunpack.c.l.b16 %v6743
      %v6788 = vunpack.c.h.b16 %v6743
      %v6789 = vunpack.c.l.b16 %v6744
      %v6790 = vunpack.c.h.b16 %v6744
      %v6791 = vunpack.c.l.b16 %v6745
      %v6792 = vunpack.c.h.b16 %v6745
      %v6793 = vunpack.c.l.b16 %v6746
      %v6794 = vunpack.c.h.b16 %v6746
      %v6795 = vunpack.c.l.b16 %v6747
      %v6796 = vunpack.c.h.b16 %v6747
      %v6797 = vunpack.c.l.b16 %v6748
      %v6798 = vunpack.c.h.b16 %v6748
      %v6799 = vunpack.c.l.b16 %v6749
      %v6800 = vunpack.c.h.b16 %v6749
      %v6801 = vunpack.c.l.b16 %v6750
      %v6802 = vunpack.c.h.b16 %v6750
      %v6803 = vunpack.c.l.b16 %v6751
      %v6804 = vunpack.c.h.b16 %v6751
      %v6805 = vunpack.c.l.b16 %v6752
      %v6806 = vunpack.c.h.b16 %v6752
      %v6807 = vunpack.c.l.b16 %v6753
      %v6808 = vunpack.c.h.b16 %v6753
      %v6809 = vunpack.c.l.b16 %v6754
      %v6810 = vunpack.c.h.b16 %v6754
      %v6811 = vunpack.c.l.b16 %v6755
      %v6812 = vunpack.c.h.b16 %v6755
      %v6813 = vunpack.c.l.b16 %v6756
      %v6814 = vunpack.c.h.b16 %v6756
      %v6815 = vunpack.c.l.b16 %v6757
      %v6816 = vunpack.c.h.b16 %v6757
      %v6817 = vunpack.c.l.b16 %v6758
      %v6818 = vunpack.c.h.b16 %v6758
      %v6819 = vunpack.c.l.b16 %v6759
      %v6820 = vunpack.c.h.b16 %v6759
      %v6821 = vunpack.c.l.b16 %v6760
      %v6822 = vunpack.c.h.b16 %v6760
      %v6823 = vunpack.c.l.b16 %v6761
      %v6824 = vunpack.c.h.b16 %v6761
      %v6825 = vpack.c.b16 %v6783, %v6783
      %v6826 = vpack.c.b16 %v6784, %v6784
      %v6827 = vpack.c.b16 %v6785, %v6785
      %v6828 = vpack.c.b16 %v6786, %v6786
      %v6829 = vpack.c.b16 %v6787, %v6787
      %v6830 = vpack.c.b16 %v6788, %v6788
      %v6831 = vpack.c.b16 %v6789, %v6789
      %v6832 = vpack.c.b16 %v6790, %v6790
      %v6833 = vpack.c.b16 %v6791, %v6791
      %v6834 = vpack.c.b16 %v6792, %v6792
      %v6835 = vpack.c.b16 %v6793, %v6793
      %v6836 = vpack.c.b16 %v6794, %v6794
      %v6837 = vpack.c.b16 %v6795, %v6795
      %v6838 = vpack.c.b16 %v6796, %v6796
      %v6839 = vpack.c.b16 %v6797, %v6797
      %v6840 = vpack.c.b16 %v6798, %v6798
      %v6841 = vpack.c.b16 %v6799, %v6799
      %v6842 = vpack.c.b16 %v6800, %v6800
      %v6843 = vpack.c.b16 %v6801, %v6801
      %v6844 = vpack.c.b16 %v6802, %v6802
      %v6845 = vpack.c.b16 %v6803, %v6803
      %v6846 = vpack.c.b16 %v6804, %v6804
      %v6847 = vpack.c.b16 %v6805, %v6805
      %v6848 = vpack.c.b16 %v6806, %v6806
      %v6849 = vpack.c.b16 %v6807, %v6807
      %v6850 = vpack.c.b16 %v6808, %v6808
      %v6851 = vpack.c.b16 %v6809, %v6809
      %v6852 = vpack.c.b16 %v6810, %v6810
      %v6853 = vpack.c.b16 %v6811, %v6811
      %v6854 = vpack.c.b16 %v6812, %v6812
      %v6855 = vpack.c.b16 %v6813, %v6813
      %v6856 = vpack.c.b16 %v6814, %v6814
      %v6857 = vpack.c.b16 %v6815, %v6815
      %v6858 = vpack.c.b16 %v6816, %v6816
      %v6859 = vpack.c.b16 %v6817, %v6817
      %v6860 = vpack.c.b16 %v6818, %v6818
      %v6861 = vpack.c.b16 %v6819, %v6819
      %v6862 = vpack.c.b16 %v6820, %v6820
      %v6863 = vpack.c.b16 %v6821, %v6821
      %v6864 = vpack.c.b16 %v6822, %v6822
      %v6865 = vpack.c.b16 %v6823, %v6823
      %v6866 = vpack.c.b16 %v6824, %v6824
      %6909 = vst [vmem:[%s224] sm:$0xf] %v6825
      %6910 = vst [vmem:[%s224 + $0x4] sm:$0xf] %v6826
      %6911 = vst [vmem:[%s224 + $0x8] sm:$0xf] %v6827
      %6912 = vst [vmem:[%s224 + $0xc] sm:$0xf] %v6828
      %6913 = vst [vmem:[%s224 + $0x10] sm:$0xf] %v6829
      %6914 = vst [vmem:[%s224 + $0x14] sm:$0xf] %v6830
      %6915 = vst [vmem:[%s224 + $0x18] sm:$0xf] %v6831
      %6916 = vst [vmem:[%s224 + $0x1c] sm:$0xf] %v6832
      %6917 = vst [vmem:[%s224 + $0x20] sm:$0xf] %v6833
      %6918 = vst [vmem:[%s224 + $0x24] sm:$0xf] %v6834
      %6919 = vst [vmem:[%s224 + $0x28] sm:$0xf] %v6835
      %6920 = vst [vmem:[%s224 + $0x2c] sm:$0xf] %v6836
      %6921 = vst [vmem:[%s224 + $0x30] sm:$0xf] %v6837
      %6922 = vst [vmem:[%s224 + $0x34] sm:$0xf] %v6838
      %6923 = vst [vmem:[%s224 + $0x38] sm:$0xf] %v6839
      %6924 = vst [vmem:[%s224 + $0x3c] sm:$0xf] %v6840
      %6925 = vst [vmem:[%s224 + $0x40] sm:$0xf] %v6841
      %6926 = vst [vmem:[%s224 + $0x44] sm:$0xf] %v6842
      %6927 = vst [vmem:[%s224 + $0x48] sm:$0xf] %v6843
      %6928 = vst [vmem:[%s224 + $0x4c] sm:$0xf] %v6844
      %6929 = vst [vmem:[%s224 + $0x50] sm:$0xf] %v6845
      %6930 = vst [vmem:[%s224 + $0x54] sm:$0xf] %v6846
      %6931 = vst [vmem:[%s224 + $0x58] sm:$0xf] %v6847
      %6932 = vst [vmem:[%s224 + $0x5c] sm:$0xf] %v6848
      %6933 = vst [vmem:[%s224 + $0x60] sm:$0xf] %v6849
      %6934 = vst [vmem:[%s224 + $0x64] sm:$0xf] %v6850
      %6935 = vst [vmem:[%s224 + $0x68] sm:$0xf] %v6851
      %6936 = vst [vmem:[%s224 + $0x6c] sm:$0xf] %v6852
      %6937 = vst [vmem:[%s224 + $0x70] sm:$0xf] %v6853
      %6938 = vst [vmem:[%s224 + $0x74] sm:$0xf] %v6854
      %6939 = vst [vmem:[%s224 + $0x78] sm:$0xf] %v6855
      %6940 = vst [vmem:[%s224 + $0x7c] sm:$0xf] %v6856
      %6941 = vst [vmem:[%s224 + $0x80] sm:$0xf] %v6857
      %6942 = vst [vmem:[%s224 + $0x84] sm:$0xf] %v6858
      %6943 = vst [vmem:[%s224 + $0x88] sm:$0xf] %v6859
      %6944 = vst [vmem:[%s224 + $0x8c] sm:$0xf] %v6860
      %6945 = vst [vmem:[%s224 + $0x90] sm:$0xf] %v6861
      %6946 = vst [vmem:[%s224 + $0x94] sm:$0xf] %v6862
      %6947 = vst [vmem:[%s224 + $0x98] sm:$0xf] %v6863
      %6948 = vst [vmem:[%s224 + $0x9c] sm:$0xf] %v6864
      %6949 = vst [vmem:[%s224 + $0xa0] sm:$0xf] %v6865
      %6950 = vst [vmem:[%s224 + $0xa4] sm:$0xf] %v6866
      %p6951 = scmp.lt.s32.totalorder %s16, 1
      %s6952 = scalar_select %p6951, %s16, 1
      %s6953 = smul.addr %s6952, 42
      %s6954 = smul.addr %s6953, 4
      %s6955 = scalar_lea.vmem %s5, %s6954
      // Predicated region
      $region41: #{_basic_block_impl.1} parent=39 // pred_check
        %p6956 = pneg %p144
      $region42: #{_basic_block_impl.1} parent=39 // pred_check_branch
        %6958 = sbr.rel (%p6956) target = $region44
      $region43: #{_basic_block_impl.1} parent=39 // pred_region
        _
      $region44: #{_basic_block_impl.1} parent=39 // pred_fallthru
        _
    $region40: #{_basic_block_impl.1} parent=5 // pred_fallthru
      _
    %p6959 = scmp.le.s32.totalorder 2, %s11
    // Predicated region
    $region45: #{_basic_block_impl.1} parent=5 // pred_check
      %p6960 = pneg %p6959
    $region46: #{_basic_block_impl.1} parent=5 // pred_check_branch
      %6962 = sbr.rel (%p6960) target = $region48
    $region47: #{_basic_block_impl.1} parent=5 // pred_region
      %s6963 = ssub.s32 %s11, 2
      // Predicated region
      $region49: #{_basic_block_impl.1} parent=47 // pred_check
        %p6964 = pneg %p150
      $region50: #{_basic_block_impl.1} parent=47 // pred_check_branch
        %6966 = sbr.rel (%p6964) target = $region52
      $region51: #{_basic_block_impl.1} parent=47 // pred_region
        %p6967 = scmp.lt.s32.totalorder %s17, 1
        %s6968 = scalar_select %p6967, %s17, 1
        %s6969 = smul.addr %s6968, 42
        %s6970 = smul.addr %s6969, 4
        %s6971 = scalar_lea.vmem %s5, %s6970
      $region52: #{_basic_block_impl.1} parent=47 // pred_fallthru
        _
    $region48: #{_basic_block_impl.1} parent=5 // pred_fallthru
      _
  $region6: #{_basic_block_impl.1} parent=0 // loop_footer
    %s15 = sadd.s32 1, %s11
  $region7: #{_basic_block_impl.1} parent=0 // loop_footer_branch
    %10 = sbr.rel target = $region3
  $region8: #{_basic_block_impl.1} parent=0 // loop_exit
    _

</llo_original>
